<compile_context>
chip_gen: v6e
topology: v6e:2x2x1
jax: 0.10.0
libtpu: 0.0.40
codegen_flags: <defaults>
</compile_context>

<pallas_src>
import functools

import numpy as np
import jax
import jax.numpy as jnp
from jax import lax
from jax.experimental import pallas as pl
from jax.experimental.pallas import tpu as pltpu

BN_EPS = 1e-5
K = 4  # every ConvTranspose2d in the module uses a 4x4 kernel

_VMEM = pl.BlockSpec(memory_space=pltpu.MemorySpace.VMEM)


# ----------------------------------------------------------------------------
# In-kernel helpers
# ----------------------------------------------------------------------------
def _bn_relu(x, gamma, beta, *, n_channels, n_w, n_elems):
    """BatchNorm2d (batch stats) + ReLU on x laid out rows=(b,h), lanes=(w,c)."""
    C, W = n_channels, n_w
    s1 = jnp.sum(x, axis=0, keepdims=True)          # (1, W*C)
    s2 = jnp.sum(x * x, axis=0, keepdims=True)      # (1, W*C)
    csum = jnp.zeros((1, C), jnp.float32)
    csq = jnp.zeros((1, C), jnp.float32)
    for w in range(W):                               # per-channel sums over the w groups
        csum = csum + s1[:, w * C:(w + 1) * C]
        csq = csq + s2[:, w * C:(w + 1) * C]
    inv_n = 1.0 / n_elems
    mean = csum * inv_n
    var = jnp.maximum(csq * inv_n - mean * mean, 0.0)
    scale = gamma * lax.rsqrt(var + BN_EPS)          # (1, C)
    shift = beta - mean * scale                      # (1, C)
    scale_t = jnp.concatenate([scale] * W, axis=1)   # broadcast to lanes (w, c)
    shift_t = jnp.concatenate([shift] * W, axis=1)
    return jnp.maximum(x * scale_t + shift_t, 0.0)


def _generator_kernel(z_ref, emb_ref, linw_ref, linb_ref, wmap_ref,
                      mg_ref, mb_ref,
                      m1a_ref, m1b_ref, c1g_ref, c1b_ref,
                      m2_ref, c2g_ref, c2b_ref,
                      m3_ref,
                      s1_ref, s2_ref, s3_ref,
                      out_ref, x0_ref,
                      *, batch, ngf):
    B = batch
    f32, bf16 = jnp.float32, jnp.bfloat16
    ngf2, ngf4 = 2 * ngf, 4 * ngf
    hw = 4 * ngf4                                    # lanes of the mapping activation (w,c)

    # ---- head: mapping ConvTranspose (1x1 input, k=4, s=1, p=0) == one matmul;
    #      embedding Linear fused in the same launch. ----
    map_raw = jnp.dot(z_ref[...].astype(bf16), wmap_ref[...],
                      preferred_element_type=f32)                    # (B, 16*ngf4), cols (h,w,c)
    lab16 = jnp.dot(emb_ref[...], linw_ref[...],
                    preferred_element_type=f32) + linb_ref[...]      # (B, 16)

    # reorganize to rows=(b,h), lanes=(w,c) + 4 raw label lanes (the torch.cat channel).
    for b in range(B):
        for h in range(4):
            r = b * 4 + h
            x0_ref[r:r + 1, 0:hw] = map_raw[b:b + 1, h * hw:(h + 1) * hw]
            x0_ref[r:r + 1, hw:hw + 4] = lab16[b:b + 1, h * 4:(h + 1) * 4]
    x_main = x0_ref[:, 0:hw]                                         # (B*4, 4*ngf4)
    x_lab = x0_ref[:, hw:hw + 4]                                     # (B*4, 4)

    # ---- mapping BN + ReLU, then main[0]: ConvTranspose(ngf*4+1 -> ngf*2, k=4,s=2,p=1) ----
    a0 = _bn_relu(x_main, mg_ref[...], mb_ref[...],
                  n_channels=ngf4, n_w=4, n_elems=B * 16)
    y1 = (jnp.dot(a0.astype(bf16), m1a_ref[...], preferred_element_type=f32)
          + jnp.dot(x_lab, m1b_ref[...], preferred_element_type=f32))   # (B*4, 4*8*ngf2)
    blk1 = 8 * ngf2
    acc1 = jnp.zeros((B * 8, blk1), f32)
    for kh in range(K):                                              # H-direction overlap-add
        acc1 = acc1 + jnp.dot(s1_ref[kh], y1[:, kh * blk1:(kh + 1) * blk1],
                              preferred_element_type=f32)            # (B*8, 8*ngf2)

    # ---- main[3]: BN + ReLU, ConvTranspose(ngf*2 -> ngf, k=4,s=2,p=1) ----
    a1 = _bn_relu(acc1, c1g_ref[...], c1b_ref[...],
                  n_channels=ngf2, n_w=8, n_elems=B * 64)
    y2 = jnp.dot(a1.astype(bf16), m2_ref[...], preferred_element_type=f32)  # (B*8, 4*16*ngf)
    blk2 = 16 * ngf
    acc2 = jnp.zeros((B * 16, blk2), f32)
    for kh in range(K):
        acc2 = acc2 + jnp.dot(s2_ref[kh], y2[:, kh * blk2:(kh + 1) * blk2],
                              preferred_element_type=f32)            # (B*16, 16*ngf)

    # ---- main[6]: BN + ReLU, ConvTranspose(ngf -> 1, k=4,s=2,p=3), Tanh ----
    a2 = _bn_relu(acc2, c2g_ref[...], c2b_ref[...],
                  n_channels=ngf, n_w=16, n_elems=B * 256)
    y3 = jnp.dot(a2.astype(bf16), m3_ref[...], preferred_element_type=f32)  # (B*16, 4*128)
    blk3 = 128                                       # per-kh block zero-padded to 128 lanes
    acc3 = jnp.zeros((B * 28, blk3), f32)
    for kh in range(K):
        acc3 = acc3 + jnp.dot(s3_ref[kh], y3[:, kh * blk3:(kh + 1) * blk3],
                              preferred_element_type=f32)            # (B*28, 128)

    out_ref[...] = jnp.tanh(acc3[:, 0:28])                           # (B*28, 28)


# ----------------------------------------------------------------------------
# pallas_call wrapper (single block, whole-array VMEM, no grid)
# ----------------------------------------------------------------------------
def generator_forward(prep, z, label):
    B = z.shape[0]
    ngf = prep["c2_gamma"].shape[1]
    z2d = z.reshape(B, -1)
    # TODO(synk): the embedding row gather stays as a tiny XLA op feeding the kernel.
    emb = jnp.take(prep["emb_table"], label, axis=0)                 # (B, emb_size)

    kernel = functools.partial(_generator_kernel, batch=B, ngf=ngf)
    out = pl.pallas_call(
        kernel,
        out_shape=jax.ShapeDtypeStruct((B * 28, 28), jnp.float32),
        in_specs=[_VMEM] * 18,
        out_specs=_VMEM,
        scratch_shapes=[pltpu.VMEM((B * 4, 16 * ngf + 4), jnp.float32)],
    )(z2d, emb, prep["lin_w"], prep["lin_b"], prep["wmap_bf16"],
      prep["map_gamma"], prep["map_beta"],
      prep["m1a_bf16"], prep["m1b"], prep["c1_gamma"], prep["c1_beta"],
      prep["m2_bf16"], prep["c2_gamma"], prep["c2_beta"],
      prep["m3_bf16"], prep["s1"], prep["s2"], prep["s3"])
    return out.reshape(B, 1, 28, 28)


# ----------------------------------------------------------------------------
# Parameters (PyTorch layouts) + kernel-layout preparation (host-side, init time)
# ----------------------------------------------------------------------------
def init_generator_params(key, l_dim=32, ngf=16, emb_size=8, out_c=1, n_classes=10):
    ks = jax.random.split(key, 8)
    std = 0.02
    return {
        "emb_table": jax.random.normal(ks[0], (n_classes, emb_size), jnp.float32) * std,
        "lin_w": jax.random.normal(ks[1], (emb_size, 16), jnp.float32) * std,
        "lin_b": jax.random.normal(ks[2], (16,), jnp.float32) * std,
        "map_w": jax.random.normal(ks[3], (l_dim, ngf * 4, K, K), jnp.float32) * std,
        "map_gamma": jnp.ones((ngf * 4,), jnp.float32),
        "map_beta": jnp.zeros((ngf * 4,), jnp.float32),
        "c1_w": jax.random.normal(ks[4], (ngf * 4 + 1, ngf * 2, K, K), jnp.float32) * std,
        "c1_gamma": jnp.ones((ngf * 2,), jnp.float32),
        "c1_beta": jnp.zeros((ngf * 2,), jnp.float32),
        "c2_w": jax.random.normal(ks[5], (ngf * 2, ngf, K, K), jnp.float32) * std,
        "c2_gamma": jnp.ones((ngf,), jnp.float32),
        "c2_beta": jnp.zeros((ngf,), jnp.float32),
        "c3_w": jax.random.normal(ks[6], (ngf, out_c, K, K), jnp.float32) * std,
    }


def _build_conv_matrix(wt, w_in, stride, padding, w_out, block_cols=None):
    """Fold channel contraction + W-direction overlap-add into one matrix.

    wt: (Cin, Cout, K, K) numpy.  Returns (w_in*Cin, K*block) with one column block per
    kernel row kh; columns inside a block ordered (ow, cout)."""
    cin, cout, kkh, kkw = wt.shape
    block = w_out * cout if block_cols is None else block_cols
    m = np.zeros((w_in * cin, kkh * block), np.float32)
    for kh in range(kkh):
        for w in range(w_in):
            for kw in range(kkw):
                ow = stride * w + kw - padding
                if 0 <= ow < w_out:
                    col = kh * block + ow * cout
                    m[w * cin:(w + 1) * cin, col:col + cout] = wt[:, :, kh, kw]
    return m


def _build_scatter_matrix(batch, h_in, h_out, stride, padding, k):
    """0/1 block-diagonal matrices implementing the H-direction overlap-add per kh."""
    s = np.zeros((k, batch * h_out, batch * h_in), np.float32)
    for kh in range(k):
        for b in range(batch):
            for h in range(h_in):
                oh = stride * h + kh - padding
                if 0 <= oh < h_out:
                    s[kh, b * h_out + oh, b * h_in + h] = 1.0
    return s


def prepare_generator_params(p, batch):
    map_w = np.asarray(p["map_w"])     # (l_dim, ngf*4, 4, 4)
    c1_w = np.asarray(p["c1_w"])       # (ngf*4+1, ngf*2, 4, 4)
    c2_w = np.asarray(p["c2_w"])       # (ngf*2, ngf, 4, 4)
    c3_w = np.asarray(p["c3_w"])       # (ngf, 1, 4, 4)
    l_dim, ngf4 = map_w.shape[:2]

    # mapping on a 1x1 input: one matmul matrix, columns (h, w, c).
    wmap = np.transpose(map_w, (0, 2, 3, 1)).reshape(l_dim, K * K * ngf4)
    # upsampling layers: channel + W overlap-add matrices (per-kh column blocks).
    m1a = _build_conv_matrix(c1_w[:ngf4], 4, 2, 1, 8)            # (256, 1024)
    m1b = _build_conv_matrix(c1_w[ngf4:], 4, 2, 1, 8)            # label channel, (4, 1024)
    m2 = _build_conv_matrix(c2_w, 8, 2, 1, 16)                   # (256, 1024)
    m3 = _build_conv_matrix(c3_w, 16, 2, 3, 28, block_cols=128)  # (256, 512), 128-aligned blocks
    # H overlap-add 0/1 matrices.
    s1 = _build_scatter_matrix(batch, 4, 8, 2, 1, K)
    s2 = _build_scatter_matrix(batch, 8, 16, 2, 1, K)
    s3 = _build_scatter_matrix(batch, 16, 28, 2, 3, K)

    return {
        "emb_table": p["emb_table"],
        "lin_w": p["lin_w"],
        "lin_b": p["lin_b"].reshape(1, -1),
        "wmap_bf16": jnp.asarray(wmap, jnp.bfloat16),
        "map_gamma": p["map_gamma"].reshape(1, -1),
        "map_beta": p["map_beta"].reshape(1, -1),
        "m1a_bf16": jnp.asarray(m1a, jnp.bfloat16),
        "m1b": jnp.asarray(m1b, jnp.float32),        # label channel kept f32 (exact)
        "c1_gamma": p["c1_gamma"].reshape(1, -1),
        "c1_beta": p["c1_beta"].reshape(1, -1),
        "m2_bf16": jnp.asarray(m2, jnp.bfloat16),
        "c2_gamma": p["c2_gamma"].reshape(1, -1),
        "c2_beta": p["c2_beta"].reshape(1, -1),
        "m3_bf16": jnp.asarray(m3, jnp.bfloat16),
        "s1": jnp.asarray(s1, jnp.float32),
        "s2": jnp.asarray(s2, jnp.float32),
        "s3": jnp.asarray(s3, jnp.float32),
    }


# TODO(synk): PyTorch BatchNorm2d also updates running_mean/running_var in training mode;
# the forward math here uses the same batch statistics, but the running buffers are not
# tracked (not needed for the forward output).

if __name__ == "__main__":
    B, L_DIM, NGF, EMB, NCLS = 2, 32, 16, 8, 10
    key = jax.random.PRNGKey(0)
    kp, kz, kl = jax.random.split(key, 3)
    params = init_generator_params(kp, l_dim=L_DIM, ngf=NGF, emb_size=EMB, out_c=1,
                                   n_classes=NCLS)
    prep = prepare_generator_params(params, batch=B)
    z = jax.random.normal(kz, (B, L_DIM, 1, 1), jnp.float32)
    label = jax.random.randint(kl, (B,), 0, NCLS, dtype=jnp.int32)

    out = jax.jit(generator_forward)(prep, z, label)
    out = jax.block_until_ready(out)
    assert out.shape == (B, 1, 28, 28), out.shape
    assert bool(jnp.all(jnp.isfinite(out)))
    assert bool(jnp.all(jnp.abs(out) <= 1.0 + 1e-6))  # tanh range sanity check
    print("KERNEL_OK")
</pallas_src>

<mosaic_0001>
module attributes {stable_mosaic.version = 11 : i64} {
  func.func @_generator_kernel(%arg0: memref<2x32xf32, #tpu.memory_space<vmem>>, %arg1: memref<2x8xf32, #tpu.memory_space<vmem>>, %arg2: memref<8x16xf32, #tpu.memory_space<vmem>>, %arg3: memref<1x16xf32, #tpu.memory_space<vmem>>, %arg4: memref<32x1024xbf16, #tpu.memory_space<vmem>>, %arg5: memref<1x64xf32, #tpu.memory_space<vmem>>, %arg6: memref<1x64xf32, #tpu.memory_space<vmem>>, %arg7: memref<256x1024xbf16, #tpu.memory_space<vmem>>, %arg8: memref<4x1024xf32, #tpu.memory_space<vmem>>, %arg9: memref<1x32xf32, #tpu.memory_space<vmem>>, %arg10: memref<1x32xf32, #tpu.memory_space<vmem>>, %arg11: memref<256x1024xbf16, #tpu.memory_space<vmem>>, %arg12: memref<1x16xf32, #tpu.memory_space<vmem>>, %arg13: memref<1x16xf32, #tpu.memory_space<vmem>>, %arg14: memref<256x512xbf16, #tpu.memory_space<vmem>>, %arg15: memref<4x16x8xf32, #tpu.memory_space<vmem>>, %arg16: memref<4x32x16xf32, #tpu.memory_space<vmem>>, %arg17: memref<4x56x32xf32, #tpu.memory_space<vmem>>, %arg18: memref<56x28xf32, #tpu.memory_space<vmem>>, %arg19: memref<8x260xf32, #tpu.memory_space<vmem>>) attributes {dimension_semantics = [], scalar_prefetch = 0 : i64, scratch_operands = 1 : i64, tpu.core_type = #tpu.core_type<tc>} {
    %c0 = arith.constant 0 : index
    %c0_0 = arith.constant 0 : index
    %0 = vector.load %arg0[%c0, %c0_0] : memref<2x32xf32, #tpu.memory_space<vmem>>, vector<2x32xf32>
    %1 = arith.truncf %0 : vector<2x32xf32> to vector<2x32xbf16>
    %c0_1 = arith.constant 0 : index
    %c0_2 = arith.constant 0 : index
    %2 = vector.load %arg4[%c0_1, %c0_2] : memref<32x1024xbf16, #tpu.memory_space<vmem>>, vector<32x1024xbf16>
    %cst = arith.constant dense<0.000000e+00> : vector<2x1024xf32>
    %3 = tpu.matmul %1, %2, %cst {dimension_numbers = #tpu.dot_dimension_numbers<[1], [0], [0], [1], [0, 0, 1, 1], [], []>} : vector<2x32xbf16>, vector<32x1024xbf16>, vector<2x1024xf32> -> vector<2x1024xf32>
    %c0_3 = arith.constant 0 : index
    %c0_4 = arith.constant 0 : index
    %4 = vector.load %arg1[%c0_3, %c0_4] : memref<2x8xf32, #tpu.memory_space<vmem>>, vector<2x8xf32>
    %c0_5 = arith.constant 0 : index
    %c0_6 = arith.constant 0 : index
    %5 = vector.load %arg2[%c0_5, %c0_6] : memref<8x16xf32, #tpu.memory_space<vmem>>, vector<8x16xf32>
    %cst_7 = arith.constant dense<0.000000e+00> : vector<2x16xf32>
    %6 = tpu.matmul %4, %5, %cst_7 {dimension_numbers = #tpu.dot_dimension_numbers<[1], [0], [0], [1], [0, 0, 1, 1], [], []>} : vector<2x8xf32>, vector<8x16xf32>, vector<2x16xf32> -> vector<2x16xf32>
    %c0_8 = arith.constant 0 : index
    %c0_9 = arith.constant 0 : index
    %7 = vector.load %arg3[%c0_8, %c0_9] : memref<1x16xf32, #tpu.memory_space<vmem>>, vector<1x16xf32>
    %8 = vector.broadcast %7 : vector<1x16xf32> to vector<2x16xf32>
    %9 = arith.addf %6, %8 : vector<2x16xf32>
    %10 = vector.extract_strided_slice %3 {offsets = [0, 0], sizes = [1, 256], strides = [1, 1]} : vector<2x1024xf32> to vector<1x256xf32>
    %c0_10 = arith.constant 0 : index
    %c0_11 = arith.constant 0 : index
    %11 = vector.load %arg19[%c0_10, %c0_11] : memref<8x260xf32, #tpu.memory_space<vmem>>, vector<1x256xf32>
    tpu.vector_store %arg19[%c0_10, %c0_11], %10 {strides = array<i32>} : memref<8x260xf32, #tpu.memory_space<vmem>>, vector<1x256xf32>,
    %12 = vector.extract_strided_slice %9 {offsets = [0, 0], sizes = [1, 4], strides = [1, 1]} : vector<2x16xf32> to vector<1x4xf32>
    %c0_12 = arith.constant 0 : index
    %c256 = arith.constant 256 : index
    %13 = vector.load %arg19[%c0_12, %c256] : memref<8x260xf32, #tpu.memory_space<vmem>>, vector<1x4xf32>
    tpu.vector_store %arg19[%c0_12, %c256], %12 {strides = array<i32>} : memref<8x260xf32, #tpu.memory_space<vmem>>, vector<1x4xf32>,
    %14 = vector.extract_strided_slice %3 {offsets = [0, 256], sizes = [1, 256], strides = [1, 1]} : vector<2x1024xf32> to vector<1x256xf32>
    %c1 = arith.constant 1 : index
    %c0_13 = arith.constant 0 : index
    %15 = vector.load %arg19[%c1, %c0_13] : memref<8x260xf32, #tpu.memory_space<vmem>>, vector<1x256xf32>
    tpu.vector_store %arg19[%c1, %c0_13], %14 {strides = array<i32>} : memref<8x260xf32, #tpu.memory_space<vmem>>, vector<1x256xf32>,
    %16 = vector.extract_strided_slice %9 {offsets = [0, 4], sizes = [1, 4], strides = [1, 1]} : vector<2x16xf32> to vector<1x4xf32>
    %c1_14 = arith.constant 1 : index
    %c256_15 = arith.constant 256 : index
    %17 = vector.load %arg19[%c1_14, %c256_15] : memref<8x260xf32, #tpu.memory_space<vmem>>, vector<1x4xf32>
    tpu.vector_store %arg19[%c1_14, %c256_15], %16 {strides = array<i32>} : memref<8x260xf32, #tpu.memory_space<vmem>>, vector<1x4xf32>,
    %18 = vector.extract_strided_slice %3 {offsets = [0, 512], sizes = [1, 256], strides = [1, 1]} : vector<2x1024xf32> to vector<1x256xf32>
    %c2 = arith.constant 2 : index
    %c0_16 = arith.constant 0 : index
    %19 = vector.load %arg19[%c2, %c0_16] : memref<8x260xf32, #tpu.memory_space<vmem>>, vector<1x256xf32>
    tpu.vector_store %arg19[%c2, %c0_16], %18 {strides = array<i32>} : memref<8x260xf32, #tpu.memory_space<vmem>>, vector<1x256xf32>,
    %20 = vector.extract_strided_slice %9 {offsets = [0, 8], sizes = [1, 4], strides = [1, 1]} : vector<2x16xf32> to vector<1x4xf32>
    %c2_17 = arith.constant 2 : index
    %c256_18 = arith.constant 256 : index
    %21 = vector.load %arg19[%c2_17, %c256_18] : memref<8x260xf32, #tpu.memory_space<vmem>>, vector<1x4xf32>
    tpu.vector_store %arg19[%c2_17, %c256_18], %20 {strides = array<i32>} : memref<8x260xf32, #tpu.memory_space<vmem>>, vector<1x4xf32>,
    %22 = vector.extract_strided_slice %3 {offsets = [0, 768], sizes = [1, 256], strides = [1, 1]} : vector<2x1024xf32> to vector<1x256xf32>
    %c3 = arith.constant 3 : index
    %c0_19 = arith.constant 0 : index
    %23 = vector.load %arg19[%c3, %c0_19] : memref<8x260xf32, #tpu.memory_space<vmem>>, vector<1x256xf32>
    tpu.vector_store %arg19[%c3, %c0_19], %22 {strides = array<i32>} : memref<8x260xf32, #tpu.memory_space<vmem>>, vector<1x256xf32>,
    %24 = vector.extract_strided_slice %9 {offsets = [0, 12], sizes = [1, 4], strides = [1, 1]} : vector<2x16xf32> to vector<1x4xf32>
    %c3_20 = arith.constant 3 : index
    %c256_21 = arith.constant 256 : index
    %25 = vector.load %arg19[%c3_20, %c256_21] : memref<8x260xf32, #tpu.memory_space<vmem>>, vector<1x4xf32>
    tpu.vector_store %arg19[%c3_20, %c256_21], %24 {strides = array<i32>} : memref<8x260xf32, #tpu.memory_space<vmem>>, vector<1x4xf32>,
    %26 = vector.extract_strided_slice %3 {offsets = [1, 0], sizes = [1, 256], strides = [1, 1]} : vector<2x1024xf32> to vector<1x256xf32>
    %c4 = arith.constant 4 : index
    %c0_22 = arith.constant 0 : index
    %27 = vector.load %arg19[%c4, %c0_22] : memref<8x260xf32, #tpu.memory_space<vmem>>, vector<1x256xf32>
    tpu.vector_store %arg19[%c4, %c0_22], %26 {strides = array<i32>} : memref<8x260xf32, #tpu.memory_space<vmem>>, vector<1x256xf32>,
    %28 = vector.extract_strided_slice %9 {offsets = [1, 0], sizes = [1, 4], strides = [1, 1]} : vector<2x16xf32> to vector<1x4xf32>
    %c4_23 = arith.constant 4 : index
    %c256_24 = arith.constant 256 : index
    %29 = vector.load %arg19[%c4_23, %c256_24] : memref<8x260xf32, #tpu.memory_space<vmem>>, vector<1x4xf32>
    tpu.vector_store %arg19[%c4_23, %c256_24], %28 {strides = array<i32>} : memref<8x260xf32, #tpu.memory_space<vmem>>, vector<1x4xf32>,
    %30 = vector.extract_strided_slice %3 {offsets = [1, 256], sizes = [1, 256], strides = [1, 1]} : vector<2x1024xf32> to vector<1x256xf32>
    %c5 = arith.constant 5 : index
    %c0_25 = arith.constant 0 : index
    %31 = vector.load %arg19[%c5, %c0_25] : memref<8x260xf32, #tpu.memory_space<vmem>>, vector<1x256xf32>
    tpu.vector_store %arg19[%c5, %c0_25], %30 {strides = array<i32>} : memref<8x260xf32, #tpu.memory_space<vmem>>, vector<1x256xf32>,
    %32 = vector.extract_strided_slice %9 {offsets = [1, 4], sizes = [1, 4], strides = [1, 1]} : vector<2x16xf32> to vector<1x4xf32>
    %c5_26 = arith.constant 5 : index
    %c256_27 = arith.constant 256 : index
    %33 = vector.load %arg19[%c5_26, %c256_27] : memref<8x260xf32, #tpu.memory_space<vmem>>, vector<1x4xf32>
    tpu.vector_store %arg19[%c5_26, %c256_27], %32 {strides = array<i32>} : memref<8x260xf32, #tpu.memory_space<vmem>>, vector<1x4xf32>,
    %34 = vector.extract_strided_slice %3 {offsets = [1, 512], sizes = [1, 256], strides = [1, 1]} : vector<2x1024xf32> to vector<1x256xf32>
    %c6 = arith.constant 6 : index
    %c0_28 = arith.constant 0 : index
    %35 = vector.load %arg19[%c6, %c0_28] : memref<8x260xf32, #tpu.memory_space<vmem>>, vector<1x256xf32>
    tpu.vector_store %arg19[%c6, %c0_28], %34 {strides = array<i32>} : memref<8x260xf32, #tpu.memory_space<vmem>>, vector<1x256xf32>,
    %36 = vector.extract_strided_slice %9 {offsets = [1, 8], sizes = [1, 4], strides = [1, 1]} : vector<2x16xf32> to vector<1x4xf32>
    %c6_29 = arith.constant 6 : index
    %c256_30 = arith.constant 256 : index
    %37 = vector.load %arg19[%c6_29, %c256_30] : memref<8x260xf32, #tpu.memory_space<vmem>>, vector<1x4xf32>
    tpu.vector_store %arg19[%c6_29, %c256_30], %36 {strides = array<i32>} : memref<8x260xf32, #tpu.memory_space<vmem>>, vector<1x4xf32>,
    %38 = vector.extract_strided_slice %3 {offsets = [1, 768], sizes = [1, 256], strides = [1, 1]} : vector<2x1024xf32> to vector<1x256xf32>
    %c7 = arith.constant 7 : index
    %c0_31 = arith.constant 0 : index
    %39 = vector.load %arg19[%c7, %c0_31] : memref<8x260xf32, #tpu.memory_space<vmem>>, vector<1x256xf32>
    tpu.vector_store %arg19[%c7, %c0_31], %38 {strides = array<i32>} : memref<8x260xf32, #tpu.memory_space<vmem>>, vector<1x256xf32>,
    %40 = vector.extract_strided_slice %9 {offsets = [1, 12], sizes = [1, 4], strides = [1, 1]} : vector<2x16xf32> to vector<1x4xf32>
    %c7_32 = arith.constant 7 : index
    %c256_33 = arith.constant 256 : index
    %41 = vector.load %arg19[%c7_32, %c256_33] : memref<8x260xf32, #tpu.memory_space<vmem>>, vector<1x4xf32>
    tpu.vector_store %arg19[%c7_32, %c256_33], %40 {strides = array<i32>} : memref<8x260xf32, #tpu.memory_space<vmem>>, vector<1x4xf32>,
    %c0_34 = arith.constant 0 : index
    %c0_35 = arith.constant 0 : index
    %42 = vector.load %arg19[%c0_34, %c0_35] : memref<8x260xf32, #tpu.memory_space<vmem>>, vector<8x256xf32>
    %c0_36 = arith.constant 0 : index
    %c256_37 = arith.constant 256 : index
    %43 = vector.load %arg19[%c0_36, %c256_37] : memref<8x260xf32, #tpu.memory_space<vmem>>, vector<8x4xf32>
    %c0_38 = arith.constant 0 : index
    %c0_39 = arith.constant 0 : index
    %44 = vector.load %arg5[%c0_38, %c0_39] : memref<1x64xf32, #tpu.memory_space<vmem>>, vector<1x64xf32>
    %c0_40 = arith.constant 0 : index
    %c0_41 = arith.constant 0 : index
    %45 = vector.load %arg6[%c0_40, %c0_41] : memref<1x64xf32, #tpu.memory_space<vmem>>, vector<1x64xf32>
    %cst_42 = arith.constant dense<0.000000e+00> : vector<256xf32>
    %46 = vector.multi_reduction <add>, %42, %cst_42 [0] : vector<8x256xf32> to vector<256xf32>
    %47 = vector.shape_cast %46 : vector<256xf32> to vector<1x256xf32>
    %48 = arith.mulf %42, %42 : vector<8x256xf32>
    %cst_43 = arith.constant dense<0.000000e+00> : vector<256xf32>
    %49 = vector.multi_reduction <add>, %48, %cst_43 [0] : vector<8x256xf32> to vector<256xf32>
    %50 = vector.shape_cast %49 : vector<256xf32> to vector<1x256xf32>
    %cst_44 = arith.constant 0.000000e+00 : f32
    %51 = vector.broadcast %cst_44 : f32 to vector<1x64xf32>
    %cst_45 = arith.constant 0.000000e+00 : f32
    %52 = vector.broadcast %cst_45 : f32 to vector<1x64xf32>
    %53 = vector.extract_strided_slice %47 {offsets = [0, 0], sizes = [1, 64], strides = [1, 1]} : vector<1x256xf32> to vector<1x64xf32>
    %54 = arith.addf %51, %53 : vector<1x64xf32>
    %55 = vector.extract_strided_slice %50 {offsets = [0, 0], sizes = [1, 64], strides = [1, 1]} : vector<1x256xf32> to vector<1x64xf32>
    %56 = arith.addf %52, %55 : vector<1x64xf32>
    %57 = vector.extract_strided_slice %47 {offsets = [0, 64], sizes = [1, 64], strides = [1, 1]} : vector<1x256xf32> to vector<1x64xf32>
    %58 = arith.addf %54, %57 : vector<1x64xf32>
    %59 = vector.extract_strided_slice %50 {offsets = [0, 64], sizes = [1, 64], strides = [1, 1]} : vector<1x256xf32> to vector<1x64xf32>
    %60 = arith.addf %56, %59 : vector<1x64xf32>
    %61 = vector.extract_strided_slice %47 {offsets = [0, 128], sizes = [1, 64], strides = [1, 1]} : vector<1x256xf32> to vector<1x64xf32>
    %62 = arith.addf %58, %61 : vector<1x64xf32>
    %63 = vector.extract_strided_slice %50 {offsets = [0, 128], sizes = [1, 64], strides = [1, 1]} : vector<1x256xf32> to vector<1x64xf32>
    %64 = arith.addf %60, %63 : vector<1x64xf32>
    %65 = vector.extract_strided_slice %47 {offsets = [0, 192], sizes = [1, 64], strides = [1, 1]} : vector<1x256xf32> to vector<1x64xf32>
    %66 = arith.addf %62, %65 : vector<1x64xf32>
    %67 = vector.extract_strided_slice %50 {offsets = [0, 192], sizes = [1, 64], strides = [1, 1]} : vector<1x256xf32> to vector<1x64xf32>
    %68 = arith.addf %64, %67 : vector<1x64xf32>
    %cst_46 = arith.constant 3.125000e-02 : f32
    %69 = vector.broadcast %cst_46 : f32 to vector<1x64xf32>
    %70 = arith.mulf %66, %69 : vector<1x64xf32>
    %cst_47 = arith.constant 3.125000e-02 : f32
    %71 = vector.broadcast %cst_47 : f32 to vector<1x64xf32>
    %72 = arith.mulf %68, %71 : vector<1x64xf32>
    %73 = arith.mulf %70, %70 : vector<1x64xf32>
    %74 = arith.subf %72, %73 : vector<1x64xf32>
    %cst_48 = arith.constant 0.000000e+00 : f32
    %75 = vector.broadcast %cst_48 : f32 to vector<1x64xf32>
    %76 = arith.maximumf %74, %75 : vector<1x64xf32>
    %cst_49 = arith.constant 9.99999974E-6 : f32
    %77 = vector.broadcast %cst_49 : f32 to vector<1x64xf32>
    %78 = arith.addf %76, %77 : vector<1x64xf32>
    %79 = math.rsqrt %78 : vector<1x64xf32>
    %80 = arith.mulf %44, %79 : vector<1x64xf32>
    %81 = arith.mulf %70, %80 : vector<1x64xf32>
    %82 = arith.subf %45, %81 : vector<1x64xf32>
    %83 = tpu.concatenate %80, %80, %80, %80 in 1 : vector<1x64xf32>, vector<1x64xf32>, vector<1x64xf32>, vector<1x64xf32> -> vector<1x256xf32>
    %84 = tpu.concatenate %82, %82, %82, %82 in 1 : vector<1x64xf32>, vector<1x64xf32>, vector<1x64xf32>, vector<1x64xf32> -> vector<1x256xf32>
    %85 = vector.broadcast %83 : vector<1x256xf32> to vector<8x256xf32>
    %86 = arith.mulf %42, %85 : vector<8x256xf32>
    %87 = vector.broadcast %84 : vector<1x256xf32> to vector<8x256xf32>
    %88 = arith.addf %86, %87 : vector<8x256xf32>
    %cst_50 = arith.constant 0.000000e+00 : f32
    %89 = vector.broadcast %cst_50 : f32 to vector<8x256xf32>
    %90 = arith.maximumf %88, %89 : vector<8x256xf32>
    %91 = arith.truncf %90 : vector<8x256xf32> to vector<8x256xbf16>
    %c0_51 = arith.constant 0 : index
    %c0_52 = arith.constant 0 : index
    %92 = vector.load %arg7[%c0_51, %c0_52] : memref<256x1024xbf16, #tpu.memory_space<vmem>>, vector<256x1024xbf16>
    %cst_53 = arith.constant dense<0.000000e+00> : vector<8x1024xf32>
    %93 = tpu.matmul %91, %92, %cst_53 {dimension_numbers = #tpu.dot_dimension_numbers<[1], [0], [0], [1], [0, 0, 1, 1], [], []>} : vector<8x256xbf16>, vector<256x1024xbf16>, vector<8x1024xf32> -> vector<8x1024xf32>
    %c0_54 = arith.constant 0 : index
    %c0_55 = arith.constant 0 : index
    %94 = vector.load %arg8[%c0_54, %c0_55] : memref<4x1024xf32, #tpu.memory_space<vmem>>, vector<4x1024xf32>
    %cst_56 = arith.constant dense<0.000000e+00> : vector<8x1024xf32>
    %95 = tpu.matmul %43, %94, %cst_56 {dimension_numbers = #tpu.dot_dimension_numbers<[1], [0], [0], [1], [0, 0, 1, 1], [], []>} : vector<8x4xf32>, vector<4x1024xf32>, vector<8x1024xf32> -> vector<8x1024xf32>
    %96 = arith.addf %93, %95 : vector<8x1024xf32>
    %cst_57 = arith.constant 0.000000e+00 : f32
    %97 = vector.broadcast %cst_57 : f32 to vector<16x256xf32>
    %c0_58 = arith.constant 0 : index
    %c0_59 = arith.constant 0 : index
    %c0_60 = arith.constant 0 : index
    %98 = vector.load %arg15[%c0_58, %c0_59, %c0_60] : memref<4x16x8xf32, #tpu.memory_space<vmem>>, vector<1x16x8xf32>
    %99 = vector.shape_cast %98 : vector<1x16x8xf32> to vector<16x8xf32>
    %100 = vector.extract_strided_slice %96 {offsets = [0, 0], sizes = [8, 256], strides = [1, 1]} : vector<8x1024xf32> to vector<8x256xf32>
    %cst_61 = arith.constant dense<0.000000e+00> : vector<16x256xf32>
    %101 = tpu.matmul %99, %100, %cst_61 {dimension_numbers = #tpu.dot_dimension_numbers<[1], [0], [0], [1], [0, 0, 1, 1], [], []>} : vector<16x8xf32>, vector<8x256xf32>, vector<16x256xf32> -> vector<16x256xf32>
    %102 = arith.addf %97, %101 : vector<16x256xf32>
    %c1_62 = arith.constant 1 : index
    %c0_63 = arith.constant 0 : index
    %c0_64 = arith.constant 0 : index
    %103 = vector.load %arg15[%c1_62, %c0_63, %c0_64] : memref<4x16x8xf32, #tpu.memory_space<vmem>>, vector<1x16x8xf32>
    %104 = vector.shape_cast %103 : vector<1x16x8xf32> to vector<16x8xf32>
    %105 = vector.extract_strided_slice %96 {offsets = [0, 256], sizes = [8, 256], strides = [1, 1]} : vector<8x1024xf32> to vector<8x256xf32>
    %cst_65 = arith.constant dense<0.000000e+00> : vector<16x256xf32>
    %106 = tpu.matmul %104, %105, %cst_65 {dimension_numbers = #tpu.dot_dimension_numbers<[1], [0], [0], [1], [0, 0, 1, 1], [], []>} : vector<16x8xf32>, vector<8x256xf32>, vector<16x256xf32> -> vector<16x256xf32>
    %107 = arith.addf %102, %106 : vector<16x256xf32>
    %c2_66 = arith.constant 2 : index
    %c0_67 = arith.constant 0 : index
    %c0_68 = arith.constant 0 : index
    %108 = vector.load %arg15[%c2_66, %c0_67, %c0_68] : memref<4x16x8xf32, #tpu.memory_space<vmem>>, vector<1x16x8xf32>
    %109 = vector.shape_cast %108 : vector<1x16x8xf32> to vector<16x8xf32>
    %110 = vector.extract_strided_slice %96 {offsets = [0, 512], sizes = [8, 256], strides = [1, 1]} : vector<8x1024xf32> to vector<8x256xf32>
    %cst_69 = arith.constant dense<0.000000e+00> : vector<16x256xf32>
    %111 = tpu.matmul %109, %110, %cst_69 {dimension_numbers = #tpu.dot_dimension_numbers<[1], [0], [0], [1], [0, 0, 1, 1], [], []>} : vector<16x8xf32>, vector<8x256xf32>, vector<16x256xf32> -> vector<16x256xf32>
    %112 = arith.addf %107, %111 : vector<16x256xf32>
    %c3_70 = arith.constant 3 : index
    %c0_71 = arith.constant 0 : index
    %c0_72 = arith.constant 0 : index
    %113 = vector.load %arg15[%c3_70, %c0_71, %c0_72] : memref<4x16x8xf32, #tpu.memory_space<vmem>>, vector<1x16x8xf32>
    %114 = vector.shape_cast %113 : vector<1x16x8xf32> to vector<16x8xf32>
    %115 = vector.extract_strided_slice %96 {offsets = [0, 768], sizes = [8, 256], strides = [1, 1]} : vector<8x1024xf32> to vector<8x256xf32>
    %cst_73 = arith.constant dense<0.000000e+00> : vector<16x256xf32>
    %116 = tpu.matmul %114, %115, %cst_73 {dimension_numbers = #tpu.dot_dimension_numbers<[1], [0], [0], [1], [0, 0, 1, 1], [], []>} : vector<16x8xf32>, vector<8x256xf32>, vector<16x256xf32> -> vector<16x256xf32>
    %117 = arith.addf %112, %116 : vector<16x256xf32>
    %c0_74 = arith.constant 0 : index
    %c0_75 = arith.constant 0 : index
    %118 = vector.load %arg9[%c0_74, %c0_75] : memref<1x32xf32, #tpu.memory_space<vmem>>, vector<1x32xf32>
    %c0_76 = arith.constant 0 : index
    %c0_77 = arith.constant 0 : index
    %119 = vector.load %arg10[%c0_76, %c0_77] : memref<1x32xf32, #tpu.memory_space<vmem>>, vector<1x32xf32>
    %cst_78 = arith.constant dense<0.000000e+00> : vector<256xf32>
    %120 = vector.multi_reduction <add>, %117, %cst_78 [0] : vector<16x256xf32> to vector<256xf32>
    %121 = vector.shape_cast %120 : vector<256xf32> to vector<1x256xf32>
    %122 = arith.mulf %117, %117 : vector<16x256xf32>
    %cst_79 = arith.constant dense<0.000000e+00> : vector<256xf32>
    %123 = vector.multi_reduction <add>, %122, %cst_79 [0] : vector<16x256xf32> to vector<256xf32>
    %124 = vector.shape_cast %123 : vector<256xf32> to vector<1x256xf32>
    %cst_80 = arith.constant 0.000000e+00 : f32
    %125 = vector.broadcast %cst_80 : f32 to vector<1x32xf32>
    %cst_81 = arith.constant 0.000000e+00 : f32
    %126 = vector.broadcast %cst_81 : f32 to vector<1x32xf32>
    %127 = vector.extract_strided_slice %121 {offsets = [0, 0], sizes = [1, 32], strides = [1, 1]} : vector<1x256xf32> to vector<1x32xf32>
    %128 = arith.addf %125, %127 : vector<1x32xf32>
    %129 = vector.extract_strided_slice %124 {offsets = [0, 0], sizes = [1, 32], strides = [1, 1]} : vector<1x256xf32> to vector<1x32xf32>
    %130 = arith.addf %126, %129 : vector<1x32xf32>
    %131 = vector.extract_strided_slice %121 {offsets = [0, 32], sizes = [1, 32], strides = [1, 1]} : vector<1x256xf32> to vector<1x32xf32>
    %132 = arith.addf %128, %131 : vector<1x32xf32>
    %133 = vector.extract_strided_slice %124 {offsets = [0, 32], sizes = [1, 32], strides = [1, 1]} : vector<1x256xf32> to vector<1x32xf32>
    %134 = arith.addf %130, %133 : vector<1x32xf32>
    %135 = vector.extract_strided_slice %121 {offsets = [0, 64], sizes = [1, 32], strides = [1, 1]} : vector<1x256xf32> to vector<1x32xf32>
    %136 = arith.addf %132, %135 : vector<1x32xf32>
    %137 = vector.extract_strided_slice %124 {offsets = [0, 64], sizes = [1, 32], strides = [1, 1]} : vector<1x256xf32> to vector<1x32xf32>
    %138 = arith.addf %134, %137 : vector<1x32xf32>
    %139 = vector.extract_strided_slice %121 {offsets = [0, 96], sizes = [1, 32], strides = [1, 1]} : vector<1x256xf32> to vector<1x32xf32>
    %140 = arith.addf %136, %139 : vector<1x32xf32>
    %141 = vector.extract_strided_slice %124 {offsets = [0, 96], sizes = [1, 32], strides = [1, 1]} : vector<1x256xf32> to vector<1x32xf32>
    %142 = arith.addf %138, %141 : vector<1x32xf32>
    %143 = vector.extract_strided_slice %121 {offsets = [0, 128], sizes = [1, 32], strides = [1, 1]} : vector<1x256xf32> to vector<1x32xf32>
    %144 = arith.addf %140, %143 : vector<1x32xf32>
    %145 = vector.extract_strided_slice %124 {offsets = [0, 128], sizes = [1, 32], strides = [1, 1]} : vector<1x256xf32> to vector<1x32xf32>
    %146 = arith.addf %142, %145 : vector<1x32xf32>
    %147 = vector.extract_strided_slice %121 {offsets = [0, 160], sizes = [1, 32], strides = [1, 1]} : vector<1x256xf32> to vector<1x32xf32>
    %148 = arith.addf %144, %147 : vector<1x32xf32>
    %149 = vector.extract_strided_slice %124 {offsets = [0, 160], sizes = [1, 32], strides = [1, 1]} : vector<1x256xf32> to vector<1x32xf32>
    %150 = arith.addf %146, %149 : vector<1x32xf32>
    %151 = vector.extract_strided_slice %121 {offsets = [0, 192], sizes = [1, 32], strides = [1, 1]} : vector<1x256xf32> to vector<1x32xf32>
    %152 = arith.addf %148, %151 : vector<1x32xf32>
    %153 = vector.extract_strided_slice %124 {offsets = [0, 192], sizes = [1, 32], strides = [1, 1]} : vector<1x256xf32> to vector<1x32xf32>
    %154 = arith.addf %150, %153 : vector<1x32xf32>
    %155 = vector.extract_strided_slice %121 {offsets = [0, 224], sizes = [1, 32], strides = [1, 1]} : vector<1x256xf32> to vector<1x32xf32>
    %156 = arith.addf %152, %155 : vector<1x32xf32>
    %157 = vector.extract_strided_slice %124 {offsets = [0, 224], sizes = [1, 32], strides = [1, 1]} : vector<1x256xf32> to vector<1x32xf32>
    %158 = arith.addf %154, %157 : vector<1x32xf32>
    %cst_82 = arith.constant 7.812500e-03 : f32
    %159 = vector.broadcast %cst_82 : f32 to vector<1x32xf32>
    %160 = arith.mulf %156, %159 : vector<1x32xf32>
    %cst_83 = arith.constant 7.812500e-03 : f32
    %161 = vector.broadcast %cst_83 : f32 to vector<1x32xf32>
    %162 = arith.mulf %158, %161 : vector<1x32xf32>
    %163 = arith.mulf %160, %160 : vector<1x32xf32>
    %164 = arith.subf %162, %163 : vector<1x32xf32>
    %cst_84 = arith.constant 0.000000e+00 : f32
    %165 = vector.broadcast %cst_84 : f32 to vector<1x32xf32>
    %166 = arith.maximumf %164, %165 : vector<1x32xf32>
    %cst_85 = arith.constant 9.99999974E-6 : f32
    %167 = vector.broadcast %cst_85 : f32 to vector<1x32xf32>
    %168 = arith.addf %166, %167 : vector<1x32xf32>
    %169 = math.rsqrt %168 : vector<1x32xf32>
    %170 = arith.mulf %118, %169 : vector<1x32xf32>
    %171 = arith.mulf %160, %170 : vector<1x32xf32>
    %172 = arith.subf %119, %171 : vector<1x32xf32>
    %173 = tpu.concatenate %170, %170, %170, %170, %170, %170, %170, %170 in 1 : vector<1x32xf32>, vector<1x32xf32>, vector<1x32xf32>, vector<1x32xf32>, vector<1x32xf32>, vector<1x32xf32>, vector<1x32xf32>, vector<1x32xf32> -> vector<1x256xf32>
    %174 = tpu.concatenate %172, %172, %172, %172, %172, %172, %172, %172 in 1 : vector<1x32xf32>, vector<1x32xf32>, vector<1x32xf32>, vector<1x32xf32>, vector<1x32xf32>, vector<1x32xf32>, vector<1x32xf32>, vector<1x32xf32> -> vector<1x256xf32>
    %175 = vector.broadcast %173 : vector<1x256xf32> to vector<16x256xf32>
    %176 = arith.mulf %117, %175 : vector<16x256xf32>
    %177 = vector.broadcast %174 : vector<1x256xf32> to vector<16x256xf32>
    %178 = arith.addf %176, %177 : vector<16x256xf32>
    %cst_86 = arith.constant 0.000000e+00 : f32
    %179 = vector.broadcast %cst_86 : f32 to vector<16x256xf32>
    %180 = arith.maximumf %178, %179 : vector<16x256xf32>
    %181 = arith.truncf %180 : vector<16x256xf32> to vector<16x256xbf16>
    %c0_87 = arith.constant 0 : index
    %c0_88 = arith.constant 0 : index
    %182 = vector.load %arg11[%c0_87, %c0_88] : memref<256x1024xbf16, #tpu.memory_space<vmem>>, vector<256x1024xbf16>
    %cst_89 = arith.constant dense<0.000000e+00> : vector<16x1024xf32>
    %183 = tpu.matmul %181, %182, %cst_89 {dimension_numbers = #tpu.dot_dimension_numbers<[1], [0], [0], [1], [0, 0, 1, 1], [], []>} : vector<16x256xbf16>, vector<256x1024xbf16>, vector<16x1024xf32> -> vector<16x1024xf32>
    %cst_90 = arith.constant 0.000000e+00 : f32
    %184 = vector.broadcast %cst_90 : f32 to vector<32x256xf32>
    %c0_91 = arith.constant 0 : index
    %c0_92 = arith.constant 0 : index
    %c0_93 = arith.constant 0 : index
    %185 = vector.load %arg16[%c0_91, %c0_92, %c0_93] : memref<4x32x16xf32, #tpu.memory_space<vmem>>, vector<1x32x16xf32>
    %186 = vector.shape_cast %185 : vector<1x32x16xf32> to vector<32x16xf32>
    %187 = vector.extract_strided_slice %183 {offsets = [0, 0], sizes = [16, 256], strides = [1, 1]} : vector<16x1024xf32> to vector<16x256xf32>
    %cst_94 = arith.constant dense<0.000000e+00> : vector<32x256xf32>
    %188 = tpu.matmul %186, %187, %cst_94 {dimension_numbers = #tpu.dot_dimension_numbers<[1], [0], [0], [1], [0, 0, 1, 1], [], []>} : vector<32x16xf32>, vector<16x256xf32>, vector<32x256xf32> -> vector<32x256xf32>
    %189 = arith.addf %184, %188 : vector<32x256xf32>
    %c1_95 = arith.constant 1 : index
    %c0_96 = arith.constant 0 : index
    %c0_97 = arith.constant 0 : index
    %190 = vector.load %arg16[%c1_95, %c0_96, %c0_97] : memref<4x32x16xf32, #tpu.memory_space<vmem>>, vector<1x32x16xf32>
    %191 = vector.shape_cast %190 : vector<1x32x16xf32> to vector<32x16xf32>
    %192 = vector.extract_strided_slice %183 {offsets = [0, 256], sizes = [16, 256], strides = [1, 1]} : vector<16x1024xf32> to vector<16x256xf32>
    %cst_98 = arith.constant dense<0.000000e+00> : vector<32x256xf32>
    %193 = tpu.matmul %191, %192, %cst_98 {dimension_numbers = #tpu.dot_dimension_numbers<[1], [0], [0], [1], [0, 0, 1, 1], [], []>} : vector<32x16xf32>, vector<16x256xf32>, vector<32x256xf32> -> vector<32x256xf32>
    %194 = arith.addf %189, %193 : vector<32x256xf32>
    %c2_99 = arith.constant 2 : index
    %c0_100 = arith.constant 0 : index
    %c0_101 = arith.constant 0 : index
    %195 = vector.load %arg16[%c2_99, %c0_100, %c0_101] : memref<4x32x16xf32, #tpu.memory_space<vmem>>, vector<1x32x16xf32>
    %196 = vector.shape_cast %195 : vector<1x32x16xf32> to vector<32x16xf32>
    %197 = vector.extract_strided_slice %183 {offsets = [0, 512], sizes = [16, 256], strides = [1, 1]} : vector<16x1024xf32> to vector<16x256xf32>
    %cst_102 = arith.constant dense<0.000000e+00> : vector<32x256xf32>
    %198 = tpu.matmul %196, %197, %cst_102 {dimension_numbers = #tpu.dot_dimension_numbers<[1], [0], [0], [1], [0, 0, 1, 1], [], []>} : vector<32x16xf32>, vector<16x256xf32>, vector<32x256xf32> -> vector<32x256xf32>
    %199 = arith.addf %194, %198 : vector<32x256xf32>
    %c3_103 = arith.constant 3 : index
    %c0_104 = arith.constant 0 : index
    %c0_105 = arith.constant 0 : index
    %200 = vector.load %arg16[%c3_103, %c0_104, %c0_105] : memref<4x32x16xf32, #tpu.memory_space<vmem>>, vector<1x32x16xf32>
    %201 = vector.shape_cast %200 : vector<1x32x16xf32> to vector<32x16xf32>
    %202 = vector.extract_strided_slice %183 {offsets = [0, 768], sizes = [16, 256], strides = [1, 1]} : vector<16x1024xf32> to vector<16x256xf32>
    %cst_106 = arith.constant dense<0.000000e+00> : vector<32x256xf32>
    %203 = tpu.matmul %201, %202, %cst_106 {dimension_numbers = #tpu.dot_dimension_numbers<[1], [0], [0], [1], [0, 0, 1, 1], [], []>} : vector<32x16xf32>, vector<16x256xf32>, vector<32x256xf32> -> vector<32x256xf32>
    %204 = arith.addf %199, %203 : vector<32x256xf32>
    %c0_107 = arith.constant 0 : index
    %c0_108 = arith.constant 0 : index
    %205 = vector.load %arg12[%c0_107, %c0_108] : memref<1x16xf32, #tpu.memory_space<vmem>>, vector<1x16xf32>
    %c0_109 = arith.constant 0 : index
    %c0_110 = arith.constant 0 : index
    %206 = vector.load %arg13[%c0_109, %c0_110] : memref<1x16xf32, #tpu.memory_space<vmem>>, vector<1x16xf32>
    %cst_111 = arith.constant dense<0.000000e+00> : vector<256xf32>
    %207 = vector.multi_reduction <add>, %204, %cst_111 [0] : vector<32x256xf32> to vector<256xf32>
    %208 = vector.shape_cast %207 : vector<256xf32> to vector<1x256xf32>
    %209 = arith.mulf %204, %204 : vector<32x256xf32>
    %cst_112 = arith.constant dense<0.000000e+00> : vector<256xf32>
    %210 = vector.multi_reduction <add>, %209, %cst_112 [0] : vector<32x256xf32> to vector<256xf32>
    %211 = vector.shape_cast %210 : vector<256xf32> to vector<1x256xf32>
    %cst_113 = arith.constant 0.000000e+00 : f32
    %212 = vector.broadcast %cst_113 : f32 to vector<1x16xf32>
    %cst_114 = arith.constant 0.000000e+00 : f32
    %213 = vector.broadcast %cst_114 : f32 to vector<1x16xf32>
    %214 = vector.extract_strided_slice %208 {offsets = [0, 0], sizes = [1, 16], strides = [1, 1]} : vector<1x256xf32> to vector<1x16xf32>
    %215 = arith.addf %212, %214 : vector<1x16xf32>
    %216 = vector.extract_strided_slice %211 {offsets = [0, 0], sizes = [1, 16], strides = [1, 1]} : vector<1x256xf32> to vector<1x16xf32>
    %217 = arith.addf %213, %216 : vector<1x16xf32>
    %218 = vector.extract_strided_slice %208 {offsets = [0, 16], sizes = [1, 16], strides = [1, 1]} : vector<1x256xf32> to vector<1x16xf32>
    %219 = arith.addf %215, %218 : vector<1x16xf32>
    %220 = vector.extract_strided_slice %211 {offsets = [0, 16], sizes = [1, 16], strides = [1, 1]} : vector<1x256xf32> to vector<1x16xf32>
    %221 = arith.addf %217, %220 : vector<1x16xf32>
    %222 = vector.extract_strided_slice %208 {offsets = [0, 32], sizes = [1, 16], strides = [1, 1]} : vector<1x256xf32> to vector<1x16xf32>
    %223 = arith.addf %219, %222 : vector<1x16xf32>
    %224 = vector.extract_strided_slice %211 {offsets = [0, 32], sizes = [1, 16], strides = [1, 1]} : vector<1x256xf32> to vector<1x16xf32>
    %225 = arith.addf %221, %224 : vector<1x16xf32>
    %226 = vector.extract_strided_slice %208 {offsets = [0, 48], sizes = [1, 16], strides = [1, 1]} : vector<1x256xf32> to vector<1x16xf32>
    %227 = arith.addf %223, %226 : vector<1x16xf32>
    %228 = vector.extract_strided_slice %211 {offsets = [0, 48], sizes = [1, 16], strides = [1, 1]} : vector<1x256xf32> to vector<1x16xf32>
    %229 = arith.addf %225, %228 : vector<1x16xf32>
    %230 = vector.extract_strided_slice %208 {offsets = [0, 64], sizes = [1, 16], strides = [1, 1]} : vector<1x256xf32> to vector<1x16xf32>
    %231 = arith.addf %227, %230 : vector<1x16xf32>
    %232 = vector.extract_strided_slice %211 {offsets = [0, 64], sizes = [1, 16], strides = [1, 1]} : vector<1x256xf32> to vector<1x16xf32>
    %233 = arith.addf %229, %232 : vector<1x16xf32>
    %234 = vector.extract_strided_slice %208 {offsets = [0, 80], sizes = [1, 16], strides = [1, 1]} : vector<1x256xf32> to vector<1x16xf32>
    %235 = arith.addf %231, %234 : vector<1x16xf32>
    %236 = vector.extract_strided_slice %211 {offsets = [0, 80], sizes = [1, 16], strides = [1, 1]} : vector<1x256xf32> to vector<1x16xf32>
    %237 = arith.addf %233, %236 : vector<1x16xf32>
    %238 = vector.extract_strided_slice %208 {offsets = [0, 96], sizes = [1, 16], strides = [1, 1]} : vector<1x256xf32> to vector<1x16xf32>
    %239 = arith.addf %235, %238 : vector<1x16xf32>
    %240 = vector.extract_strided_slice %211 {offsets = [0, 96], sizes = [1, 16], strides = [1, 1]} : vector<1x256xf32> to vector<1x16xf32>
    %241 = arith.addf %237, %240 : vector<1x16xf32>
    %242 = vector.extract_strided_slice %208 {offsets = [0, 112], sizes = [1, 16], strides = [1, 1]} : vector<1x256xf32> to vector<1x16xf32>
    %243 = arith.addf %239, %242 : vector<1x16xf32>
    %244 = vector.extract_strided_slice %211 {offsets = [0, 112], sizes = [1, 16], strides = [1, 1]} : vector<1x256xf32> to vector<1x16xf32>
    %245 = arith.addf %241, %244 : vector<1x16xf32>
    %246 = vector.extract_strided_slice %208 {offsets = [0, 128], sizes = [1, 16], strides = [1, 1]} : vector<1x256xf32> to vector<1x16xf32>
    %247 = arith.addf %243, %246 : vector<1x16xf32>
    %248 = vector.extract_strided_slice %211 {offsets = [0, 128], sizes = [1, 16], strides = [1, 1]} : vector<1x256xf32> to vector<1x16xf32>
    %249 = arith.addf %245, %248 : vector<1x16xf32>
    %250 = vector.extract_strided_slice %208 {offsets = [0, 144], sizes = [1, 16], strides = [1, 1]} : vector<1x256xf32> to vector<1x16xf32>
    %251 = arith.addf %247, %250 : vector<1x16xf32>
    %252 = vector.extract_strided_slice %211 {offsets = [0, 144], sizes = [1, 16], strides = [1, 1]} : vector<1x256xf32> to vector<1x16xf32>
    %253 = arith.addf %249, %252 : vector<1x16xf32>
    %254 = vector.extract_strided_slice %208 {offsets = [0, 160], sizes = [1, 16], strides = [1, 1]} : vector<1x256xf32> to vector<1x16xf32>
    %255 = arith.addf %251, %254 : vector<1x16xf32>
    %256 = vector.extract_strided_slice %211 {offsets = [0, 160], sizes = [1, 16], strides = [1, 1]} : vector<1x256xf32> to vector<1x16xf32>
    %257 = arith.addf %253, %256 : vector<1x16xf32>
    %258 = vector.extract_strided_slice %208 {offsets = [0, 176], sizes = [1, 16], strides = [1, 1]} : vector<1x256xf32> to vector<1x16xf32>
    %259 = arith.addf %255, %258 : vector<1x16xf32>
    %260 = vector.extract_strided_slice %211 {offsets = [0, 176], sizes = [1, 16], strides = [1, 1]} : vector<1x256xf32> to vector<1x16xf32>
    %261 = arith.addf %257, %260 : vector<1x16xf32>
    %262 = vector.extract_strided_slice %208 {offsets = [0, 192], sizes = [1, 16], strides = [1, 1]} : vector<1x256xf32> to vector<1x16xf32>
    %263 = arith.addf %259, %262 : vector<1x16xf32>
    %264 = vector.extract_strided_slice %211 {offsets = [0, 192], sizes = [1, 16], strides = [1, 1]} : vector<1x256xf32> to vector<1x16xf32>
    %265 = arith.addf %261, %264 : vector<1x16xf32>
    %266 = vector.extract_strided_slice %208 {offsets = [0, 208], sizes = [1, 16], strides = [1, 1]} : vector<1x256xf32> to vector<1x16xf32>
    %267 = arith.addf %263, %266 : vector<1x16xf32>
    %268 = vector.extract_strided_slice %211 {offsets = [0, 208], sizes = [1, 16], strides = [1, 1]} : vector<1x256xf32> to vector<1x16xf32>
    %269 = arith.addf %265, %268 : vector<1x16xf32>
    %270 = vector.extract_strided_slice %208 {offsets = [0, 224], sizes = [1, 16], strides = [1, 1]} : vector<1x256xf32> to vector<1x16xf32>
    %271 = arith.addf %267, %270 : vector<1x16xf32>
    %272 = vector.extract_strided_slice %211 {offsets = [0, 224], sizes = [1, 16], strides = [1, 1]} : vector<1x256xf32> to vector<1x16xf32>
    %273 = arith.addf %269, %272 : vector<1x16xf32>
    %274 = vector.extract_strided_slice %208 {offsets = [0, 240], sizes = [1, 16], strides = [1, 1]} : vector<1x256xf32> to vector<1x16xf32>
    %275 = arith.addf %271, %274 : vector<1x16xf32>
    %276 = vector.extract_strided_slice %211 {offsets = [0, 240], sizes = [1, 16], strides = [1, 1]} : vector<1x256xf32> to vector<1x16xf32>
    %277 = arith.addf %273, %276 : vector<1x16xf32>
    %cst_115 = arith.constant 0.001953125 : f32
    %278 = vector.broadcast %cst_115 : f32 to vector<1x16xf32>
    %279 = arith.mulf %275, %278 : vector<1x16xf32>
    %cst_116 = arith.constant 0.001953125 : f32
    %280 = vector.broadcast %cst_116 : f32 to vector<1x16xf32>
    %281 = arith.mulf %277, %280 : vector<1x16xf32>
    %282 = arith.mulf %279, %279 : vector<1x16xf32>
    %283 = arith.subf %281, %282 : vector<1x16xf32>
    %cst_117 = arith.constant 0.000000e+00 : f32
    %284 = vector.broadcast %cst_117 : f32 to vector<1x16xf32>
    %285 = arith.maximumf %283, %284 : vector<1x16xf32>
    %cst_118 = arith.constant 9.99999974E-6 : f32
    %286 = vector.broadcast %cst_118 : f32 to vector<1x16xf32>
    %287 = arith.addf %285, %286 : vector<1x16xf32>
    %288 = math.rsqrt %287 : vector<1x16xf32>
    %289 = arith.mulf %205, %288 : vector<1x16xf32>
    %290 = arith.mulf %279, %289 : vector<1x16xf32>
    %291 = arith.subf %206, %290 : vector<1x16xf32>
    %292 = tpu.concatenate %289, %289, %289, %289, %289, %289, %289, %289, %289, %289, %289, %289, %289, %289, %289, %289 in 1 : vector<1x16xf32>, vector<1x16xf32>, vector<1x16xf32>, vector<1x16xf32>, vector<1x16xf32>, vector<1x16xf32>, vector<1x16xf32>, vector<1x16xf32>, vector<1x16xf32>, vector<1x16xf32>, vector<1x16xf32>, vector<1x16xf32>, vector<1x16xf32>, vector<1x16xf32>, vector<1x16xf32>, vector<1x16xf32> -> vector<1x256xf32>
    %293 = tpu.concatenate %291, %291, %291, %291, %291, %291, %291, %291, %291, %291, %291, %291, %291, %291, %291, %291 in 1 : vector<1x16xf32>, vector<1x16xf32>, vector<1x16xf32>, vector<1x16xf32>, vector<1x16xf32>, vector<1x16xf32>, vector<1x16xf32>, vector<1x16xf32>, vector<1x16xf32>, vector<1x16xf32>, vector<1x16xf32>, vector<1x16xf32>, vector<1x16xf32>, vector<1x16xf32>, vector<1x16xf32>, vector<1x16xf32> -> vector<1x256xf32>
    %294 = vector.broadcast %292 : vector<1x256xf32> to vector<32x256xf32>
    %295 = arith.mulf %204, %294 : vector<32x256xf32>
    %296 = vector.broadcast %293 : vector<1x256xf32> to vector<32x256xf32>
    %297 = arith.addf %295, %296 : vector<32x256xf32>
    %cst_119 = arith.constant 0.000000e+00 : f32
    %298 = vector.broadcast %cst_119 : f32 to vector<32x256xf32>
    %299 = arith.maximumf %297, %298 : vector<32x256xf32>
    %300 = arith.truncf %299 : vector<32x256xf32> to vector<32x256xbf16>
    %c0_120 = arith.constant 0 : index
    %c0_121 = arith.constant 0 : index
    %301 = vector.load %arg14[%c0_120, %c0_121] : memref<256x512xbf16, #tpu.memory_space<vmem>>, vector<256x512xbf16>
    %cst_122 = arith.constant dense<0.000000e+00> : vector<32x512xf32>
    %302 = tpu.matmul %300, %301, %cst_122 {dimension_numbers = #tpu.dot_dimension_numbers<[1], [0], [0], [1], [0, 0, 1, 1], [], []>} : vector<32x256xbf16>, vector<256x512xbf16>, vector<32x512xf32> -> vector<32x512xf32>
    %cst_123 = arith.constant 0.000000e+00 : f32
    %303 = vector.broadcast %cst_123 : f32 to vector<56x128xf32>
    %c0_124 = arith.constant 0 : index
    %c0_125 = arith.constant 0 : index
    %c0_126 = arith.constant 0 : index
    %304 = vector.load %arg17[%c0_124, %c0_125, %c0_126] : memref<4x56x32xf32, #tpu.memory_space<vmem>>, vector<1x56x32xf32>
    %305 = vector.shape_cast %304 : vector<1x56x32xf32> to vector<56x32xf32>
    %306 = vector.extract_strided_slice %302 {offsets = [0, 0], sizes = [32, 128], strides = [1, 1]} : vector<32x512xf32> to vector<32x128xf32>
    %cst_127 = arith.constant dense<0.000000e+00> : vector<56x128xf32>
    %307 = tpu.matmul %305, %306, %cst_127 {dimension_numbers = #tpu.dot_dimension_numbers<[1], [0], [0], [1], [0, 0, 1, 1], [], []>} : vector<56x32xf32>, vector<32x128xf32>, vector<56x128xf32> -> vector<56x128xf32>
    %308 = arith.addf %303, %307 : vector<56x128xf32>
    %c1_128 = arith.constant 1 : index
    %c0_129 = arith.constant 0 : index
    %c0_130 = arith.constant 0 : index
    %309 = vector.load %arg17[%c1_128, %c0_129, %c0_130] : memref<4x56x32xf32, #tpu.memory_space<vmem>>, vector<1x56x32xf32>
    %310 = vector.shape_cast %309 : vector<1x56x32xf32> to vector<56x32xf32>
    %311 = vector.extract_strided_slice %302 {offsets = [0, 128], sizes = [32, 128], strides = [1, 1]} : vector<32x512xf32> to vector<32x128xf32>
    %cst_131 = arith.constant dense<0.000000e+00> : vector<56x128xf32>
    %312 = tpu.matmul %310, %311, %cst_131 {dimension_numbers = #tpu.dot_dimension_numbers<[1], [0], [0], [1], [0, 0, 1, 1], [], []>} : vector<56x32xf32>, vector<32x128xf32>, vector<56x128xf32> -> vector<56x128xf32>
    %313 = arith.addf %308, %312 : vector<56x128xf32>
    %c2_132 = arith.constant 2 : index
    %c0_133 = arith.constant 0 : index
    %c0_134 = arith.constant 0 : index
    %314 = vector.load %arg17[%c2_132, %c0_133, %c0_134] : memref<4x56x32xf32, #tpu.memory_space<vmem>>, vector<1x56x32xf32>
    %315 = vector.shape_cast %314 : vector<1x56x32xf32> to vector<56x32xf32>
    %316 = vector.extract_strided_slice %302 {offsets = [0, 256], sizes = [32, 128], strides = [1, 1]} : vector<32x512xf32> to vector<32x128xf32>
    %cst_135 = arith.constant dense<0.000000e+00> : vector<56x128xf32>
    %317 = tpu.matmul %315, %316, %cst_135 {dimension_numbers = #tpu.dot_dimension_numbers<[1], [0], [0], [1], [0, 0, 1, 1], [], []>} : vector<56x32xf32>, vector<32x128xf32>, vector<56x128xf32> -> vector<56x128xf32>
    %318 = arith.addf %313, %317 : vector<56x128xf32>
    %c3_136 = arith.constant 3 : index
    %c0_137 = arith.constant 0 : index
    %c0_138 = arith.constant 0 : index
    %319 = vector.load %arg17[%c3_136, %c0_137, %c0_138] : memref<4x56x32xf32, #tpu.memory_space<vmem>>, vector<1x56x32xf32>
    %320 = vector.shape_cast %319 : vector<1x56x32xf32> to vector<56x32xf32>
    %321 = vector.extract_strided_slice %302 {offsets = [0, 384], sizes = [32, 128], strides = [1, 1]} : vector<32x512xf32> to vector<32x128xf32>
    %cst_139 = arith.constant dense<0.000000e+00> : vector<56x128xf32>
    %322 = tpu.matmul %320, %321, %cst_139 {dimension_numbers = #tpu.dot_dimension_numbers<[1], [0], [0], [1], [0, 0, 1, 1], [], []>} : vector<56x32xf32>, vector<32x128xf32>, vector<56x128xf32> -> vector<56x128xf32>
    %323 = arith.addf %318, %322 : vector<56x128xf32>
    %324 = vector.extract_strided_slice %323 {offsets = [0, 0], sizes = [56, 28], strides = [1, 1]} : vector<56x128xf32> to vector<56x28xf32>
    %325 = math.tanh %324 : vector<56x28xf32>
    %c0_140 = arith.constant 0 : index
    %c0_141 = arith.constant 0 : index
    %326 = vector.load %arg18[%c0_140, %c0_141] : memref<56x28xf32, #tpu.memory_space<vmem>>, vector<56x28xf32>
    tpu.vector_store %arg18[%c0_140, %c0_141], %325 {strides = array<i32>} : memref<56x28xf32, #tpu.memory_space<vmem>>, vector<56x28xf32>,
    return
  }
}

</mosaic_0001>

<llo_original>
// kernel: generator_forward.1
$region0: #{generator_forward.1}
  #allocation0 [shape = 'u32[]', space=smem, size = 0x4, offset = 0x4, fixed_abs, tag = 'smem constant byte address 0x4 - core index']
  #allocation1 [shape = 'u32[144,128]{1,0:T(1,128)}', space=vmem, size = 0x12000, scoped, tag = 'internal scratch']
  #allocation2 [shape = 'f32[8,260]{1,0:T(8,128)}', space=vmem, size = 0x3000, scoped, tag = 'scratch operand']
  %s0 = inlined_call_operand.vmem [shape: f32[2,32], index: 0, kind: input, shape index: {}]
  %s1 = inlined_call_operand.vmem [shape: f32[2,8], index: 1, kind: input, shape index: {}]
  %s2 = inlined_call_operand.vmem [shape: f32[8,16], index: 2, kind: input, shape index: {}]
  %s3 = inlined_call_operand.vmem [shape: f32[1,16], index: 3, kind: input, shape index: {}]
  %s4 = inlined_call_operand.hbm [shape: bf16[32,1024], index: 4, kind: input, shape index: {}]
  %s5 = inlined_call_operand.vmem [shape: f32[1,64], index: 5, kind: input, shape index: {}]
  %s6 = inlined_call_operand.vmem [shape: f32[1,64], index: 6, kind: input, shape index: {}]
  %s7 = inlined_call_operand.hbm [shape: bf16[256,1024], index: 7, kind: input, shape index: {}]
  %s8 = inlined_call_operand.hbm [shape: f32[4,1024], index: 8, kind: input, shape index: {}]
  %s9 = inlined_call_operand.vmem [shape: f32[1,32], index: 9, kind: input, shape index: {}]
  %s10 = inlined_call_operand.vmem [shape: f32[1,32], index: 10, kind: input, shape index: {}]
  %s11 = inlined_call_operand.hbm [shape: bf16[256,1024], index: 11, kind: input, shape index: {}]
  %s12 = inlined_call_operand.vmem [shape: f32[1,16], index: 12, kind: input, shape index: {}]
  %s13 = inlined_call_operand.vmem [shape: f32[1,16], index: 13, kind: input, shape index: {}]
  %s14 = inlined_call_operand.vmem [shape: bf16[256,512], index: 14, kind: input, shape index: {}]
  %s15 = inlined_call_operand.vmem [shape: f32[4,16,8], index: 15, kind: input, shape index: {}]
  %s16 = inlined_call_operand.vmem [shape: f32[4,32,16], index: 16, kind: input, shape index: {}]
  %s17 = inlined_call_operand.vmem [shape: f32[4,56,32], index: 17, kind: input, shape index: {}]
  %s18 = inlined_call_operand.hbm [shape: f32[56,28], index: 18, kind: output, shape index: {}]
  %s19 = sld [smem:[#allocation0]]
  $region98: #{generator_forward.1} parent=0
    _
  %s21 = ssub.s32 1, %s19
  %s22 = scalar_select 0, %s21, %s19
  $region1: #{generator_forward.1} parent=0
    #allocation3 [shape = 'u8[65536]{0}', space=vmem, size = 0x10000, scoped, tag = 'input window, operand 4, single buffered']
    #allocation4 [shape = 's32[1]{0}', space=sflag, size = 0x4, scoped, tag = 'scoped memory for generator_forward.1']
    #allocation5 [shape = 's32[1]{0}', space=sflag, size = 0x4, scoped, tag = 'scoped memory for generator_forward.1']
    #allocation6 [shape = 'u8[524288]{0}', space=vmem, size = 0x80000, scoped, tag = 'input window, operand 7, single buffered']
    #allocation7 [shape = 's32[1]{0}', space=sflag, size = 0x4, scoped, tag = 'scoped memory for generator_forward.1']
    #allocation8 [shape = 'u8[16384]{0}', space=vmem, size = 0x4000, scoped, tag = 'input window, operand 8, single buffered']
    #allocation9 [shape = 'u8[524288]{0}', space=vmem, size = 0x80000, scoped, tag = 'input window, operand 11, single buffered']
    #allocation10 [shape = 's32[1]{0}', space=sflag, size = 0x4, scoped, tag = 'scoped memory for generator_forward.1']
    #allocation11 [shape = 'u8[28672]{0}', space=vmem, size = 0x7000, scoped, tag = 'output window, operand 0, single buffered']
    %23 = vsyncpa [#allocation4], 0
    %24 = vsyncpa [#allocation7], 0
    %25 = vsyncpa [#allocation10], 0
    %26 = vsyncpa [#allocation5], 0
    // Predicated region
    $region2: #{generator_forward.1} parent=1 // pred_check
      _
    $region3: #{generator_forward.1} parent=1 // pred_check_branch
      %28 = sbr.rel (0) target = $region5
    $region4: #{generator_forward.1} parent=1 // pred_region
      _
    $region5: #{generator_forward.1} parent=1 // pred_fallthru
      _
    // Predicated region
    $region6: #{generator_forward.1} parent=1 // pred_check
      _
    $region7: #{generator_forward.1} parent=1 // pred_check_branch
      %30 = sbr.rel (0) target = $region9
    $region8: #{generator_forward.1} parent=1 // pred_region
      _
    $region9: #{generator_forward.1} parent=1 // pred_fallthru
      _
    // Predicated region
    $region10: #{generator_forward.1} parent=1 // pred_check
      _
    $region11: #{generator_forward.1} parent=1 // pred_check_branch
      %32 = sbr.rel (0) target = $region13
    $region12: #{generator_forward.1} parent=1 // pred_region
      _
    $region13: #{generator_forward.1} parent=1 // pred_fallthru
      _
    // Predicated region
    $region14: #{generator_forward.1} parent=1 // pred_check
      _
    $region15: #{generator_forward.1} parent=1 // pred_check_branch
      %34 = sbr.rel (0) target = $region17
    $region16: #{generator_forward.1} parent=1 // pred_region
      _
    $region17: #{generator_forward.1} parent=1 // pred_fallthru
      _
    // Predicated region
    $region18: #{generator_forward.1} parent=1 // pred_check
      _
    $region19: #{generator_forward.1} parent=1 // pred_check_branch
      %36 = sbr.rel (0) target = $region21
    $region20: #{generator_forward.1} parent=1 // pred_region
      %s38 = ssub.s32 2048, 2048
      %39 = vsyncadd [#allocation4], %s38
      %s40 = sshll.u32 [#allocation3], 4
      %s41 = int_to_ptr.vmem [resolvable:$true] %s40
      %46 = dma.hbm_to_vmem [thread:$0]  %s4, 2048, %s41, [#allocation4], 512, 512, 32
    $region21: #{generator_forward.1} parent=1 // pred_fallthru
      _
    // Predicated region
    $region22: #{generator_forward.1} parent=1 // pred_check
      _
    $region23: #{generator_forward.1} parent=1 // pred_check_branch
      %48 = sbr.rel (0) target = $region25
    $region24: #{generator_forward.1} parent=1 // pred_region
      _
    $region25: #{generator_forward.1} parent=1 // pred_fallthru
      _
    // Predicated region
    $region26: #{generator_forward.1} parent=1 // pred_check
      _
    $region27: #{generator_forward.1} parent=1 // pred_check_branch
      %50 = sbr.rel (0) target = $region29
    $region28: #{generator_forward.1} parent=1 // pred_region
      _
    $region29: #{generator_forward.1} parent=1 // pred_fallthru
      _
    // Predicated region
    $region30: #{generator_forward.1} parent=1 // pred_check
      _
    $region31: #{generator_forward.1} parent=1 // pred_check_branch
      %52 = sbr.rel (0) target = $region33
    $region32: #{generator_forward.1} parent=1 // pred_region
      %s54 = ssub.s32 16384, 16384
      %55 = vsyncadd [#allocation7], %s54
      %s56 = sshll.u32 [#allocation6], 4
      %s57 = int_to_ptr.vmem [resolvable:$true] %s56
      %62 = dma.hbm_to_vmem [thread:$0]  %s7, 16384, %s57, [#allocation7], 512, 512, 32
    $region33: #{generator_forward.1} parent=1 // pred_fallthru
      _
    // Predicated region
    $region34: #{generator_forward.1} parent=1 // pred_check
      _
    $region35: #{generator_forward.1} parent=1 // pred_check_branch
      %64 = sbr.rel (0) target = $region37
    $region36: #{generator_forward.1} parent=1 // pred_region
      %s66 = ssub.s32 512, 512
      %67 = vsyncadd [#allocation7], %s66
      %s69 = sshll.u32 [#allocation8], 4
      %s70 = int_to_ptr.vmem [resolvable:$true] %s69
      %72 = dma.hbm_to_vmem [thread:$0]  %s8, 512, %s70, [#allocation7]
    $region37: #{generator_forward.1} parent=1 // pred_fallthru
      _
    // Predicated region
    $region38: #{generator_forward.1} parent=1 // pred_check
      _
    $region39: #{generator_forward.1} parent=1 // pred_check_branch
      %74 = sbr.rel (0) target = $region41
    $region40: #{generator_forward.1} parent=1 // pred_region
      _
    $region41: #{generator_forward.1} parent=1 // pred_fallthru
      _
    // Predicated region
    $region42: #{generator_forward.1} parent=1 // pred_check
      _
    $region43: #{generator_forward.1} parent=1 // pred_check_branch
      %76 = sbr.rel (0) target = $region45
    $region44: #{generator_forward.1} parent=1 // pred_region
      _
    $region45: #{generator_forward.1} parent=1 // pred_fallthru
      _
    // Predicated region
    $region46: #{generator_forward.1} parent=1 // pred_check
      _
    $region47: #{generator_forward.1} parent=1 // pred_check_branch
      %78 = sbr.rel (0) target = $region49
    $region48: #{generator_forward.1} parent=1 // pred_region
      %s80 = ssub.s32 16384, 16384
      %81 = vsyncadd [#allocation10], %s80
      %s82 = sshll.u32 [#allocation9], 4
      %s83 = int_to_ptr.vmem [resolvable:$true] %s82
      %88 = dma.hbm_to_vmem [thread:$0]  %s11, 16384, %s83, [#allocation10], 512, 512, 32
    $region49: #{generator_forward.1} parent=1 // pred_fallthru
      _
    // Predicated region
    $region50: #{generator_forward.1} parent=1 // pred_check
      _
    $region51: #{generator_forward.1} parent=1 // pred_check_branch
      %90 = sbr.rel (0) target = $region53
    $region52: #{generator_forward.1} parent=1 // pred_region
      _
    $region53: #{generator_forward.1} parent=1 // pred_fallthru
      _
    // Predicated region
    $region54: #{generator_forward.1} parent=1 // pred_check
      _
    $region55: #{generator_forward.1} parent=1 // pred_check_branch
      %92 = sbr.rel (0) target = $region57
    $region56: #{generator_forward.1} parent=1 // pred_region
      _
    $region57: #{generator_forward.1} parent=1 // pred_fallthru
      _
    // Predicated region
    $region58: #{generator_forward.1} parent=1 // pred_check
      _
    $region59: #{generator_forward.1} parent=1 // pred_check_branch
      %94 = sbr.rel (0) target = $region61
    $region60: #{generator_forward.1} parent=1 // pred_region
      _
    $region61: #{generator_forward.1} parent=1 // pred_fallthru
      _
    // Predicated region
    $region62: #{generator_forward.1} parent=1 // pred_check
      _
    $region63: #{generator_forward.1} parent=1 // pred_check_branch
      %96 = sbr.rel (0) target = $region65
    $region64: #{generator_forward.1} parent=1 // pred_region
      _
    $region65: #{generator_forward.1} parent=1 // pred_fallthru
      _
    // Predicated region
    $region66: #{generator_forward.1} parent=1 // pred_check
      _
    $region67: #{generator_forward.1} parent=1 // pred_check_branch
      %98 = sbr.rel (0) target = $region69
    $region68: #{generator_forward.1} parent=1 // pred_region
      _
    $region69: #{generator_forward.1} parent=1 // pred_fallthru
      _
    // Predicated region
    $region70: #{generator_forward.1} parent=1 // pred_check
      _
    $region71: #{generator_forward.1} parent=1 // pred_check_branch
      %100 = sbr.rel (0) target = $region73
    $region72: #{generator_forward.1} parent=1 // pred_region
      _
    $region73: #{generator_forward.1} parent=1 // pred_fallthru
      _
    // Predicated region
    $region74: #{generator_forward.1} parent=1 // pred_check
      _
    $region75: #{generator_forward.1} parent=1 // pred_check_branch
      %102 = sbr.rel (0) target = $region77
    $region76: #{generator_forward.1} parent=1 // pred_region
      %103 = dma.done [#allocation4], 2048
    $region77: #{generator_forward.1} parent=1 // pred_fallthru
      _
    // Predicated region
    $region78: #{generator_forward.1} parent=1 // pred_check
      _
    $region79: #{generator_forward.1} parent=1 // pred_check_branch
      %105 = sbr.rel (0) target = $region81
    $region80: #{generator_forward.1} parent=1 // pred_region
      %106 = dma.done [#allocation7], 16384
    $region81: #{generator_forward.1} parent=1 // pred_fallthru
      _
    // Predicated region
    $region82: #{generator_forward.1} parent=1 // pred_check
      _
    $region83: #{generator_forward.1} parent=1 // pred_check_branch
      %108 = sbr.rel (0) target = $region85
    $region84: #{generator_forward.1} parent=1 // pred_region
      %109 = dma.done [#allocation7], 512
    $region85: #{generator_forward.1} parent=1 // pred_fallthru
      _
    // Predicated region
    $region86: #{generator_forward.1} parent=1 // pred_check
      _
    $region87: #{generator_forward.1} parent=1 // pred_check_branch
      %111 = sbr.rel (0) target = $region89
    $region88: #{generator_forward.1} parent=1 // pred_region
      %112 = dma.done [#allocation10], 16384
    $region89: #{generator_forward.1} parent=1 // pred_fallthru
      _
    %v114 = vld [vmem:[%s0] sm:$0x3]
    %v115 = vpack.c.bf16 %v114, %v114
    %v116 = vld [vmem:[#allocation3] sm:$0xff]
    %v117 = vld [vmem:[#allocation3 + $0x8] sm:$0xff]
    %v118 = vld [vmem:[#allocation3 + $0x10] sm:$0xff]
    %v119 = vld [vmem:[#allocation3 + $0x18] sm:$0xff]
    %v120 = vld [vmem:[#allocation3 + $0x20] sm:$0xff]
    %v121 = vld [vmem:[#allocation3 + $0x28] sm:$0xff]
    %v122 = vld [vmem:[#allocation3 + $0x30] sm:$0xff]
    %v123 = vld [vmem:[#allocation3 + $0x38] sm:$0xff]
    %v124 = vld [vmem:[#allocation3 + $0x40] sm:$0xff]
    %v125 = vld [vmem:[#allocation3 + $0x48] sm:$0xff]
    %v126 = vld [vmem:[#allocation3 + $0x50] sm:$0xff]
    %v127 = vld [vmem:[#allocation3 + $0x58] sm:$0xff]
    %v128 = vld [vmem:[#allocation3 + $0x60] sm:$0xff]
    %v129 = vld [vmem:[#allocation3 + $0x68] sm:$0xff]
    %v130 = vld [vmem:[#allocation3 + $0x70] sm:$0xff]
    %v131 = vld [vmem:[#allocation3 + $0x78] sm:$0xff]
    %v148 = vunpack.c.l.b16 %v116
    %v149 = vunpack.c.h.b16 %v116
    %v150 = vunpack.c.l.b16 %v117
    %v151 = vunpack.c.h.b16 %v117
    %v152 = vunpack.c.l.b16 %v118
    %v153 = vunpack.c.h.b16 %v118
    %v154 = vunpack.c.l.b16 %v119
    %v155 = vunpack.c.h.b16 %v119
    %v156 = vunpack.c.l.b16 %v120
    %v157 = vunpack.c.h.b16 %v120
    %v158 = vunpack.c.l.b16 %v121
    %v159 = vunpack.c.h.b16 %v121
    %v160 = vunpack.c.l.b16 %v122
    %v161 = vunpack.c.h.b16 %v122
    %v162 = vunpack.c.l.b16 %v123
    %v163 = vunpack.c.h.b16 %v123
    %v164 = vunpack.c.l.b16 %v124
    %v165 = vunpack.c.h.b16 %v124
    %v166 = vunpack.c.l.b16 %v125
    %v167 = vunpack.c.h.b16 %v125
    %v168 = vunpack.c.l.b16 %v126
    %v169 = vunpack.c.h.b16 %v126
    %v170 = vunpack.c.l.b16 %v127
    %v171 = vunpack.c.h.b16 %v127
    %v172 = vunpack.c.l.b16 %v128
    %v173 = vunpack.c.h.b16 %v128
    %v174 = vunpack.c.l.b16 %v129
    %v175 = vunpack.c.h.b16 %v129
    %v176 = vunpack.c.l.b16 %v130
    %v177 = vunpack.c.h.b16 %v130
    %v178 = vunpack.c.l.b16 %v131
    %v179 = vunpack.c.h.b16 %v131
    %v180 = vpack.c.b16 %v156, %v148
    %v181 = vpack.c.b16 %v157, %v149
    %v182 = vpack.c.b16 %v158, %v150
    %v183 = vpack.c.b16 %v159, %v151
    %v184 = vpack.c.b16 %v160, %v152
    %v185 = vpack.c.b16 %v161, %v153
    %v186 = vpack.c.b16 %v162, %v154
    %v187 = vpack.c.b16 %v163, %v155
    %v188 = vpack.c.b16 %v172, %v164
    %v189 = vpack.c.b16 %v173, %v165
    %v190 = vpack.c.b16 %v174, %v166
    %v191 = vpack.c.b16 %v175, %v167
    %v192 = vpack.c.b16 %v176, %v168
    %v193 = vpack.c.b16 %v177, %v169
    %v194 = vpack.c.b16 %v178, %v170
    %v195 = vpack.c.b16 %v179, %v171
    %vm212 = vcmask 261120
    %v214 = vsel %vm212, %v115, 0
    %216 = vmatprep.subr.bf16.mxu0 0
    %217 = vmatpush1.bf16.msra.mxu0 0
    %218 = vmatprep.subr.bf16.mxu0 0
    %219 = vmatpush1.bf16.msra.mxu0 0
    %220 = vmatprep.subr.bf16.mxu0 0
    %221 = vmatpush1.bf16.msra.mxu0 0
    %222 = vmatprep.subr.bf16.mxu0 0
    %223 = vmatpush1.bf16.msra.mxu0 0
    %224 = vmatprep.subr.bf16.mxu0 0
    %225 = vmatpush1.bf16.msra.mxu0 0
    %226 = vmatprep.subr.bf16.mxu0 0
    %227 = vmatpush1.bf16.msra.mxu0 0
    %228 = vmatprep.subr.bf16.mxu0 %v189
    %229 = vmatpush1.bf16.msra.mxu0 %v188
    %230 = vmatprep.subr.bf16.mxu0 %v181
    %231 = vmatpush1.bf16.msra.mxu0 %v180
    %232 = vmatprep.subr.bf16.mxu0 0
    %233 = vmatpush2.bf16.msra.mxu0 0
    %234 = vmatprep.subr.bf16.mxu0 0
    %235 = vmatpush2.bf16.msra.mxu0 0
    %236 = vmatprep.subr.bf16.mxu0 0
    %237 = vmatpush2.bf16.msra.mxu0 0
    %238 = vmatprep.subr.bf16.mxu0 0
    %239 = vmatpush2.bf16.msra.mxu0 0
    %240 = vmatprep.subr.bf16.mxu0 0
    %241 = vmatpush2.bf16.msra.mxu0 0
    %242 = vmatprep.subr.bf16.mxu0 0
    %243 = vmatpush2.bf16.msra.mxu0 0
    %244 = vmatprep.subr.bf16.mxu0 0
    %245 = vmatpush2.bf16.msra.mxu0 0
    %246 = vmatprep.subr.bf16.mxu0 0
    %247 = vmatpush2.bf16.msra.mxu0 0
    %248 = vmatprep.mubr.bf16.mxu0 0
    %249 = vmatmul.mubr.bf16.gmra.mxu0 %v214
    %v250 = vpop.f32.mrf.mxu0
    %v251 = vadd.f32 0.0, %v250
    %v252 = vpop.f32.mrf.mxu0
    %v253 = vadd.f32 0.0, %v252
    %v254 = vpop.f32.mrf.mxu0
    %v255 = vpop.f32.mrf.mxu0
    %256 = vdwg.mxu0
    %257 = vmatprep.subr.bf16.mxu0 0
    %258 = vmatpush1.bf16.msra.mxu0 0
    %259 = vmatprep.subr.bf16.mxu0 0
    %260 = vmatpush1.bf16.msra.mxu0 0
    %261 = vmatprep.subr.bf16.mxu0 0
    %262 = vmatpush1.bf16.msra.mxu0 0
    %263 = vmatprep.subr.bf16.mxu0 0
    %264 = vmatpush1.bf16.msra.mxu0 0
    %265 = vmatprep.subr.bf16.mxu0 0
    %266 = vmatpush1.bf16.msra.mxu0 0
    %267 = vmatprep.subr.bf16.mxu0 0
    %268 = vmatpush1.bf16.msra.mxu0 0
    %269 = vmatprep.subr.bf16.mxu0 %v191
    %270 = vmatpush1.bf16.msra.mxu0 %v190
    %271 = vmatprep.subr.bf16.mxu0 %v183
    %272 = vmatpush1.bf16.msra.mxu0 %v182
    %273 = vmatprep.subr.bf16.mxu0 0
    %274 = vmatpush2.bf16.msra.mxu0 0
    %275 = vmatprep.subr.bf16.mxu0 0
    %276 = vmatpush2.bf16.msra.mxu0 0
    %277 = vmatprep.subr.bf16.mxu0 0
    %278 = vmatpush2.bf16.msra.mxu0 0
    %279 = vmatprep.subr.bf16.mxu0 0
    %280 = vmatpush2.bf16.msra.mxu0 0
    %281 = vmatprep.subr.bf16.mxu0 0
    %282 = vmatpush2.bf16.msra.mxu0 0
    %283 = vmatprep.subr.bf16.mxu0 0
    %284 = vmatpush2.bf16.msra.mxu0 0
    %285 = vmatprep.subr.bf16.mxu0 0
    %286 = vmatpush2.bf16.msra.mxu0 0
    %287 = vmatprep.subr.bf16.mxu0 0
    %288 = vmatpush2.bf16.msra.mxu0 0
    %289 = vmatprep.mubr.bf16.mxu0 0
    %290 = vmatmul.mubr.bf16.gmra.mxu0 %v214
    %v291 = vpop.f32.mrf.mxu0
    %v292 = vadd.f32 0.0, %v291
    %v293 = vpop.f32.mrf.mxu0
    %v294 = vadd.f32 0.0, %v293
    %v295 = vpop.f32.mrf.mxu0
    %v296 = vpop.f32.mrf.mxu0
    %297 = vdwg.mxu0
    %298 = vmatprep.subr.bf16.mxu0 0
    %299 = vmatpush1.bf16.msra.mxu0 0
    %300 = vmatprep.subr.bf16.mxu0 0
    %301 = vmatpush1.bf16.msra.mxu0 0
    %302 = vmatprep.subr.bf16.mxu0 0
    %303 = vmatpush1.bf16.msra.mxu0 0
    %304 = vmatprep.subr.bf16.mxu0 0
    %305 = vmatpush1.bf16.msra.mxu0 0
    %306 = vmatprep.subr.bf16.mxu0 0
    %307 = vmatpush1.bf16.msra.mxu0 0
    %308 = vmatprep.subr.bf16.mxu0 0
    %309 = vmatpush1.bf16.msra.mxu0 0
    %310 = vmatprep.subr.bf16.mxu0 %v193
    %311 = vmatpush1.bf16.msra.mxu0 %v192
    %312 = vmatprep.subr.bf16.mxu0 %v185
    %313 = vmatpush1.bf16.msra.mxu0 %v184
    %314 = vmatprep.subr.bf16.mxu0 0
    %315 = vmatpush2.bf16.msra.mxu0 0
    %316 = vmatprep.subr.bf16.mxu0 0
    %317 = vmatpush2.bf16.msra.mxu0 0
    %318 = vmatprep.subr.bf16.mxu0 0
    %319 = vmatpush2.bf16.msra.mxu0 0
    %320 = vmatprep.subr.bf16.mxu0 0
    %321 = vmatpush2.bf16.msra.mxu0 0
    %322 = vmatprep.subr.bf16.mxu0 0
    %323 = vmatpush2.bf16.msra.mxu0 0
    %324 = vmatprep.subr.bf16.mxu0 0
    %325 = vmatpush2.bf16.msra.mxu0 0
    %326 = vmatprep.subr.bf16.mxu0 0
    %327 = vmatpush2.bf16.msra.mxu0 0
    %328 = vmatprep.subr.bf16.mxu0 0
    %329 = vmatpush2.bf16.msra.mxu0 0
    %330 = vmatprep.mubr.bf16.mxu0 0
    %331 = vmatmul.mubr.bf16.gmra.mxu0 %v214
    %v332 = vpop.f32.mrf.mxu0
    %v333 = vadd.f32 0.0, %v332
    %v334 = vpop.f32.mrf.mxu0
    %v335 = vadd.f32 0.0, %v334
    %v336 = vpop.f32.mrf.mxu0
    %v337 = vpop.f32.mrf.mxu0
    %338 = vdwg.mxu0
    %339 = vmatprep.subr.bf16.mxu0 0
    %340 = vmatpush1.bf16.msra.mxu0 0
    %341 = vmatprep.subr.bf16.mxu0 0
    %342 = vmatpush1.bf16.msra.mxu0 0
    %343 = vmatprep.subr.bf16.mxu0 0
    %344 = vmatpush1.bf16.msra.mxu0 0
    %345 = vmatprep.subr.bf16.mxu0 0
    %346 = vmatpush1.bf16.msra.mxu0 0
    %347 = vmatprep.subr.bf16.mxu0 0
    %348 = vmatpush1.bf16.msra.mxu0 0
    %349 = vmatprep.subr.bf16.mxu0 0
    %350 = vmatpush1.bf16.msra.mxu0 0
    %351 = vmatprep.subr.bf16.mxu0 %v195
    %352 = vmatpush1.bf16.msra.mxu0 %v194
    %353 = vmatprep.subr.bf16.mxu0 %v187
    %354 = vmatpush1.bf16.msra.mxu0 %v186
    %355 = vmatprep.subr.bf16.mxu0 0
    %356 = vmatpush2.bf16.msra.mxu0 0
    %357 = vmatprep.subr.bf16.mxu0 0
    %358 = vmatpush2.bf16.msra.mxu0 0
    %359 = vmatprep.subr.bf16.mxu0 0
    %360 = vmatpush2.bf16.msra.mxu0 0
    %361 = vmatprep.subr.bf16.mxu0 0
    %362 = vmatpush2.bf16.msra.mxu0 0
    %363 = vmatprep.subr.bf16.mxu0 0
    %364 = vmatpush2.bf16.msra.mxu0 0
    %365 = vmatprep.subr.bf16.mxu0 0
    %366 = vmatpush2.bf16.msra.mxu0 0
    %367 = vmatprep.subr.bf16.mxu0 0
    %368 = vmatpush2.bf16.msra.mxu0 0
    %369 = vmatprep.subr.bf16.mxu0 0
    %370 = vmatpush2.bf16.msra.mxu0 0
    %371 = vmatprep.mubr.bf16.mxu0 0
    %372 = vmatmul.mubr.bf16.gmra.mxu0 %v214
    %v373 = vpop.f32.mrf.mxu0
    %v374 = vadd.f32 0.0, %v373
    %v375 = vpop.f32.mrf.mxu0
    %v376 = vadd.f32 0.0, %v375
    %v377 = vpop.f32.mrf.mxu0
    %v378 = vpop.f32.mrf.mxu0
    %379 = vdwg.mxu0
    %v380 = vld [vmem:[%s1] sm:$0x3]
    %v381 = vld [vmem:[%s2] sm:$0xff]
    %v382 = vld [vmem:[%s3] sm:$0x1]
    %v384 = vlaneseq
    %v385 = vshrl.u32 %v384, 7
    %v386 = vsub.s32 0, %v385
    %v387 = vrot.slane %v382, %v386
    %vm389 = vcmask 64512
    %v391 = vsel %vm389, %v380, 0
    %393 = vmatprep.subr.mxu0 0.0
    %394 = vmatpush1.msra.mxu0 0.0
    %395 = vmatprep.subr.mxu0 0.0
    %396 = vmatpush1.msra.mxu0 0.0
    %397 = vmatprep.subr.mxu0 0.0
    %398 = vmatpush1.msra.mxu0 0.0
    %399 = vmatprep.subr.mxu0 0.0
    %400 = vmatpush1.msra.mxu0 0.0
    %401 = vmatprep.subr.mxu0 0.0
    %402 = vmatpush1.msra.mxu0 0.0
    %403 = vmatprep.subr.mxu0 0.0
    %404 = vmatpush1.msra.mxu0 0.0
    %405 = vmatprep.subr.mxu0 0.0
    %406 = vmatpush1.msra.mxu0 0.0
    %407 = vmatprep.subr.mxu0 0.0
    %408 = vmatpush1.msra.mxu0 0.0
    %409 = vmatprep.subr.mxu0 0.0
    %410 = vmatpush1.msra.mxu0 0.0
    %411 = vmatprep.subr.mxu0 0.0
    %412 = vmatpush1.msra.mxu0 0.0
    %413 = vmatprep.subr.mxu0 0.0
    %414 = vmatpush1.msra.mxu0 0.0
    %415 = vmatprep.subr.mxu0 0.0
    %416 = vmatpush1.msra.mxu0 0.0
    %417 = vmatprep.subr.mxu0 0.0
    %418 = vmatpush1.msra.mxu0 0.0
    %419 = vmatprep.subr.mxu0 0.0
    %420 = vmatpush1.msra.mxu0 0.0
    %421 = vmatprep.subr.mxu0 0.0
    %422 = vmatpush1.msra.mxu0 0.0
    %423 = vmatprep.subr.mxu0 0.0
    %424 = vmatpush1.msra.mxu0 %v381
    %425 = vmatprep.subr.mxu0 0.0
    %426 = vmatpush2.msra.mxu0 0.0
    %427 = vmatprep.subr.mxu0 0.0
    %428 = vmatpush2.msra.mxu0 0.0
    %429 = vmatprep.subr.mxu0 0.0
    %430 = vmatpush2.msra.mxu0 0.0
    %431 = vmatprep.subr.mxu0 0.0
    %432 = vmatpush2.msra.mxu0 0.0
    %433 = vmatprep.subr.mxu0 0.0
    %434 = vmatpush2.msra.mxu0 0.0
    %435 = vmatprep.subr.mxu0 0.0
    %436 = vmatpush2.msra.mxu0 0.0
    %437 = vmatprep.subr.mxu0 0.0
    %438 = vmatpush2.msra.mxu0 0.0
    %439 = vmatprep.subr.mxu0 0.0
    %440 = vmatpush2.msra.mxu0 0.0
    %441 = vmatprep.subr.mxu0 0.0
    %442 = vmatpush2.msra.mxu0 0.0
    %443 = vmatprep.subr.mxu0 0.0
    %444 = vmatpush2.msra.mxu0 0.0
    %445 = vmatprep.subr.mxu0 0.0
    %446 = vmatpush2.msra.mxu0 0.0
    %447 = vmatprep.subr.mxu0 0.0
    %448 = vmatpush2.msra.mxu0 0.0
    %449 = vmatprep.subr.mxu0 0.0
    %450 = vmatpush2.msra.mxu0 0.0
    %451 = vmatprep.subr.mxu0 0.0
    %452 = vmatpush2.msra.mxu0 0.0
    %453 = vmatprep.subr.mxu0 0.0
    %454 = vmatpush2.msra.mxu0 0.0
    %455 = vmatprep.subr.mxu0 0.0
    %456 = vmatpush2.msra.mxu0 0.0
    %457 = vmatprep.mubr.f32.mxu0 0.0
    %458 = vmatmul.mubr.f32.gmra.mxu0 %v391
    %v459 = vpop.f32.mrf.mxu0
    %v460 = vadd.f32 %v387, %v459
    %v461 = vpop.f32.mrf.mxu0
    %462 = vdwg.mxu0
    %v465 = vcombine.low %v251, %v253
    %v467 = vunpack.c.l.s4 1966171168
    %v468 = vunpack.c.0.s8 %v467
    %v469 = vlaneseq
    %v470 = vshrl.u32 %v469, 7
    %v471 = vsub.s32 %v468, %v470
    %v472 = vrot.slane %v465, %v471
    %v474 = vunpack.c.l.s4 1966171168
    %v475 = vunpack.c.0.s8 %v474
    %v476 = vlaneseq
    %v477 = vshrl.u32 %v476, 7
    %v478 = vsub.s32 %v475, %v477
    %v479 = vrot.slane %v472, %v478
    %v481 = vlaneseq
    %vm482 = vcmp.ge.s32.totalorder %v481, 0
    %vm483 = vcmp.lt.s32.totalorder %v481, 256
    %vm484 = vmand %vm482, %vm483
    %485 = vst.msk [vmem:[#allocation2] ss:$8 sm:$0x3] %vm484, %v479
    %486 = vst.msk [vmem:[#allocation2] ss:$8 sm:$0x0] %vm484, %v479
    %vm487 = vcmask 24576
    %488 = vst.msk [vmem:[#allocation2 + $0x10] sm:$0x1] %vm487, %v460
    %v491 = vcombine.low %v292, %v294
    %v493 = vunpack.c.l.s4 1966171168
    %v494 = vunpack.c.0.s8 %v493
    %v495 = vlaneseq
    %v496 = vshrl.u32 %v495, 7
    %v497 = vsub.s32 %v494, %v496
    %v498 = vrot.slane %v491, %v497
    %v500 = vunpack.c.l.s4 1966171168
    %v501 = vunpack.c.0.s8 %v500
    %v502 = vlaneseq
    %v503 = vshrl.u32 %v502, 7
    %v504 = vsub.s32 %v501, %v503
    %v505 = vrot.slane %v498, %v504
    %s507 = scalar_lea.vmem [#allocation2], 1
    %508 = vst.msk [vmem:[%s507] ss:$8 sm:$0x3] %vm484, %v505
    %509 = vst.msk [vmem:[%s507] ss:$8 sm:$0x0] %vm484, %v505
    %511 = vrot.lane.b32.xlu0 %v460, 124
    %v512 = vpop.permute.xlu0 %511
    %514 = vst.msk [vmem:[#allocation2 + $0x11] sm:$0x1] %vm487, %v512
    %v517 = vcombine.low %v333, %v335
    %v519 = vunpack.c.l.s4 1966171168
    %v520 = vunpack.c.0.s8 %v519
    %v521 = vlaneseq
    %v522 = vshrl.u32 %v521, 7
    %v523 = vsub.s32 %v520, %v522
    %v524 = vrot.slane %v517, %v523
    %v526 = vunpack.c.l.s4 1966171168
    %v527 = vunpack.c.0.s8 %v526
    %v528 = vlaneseq
    %v529 = vshrl.u32 %v528, 7
    %v530 = vsub.s32 %v527, %v529
    %v531 = vrot.slane %v524, %v530
    %s533 = scalar_lea.vmem [#allocation2], 2
    %534 = vst.msk [vmem:[%s533] ss:$8 sm:$0x3] %vm484, %v531
    %535 = vst.msk [vmem:[%s533] ss:$8 sm:$0x0] %vm484, %v531
    %536 = vrot.lane.b32.xlu0 %v460, 120
    %v537 = vpop.permute.xlu0 %536
    %539 = vst.msk [vmem:[#allocation2 + $0x12] sm:$0x1] %vm487, %v537
    %v542 = vcombine.low %v374, %v376
    %v544 = vunpack.c.l.s4 1966171168
    %v545 = vunpack.c.0.s8 %v544
    %v546 = vlaneseq
    %v547 = vshrl.u32 %v546, 7
    %v548 = vsub.s32 %v545, %v547
    %v549 = vrot.slane %v542, %v548
    %v551 = vunpack.c.l.s4 1966171168
    %v552 = vunpack.c.0.s8 %v551
    %v553 = vlaneseq
    %v554 = vshrl.u32 %v553, 7
    %v555 = vsub.s32 %v552, %v554
    %v556 = vrot.slane %v549, %v555
    %s558 = scalar_lea.vmem [#allocation2], 3
    %559 = vst.msk [vmem:[%s558] ss:$8 sm:$0x3] %vm484, %v556
    %560 = vst.msk [vmem:[%s558] ss:$8 sm:$0x0] %vm484, %v556
    %561 = vrot.lane.b32.xlu0 %v460, 116
    %v562 = vpop.permute.xlu0 %561
    %564 = vst.msk [vmem:[#allocation2 + $0x13] sm:$0x1] %vm487, %v562
    %v565 = vcombine.high %v472, %v472
    %v567 = vunpack.c.l.s4 1966171168
    %v568 = vunpack.c.0.s8 %v567
    %v569 = vlaneseq
    %v570 = vshrl.u32 %v569, 7
    %v571 = vsub.s32 %v568, %v570
    %v572 = vrot.slane %v565, %v571
    %s574 = scalar_lea.vmem [#allocation2], 4
    %575 = vst.msk [vmem:[%s574] ss:$8 sm:$0x3] %vm484, %v572
    %576 = vst.msk [vmem:[%s574] ss:$8 sm:$0x0] %vm484, %v572
    %v577 = vrot.slane %v460, 1
    %579 = vst.msk [vmem:[#allocation2 + $0x14] sm:$0x1] %vm487, %v577
    %v580 = vcombine.high %v498, %v498
    %v582 = vunpack.c.l.s4 1966171168
    %v583 = vunpack.c.0.s8 %v582
    %v584 = vlaneseq
    %v585 = vshrl.u32 %v584, 7
    %v586 = vsub.s32 %v583, %v585
    %v587 = vrot.slane %v580, %v586
    %s589 = scalar_lea.vmem [#allocation2], 5
    %590 = vst.msk [vmem:[%s589] ss:$8 sm:$0x3] %vm484, %v587
    %591 = vst.msk [vmem:[%s589] ss:$8 sm:$0x0] %vm484, %v587
    %592 = vrot.lane.b32.xlu0 %v577, 124
    %v593 = vpop.permute.xlu0 %592
    %595 = vst.msk [vmem:[#allocation2 + $0x15] sm:$0x1] %vm487, %v593
    %v596 = vcombine.high %v524, %v524
    %v598 = vunpack.c.l.s4 1966171168
    %v599 = vunpack.c.0.s8 %v598
    %v600 = vlaneseq
    %v601 = vshrl.u32 %v600, 7
    %v602 = vsub.s32 %v599, %v601
    %v603 = vrot.slane %v596, %v602
    %s605 = scalar_lea.vmem [#allocation2], 6
    %606 = vst.msk [vmem:[%s605] ss:$8 sm:$0x3] %vm484, %v603
    %607 = vst.msk [vmem:[%s605] ss:$8 sm:$0x0] %vm484, %v603
    %608 = vrot.lane.b32.xlu0 %v577, 120
    %v609 = vpop.permute.xlu0 %608
    %611 = vst.msk [vmem:[#allocation2 + $0x16] sm:$0x1] %vm487, %v609
    %v612 = vcombine.high %v549, %v549
    %v614 = vunpack.c.l.s4 1966171168
    %v615 = vunpack.c.0.s8 %v614
    %v616 = vlaneseq
    %v617 = vshrl.u32 %v616, 7
    %v618 = vsub.s32 %v615, %v617
    %v619 = vrot.slane %v612, %v618
    %s621 = scalar_lea.vmem [#allocation2], 7
    %622 = vst.msk [vmem:[%s621] ss:$8 sm:$0x3] %vm484, %v619
    %623 = vst.msk [vmem:[%s621] ss:$8 sm:$0x0] %vm484, %v619
    %624 = vrot.lane.b32.xlu0 %v577, 116
    %v625 = vpop.permute.xlu0 %624
    %627 = vst.msk [vmem:[#allocation2 + $0x17] sm:$0x1] %vm487, %v625
    %v628 = vld [vmem:[#allocation2] sm:$0xff]
    %v629 = vld [vmem:[#allocation2 + $0x8] sm:$0xff]
    %v630 = vld [vmem:[#allocation2 + $0x10] sm:$0xff]
    %v631 = vld [vmem:[%s5] sm:$0x1]
    %v632 = vld [vmem:[%s6] sm:$0x1]
    %v633 = vrot.slane %v628, 4
    %v634 = vadd.f32 %v628, %v633
    %v635 = vrot.slane %v634, 2
    %v636 = vadd.f32 %v634, %v635
    %v637 = vrot.slane %v636, 1
    %v638 = vadd.f32 %v636, %v637
    %v639 = vrot.slane %v629, 4
    %v640 = vadd.f32 %v629, %v639
    %v641 = vrot.slane %v640, 2
    %v642 = vadd.f32 %v640, %v641
    %v643 = vrot.slane %v642, 1
    %v644 = vadd.f32 %v642, %v643
    %v645 = vmul.f32 %v628, %v628
    %v646 = vmul.f32 %v629, %v629
    %v647 = vrot.slane %v645, 4
    %v648 = vadd.f32 %v645, %v647
    %v649 = vrot.slane %v648, 2
    %v650 = vadd.f32 %v648, %v649
    %v651 = vrot.slane %v650, 1
    %v652 = vadd.f32 %v650, %v651
    %v653 = vrot.slane %v646, 4
    %v654 = vadd.f32 %v646, %v653
    %v655 = vrot.slane %v654, 2
    %v656 = vadd.f32 %v654, %v655
    %v657 = vrot.slane %v656, 1
    %v658 = vadd.f32 %v656, %v657
    %v659 = vadd.f32 %v638, 0.0
    %v660 = vadd.f32 %v652, 0.0
    %662 = vrot.lane.b32.xlu0 %v638, 64
    %v663 = vpop.permute.xlu0 %662
    %v665 = vadd.f32 %v659, %v663
    %667 = vrot.lane.b32.xlu0 %v652, 64
    %v668 = vpop.permute.xlu0 %667
    %v670 = vadd.f32 %v660, %v668
    %v671 = vadd.f32 %v665, %v644
    %v672 = vadd.f32 %v670, %v658
    %674 = vrot.lane.b32.xlu0 %v644, 64
    %v675 = vpop.permute.xlu0 %674
    %v677 = vadd.f32 %v671, %v675
    %679 = vrot.lane.b32.xlu0 %v658, 64
    %v680 = vpop.permute.xlu0 %679
    %v682 = vadd.f32 %v672, %v680
    %v683 = vmul.f32 %v677, 0.03125
    %v684 = vmul.f32 %v682, 0.03125
    %v685 = vmul.f32 %v683, %v683
    %v686 = vsub.f32 %v684, %v685
    %v687 = vmax.f32 %v686, 0.0
    %v688 = vadd.f32 %v687, 1e-05
    %v689 = vrsqrt.pop %v688
    %v690 = vmul.f32 %v631, %v689
    %v691 = vmul.f32 %v683, %v690
    %v692 = vsub.f32 %v632, %v691
    %v694 = vlaneseq
    %v695 = vshrl.u32 %v694, 7
    %v696 = vsub.s32 0, %v695
    %v697 = vrot.slane %v690, %v696
    %698 = vrot.lane.b32.xlu0 %v697, 64
    %v699 = vpop.permute.xlu0 %698
    %vm701 = vcmask 523264
    %v702 = vsel %vm701, %v690, %v699
    %v704 = vlaneseq
    %v705 = vshrl.u32 %v704, 7
    %v706 = vsub.s32 0, %v705
    %v707 = vrot.slane %v692, %v706
    %708 = vrot.lane.b32.xlu0 %v707, 64
    %v709 = vpop.permute.xlu0 %708
    %v711 = vsel %vm701, %v692, %v709
    %v712 = vlaneseq
    %v713 = vshrl.u32 %v712, 7
    %v714 = vsub.s32 0, %v713
    %v715 = vrot.slane %v702, %v714
    %v716 = vmul.f32 %v628, %v715
    %v717 = vmul.f32 %v629, %v715
    %v718 = vlaneseq
    %v719 = vshrl.u32 %v718, 7
    %v720 = vsub.s32 0, %v719
    %v721 = vrot.slane %v711, %v720
    %v722 = vadd.f32 %v716, %v721
    %v723 = vadd.f32 %v717, %v721
    %v724 = vmax.f32 %v722, 0.0
    %v725 = vmax.f32 %v723, 0.0
    %v726 = vpack.c.bf16 %v724, %v724
    %v727 = vpack.c.bf16 %v725, %v725
    %v728 = vld [vmem:[#allocation6] sm:$0xff]
    %v729 = vld [vmem:[#allocation6 + $0x8] sm:$0xff]
    %v730 = vld [vmem:[#allocation6 + $0x10] sm:$0xff]
    %v731 = vld [vmem:[#allocation6 + $0x18] sm:$0xff]
    %v732 = vld [vmem:[#allocation6 + $0x20] sm:$0xff]
    %v733 = vld [vmem:[#allocation6 + $0x28] sm:$0xff]
    %v734 = vld [vmem:[#allocation6 + $0x30] sm:$0xff]
    %v735 = vld [vmem:[#allocation6 + $0x38] sm:$0xff]
    %v736 = vld [vmem:[#allocation6 + $0x40] sm:$0xff]
    %v737 = vld [vmem:[#allocation6 + $0x48] sm:$0xff]
    %v738 = vld [vmem:[#allocation6 + $0x50] sm:$0xff]
    %v739 = vld [vmem:[#allocation6 + $0x58] sm:$0xff]
    %v740 = vld [vmem:[#allocation6 + $0x60] sm:$0xff]
    %v741 = vld [vmem:[#allocation6 + $0x68] sm:$0xff]
    %v742 = vld [vmem:[#allocation6 + $0x70] sm:$0xff]
    %v743 = vld [vmem:[#allocation6 + $0x78] sm:$0xff]
    %v744 = vld [vmem:[#allocation6 + $0x80] sm:$0xff]
    %v745 = vld [vmem:[#allocation6 + $0x88] sm:$0xff]
    %v746 = vld [vmem:[#allocation6 + $0x90] sm:$0xff]
    %v747 = vld [vmem:[#allocation6 + $0x98] sm:$0xff]
    %v748 = vld [vmem:[#allocation6 + $0xa0] sm:$0xff]
    %v749 = vld [vmem:[#allocation6 + $0xa8] sm:$0xff]
    %v750 = vld [vmem:[#allocation6 + $0xb0] sm:$0xff]
    %v751 = vld [vmem:[#allocation6 + $0xb8] sm:$0xff]
    %v752 = vld [vmem:[#allocation6 + $0xc0] sm:$0xff]
    %v753 = vld [vmem:[#allocation6 + $0xc8] sm:$0xff]
    %v754 = vld [vmem:[#allocation6 + $0xd0] sm:$0xff]
    %v755 = vld [vmem:[#allocation6 + $0xd8] sm:$0xff]
    %v756 = vld [vmem:[#allocation6 + $0xe0] sm:$0xff]
    %v757 = vld [vmem:[#allocation6 + $0xe8] sm:$0xff]
    %v758 = vld [vmem:[#allocation6 + $0xf0] sm:$0xff]
    %v759 = vld [vmem:[#allocation6 + $0xf8] sm:$0xff]
    %v760 = vld [vmem:[#allocation6 + $0x100] sm:$0xff]
    %v761 = vld [vmem:[#allocation6 + $0x108] sm:$0xff]
    %v762 = vld [vmem:[#allocation6 + $0x110] sm:$0xff]
    %v763 = vld [vmem:[#allocation6 + $0x118] sm:$0xff]
    %v764 = vld [vmem:[#allocation6 + $0x120] sm:$0xff]
    %v765 = vld [vmem:[#allocation6 + $0x128] sm:$0xff]
    %v766 = vld [vmem:[#allocation6 + $0x130] sm:$0xff]
    %v767 = vld [vmem:[#allocation6 + $0x138] sm:$0xff]
    %v768 = vld [vmem:[#allocation6 + $0x140] sm:$0xff]
    %v769 = vld [vmem:[#allocation6 + $0x148] sm:$0xff]
    %v770 = vld [vmem:[#allocation6 + $0x150] sm:$0xff]
    %v771 = vld [vmem:[#allocation6 + $0x158] sm:$0xff]
    %v772 = vld [vmem:[#allocation6 + $0x160] sm:$0xff]
    %v773 = vld [vmem:[#allocation6 + $0x168] sm:$0xff]
    %v774 = vld [vmem:[#allocation6 + $0x170] sm:$0xff]
    %v775 = vld [vmem:[#allocation6 + $0x178] sm:$0xff]
    %v776 = vld [vmem:[#allocation6 + $0x180] sm:$0xff]
    %v777 = vld [vmem:[#allocation6 + $0x188] sm:$0xff]
    %v778 = vld [vmem:[#allocation6 + $0x190] sm:$0xff]
    %v779 = vld [vmem:[#allocation6 + $0x198] sm:$0xff]
    %v780 = vld [vmem:[#allocation6 + $0x1a0] sm:$0xff]
    %v781 = vld [vmem:[#allocation6 + $0x1a8] sm:$0xff]
    %v782 = vld [vmem:[#allocation6 + $0x1b0] sm:$0xff]
    %v783 = vld [vmem:[#allocation6 + $0x1b8] sm:$0xff]
    %v784 = vld [vmem:[#allocation6 + $0x1c0] sm:$0xff]
    %v785 = vld [vmem:[#allocation6 + $0x1c8] sm:$0xff]
    %v786 = vld [vmem:[#allocation6 + $0x1d0] sm:$0xff]
    %v787 = vld [vmem:[#allocation6 + $0x1d8] sm:$0xff]
    %v788 = vld [vmem:[#allocation6 + $0x1e0] sm:$0xff]
    %v789 = vld [vmem:[#allocation6 + $0x1e8] sm:$0xff]
    %v790 = vld [vmem:[#allocation6 + $0x1f0] sm:$0xff]
    %v791 = vld [vmem:[#allocation6 + $0x1f8] sm:$0xff]
    %v792 = vld [vmem:[#allocation6 + $0x200] sm:$0xff]
    %v793 = vld [vmem:[#allocation6 + $0x208] sm:$0xff]
    %v794 = vld [vmem:[#allocation6 + $0x210] sm:$0xff]
    %v795 = vld [vmem:[#allocation6 + $0x218] sm:$0xff]
    %v796 = vld [vmem:[#allocation6 + $0x220] sm:$0xff]
    %v797 = vld [vmem:[#allocation6 + $0x228] sm:$0xff]
    %v798 = vld [vmem:[#allocation6 + $0x230] sm:$0xff]
    %v799 = vld [vmem:[#allocation6 + $0x238] sm:$0xff]
    %v800 = vld [vmem:[#allocation6 + $0x240] sm:$0xff]
    %v801 = vld [vmem:[#allocation6 + $0x248] sm:$0xff]
    %v802 = vld [vmem:[#allocation6 + $0x250] sm:$0xff]
    %v803 = vld [vmem:[#allocation6 + $0x258] sm:$0xff]
    %v804 = vld [vmem:[#allocation6 + $0x260] sm:$0xff]
    %v805 = vld [vmem:[#allocation6 + $0x268] sm:$0xff]
    %v806 = vld [vmem:[#allocation6 + $0x270] sm:$0xff]
    %v807 = vld [vmem:[#allocation6 + $0x278] sm:$0xff]
    %v808 = vld [vmem:[#allocation6 + $0x280] sm:$0xff]
    %v809 = vld [vmem:[#allocation6 + $0x288] sm:$0xff]
    %v810 = vld [vmem:[#allocation6 + $0x290] sm:$0xff]
    %v811 = vld [vmem:[#allocation6 + $0x298] sm:$0xff]
    %v812 = vld [vmem:[#allocation6 + $0x2a0] sm:$0xff]
    %v813 = vld [vmem:[#allocation6 + $0x2a8] sm:$0xff]
    %v814 = vld [vmem:[#allocation6 + $0x2b0] sm:$0xff]
    %v815 = vld [vmem:[#allocation6 + $0x2b8] sm:$0xff]
    %v816 = vld [vmem:[#allocation6 + $0x2c0] sm:$0xff]
    %v817 = vld [vmem:[#allocation6 + $0x2c8] sm:$0xff]
    %v818 = vld [vmem:[#allocation6 + $0x2d0] sm:$0xff]
    %v819 = vld [vmem:[#allocation6 + $0x2d8] sm:$0xff]
    %v820 = vld [vmem:[#allocation6 + $0x2e0] sm:$0xff]
    %v821 = vld [vmem:[#allocation6 + $0x2e8] sm:$0xff]
    %v822 = vld [vmem:[#allocation6 + $0x2f0] sm:$0xff]
    %v823 = vld [vmem:[#allocation6 + $0x2f8] sm:$0xff]
    %v824 = vld [vmem:[#allocation6 + $0x300] sm:$0xff]
    %v825 = vld [vmem:[#allocation6 + $0x308] sm:$0xff]
    %v826 = vld [vmem:[#allocation6 + $0x310] sm:$0xff]
    %v827 = vld [vmem:[#allocation6 + $0x318] sm:$0xff]
    %v828 = vld [vmem:[#allocation6 + $0x320] sm:$0xff]
    %v829 = vld [vmem:[#allocation6 + $0x328] sm:$0xff]
    %v830 = vld [vmem:[#allocation6 + $0x330] sm:$0xff]
    %v831 = vld [vmem:[#allocation6 + $0x338] sm:$0xff]
    %v832 = vld [vmem:[#allocation6 + $0x340] sm:$0xff]
    %v833 = vld [vmem:[#allocation6 + $0x348] sm:$0xff]
    %v834 = vld [vmem:[#allocation6 + $0x350] sm:$0xff]
    %v835 = vld [vmem:[#allocation6 + $0x358] sm:$0xff]
    %v836 = vld [vmem:[#allocation6 + $0x360] sm:$0xff]
    %v837 = vld [vmem:[#allocation6 + $0x368] sm:$0xff]
    %v838 = vld [vmem:[#allocation6 + $0x370] sm:$0xff]
    %v839 = vld [vmem:[#allocation6 + $0x378] sm:$0xff]
    %v840 = vld [vmem:[#allocation6 + $0x380] sm:$0xff]
    %v841 = vld [vmem:[#allocation6 + $0x388] sm:$0xff]
    %v842 = vld [vmem:[#allocation6 + $0x390] sm:$0xff]
    %v843 = vld [vmem:[#allocation6 + $0x398] sm:$0xff]
    %v844 = vld [vmem:[#allocation6 + $0x3a0] sm:$0xff]
    %v845 = vld [vmem:[#allocation6 + $0x3a8] sm:$0xff]
    %v846 = vld [vmem:[#allocation6 + $0x3b0] sm:$0xff]
    %v847 = vld [vmem:[#allocation6 + $0x3b8] sm:$0xff]
    %v848 = vld [vmem:[#allocation6 + $0x3c0] sm:$0xff]
    %v849 = vld [vmem:[#allocation6 + $0x3c8] sm:$0xff]
    %v850 = vld [vmem:[#allocation6 + $0x3d0] sm:$0xff]
    %v851 = vld [vmem:[#allocation6 + $0x3d8] sm:$0xff]
    %v852 = vld [vmem:[#allocation6 + $0x3e0] sm:$0xff]
    %v853 = vld [vmem:[#allocation6 + $0x3e8] sm:$0xff]
    %v854 = vld [vmem:[#allocation6 + $0x3f0] sm:$0xff]
    %v855 = vld [vmem:[#allocation6 + $0x3f8] sm:$0xff]
    %v856 = vld [vmem:[#allocation8] sm:$0xff]
    %v857 = vld [vmem:[#allocation8 + $0x8] sm:$0xff]
    %v858 = vld [vmem:[#allocation8 + $0x10] sm:$0xff]
    %v859 = vld [vmem:[#allocation8 + $0x18] sm:$0xff]
    %v864 = vcombine.high %v856, %v856
    %v865 = vcombine.high %v857, %v857
    %v866 = vcombine.high %v858, %v858
    %v867 = vcombine.high %v859, %v859
    %vm868 = vcmask 31744
    %v870 = vsel %vm868, %v630, 0
    %vm872 = vcmask 1043456
    %v873 = vsel %vm872, %v856, 0
    %v875 = vsel %vm872, %v864, 0
    %v877 = vsel %vm872, %v857, 0
    %v879 = vsel %vm872, %v865, 0
    %v881 = vsel %vm872, %v858, 0
    %v883 = vsel %vm872, %v866, 0
    %v885 = vsel %vm872, %v859, 0
    %v887 = vsel %vm872, %v867, 0
    %889 = vmatprep.subr.mxu0 0.0
    %890 = vmatpush1.msra.mxu0 0.0
    %891 = vmatprep.subr.mxu0 0.0
    %892 = vmatpush1.msra.mxu0 0.0
    %893 = vmatprep.subr.mxu0 0.0
    %894 = vmatpush1.msra.mxu0 0.0
    %895 = vmatprep.subr.mxu0 0.0
    %896 = vmatpush1.msra.mxu0 0.0
    %897 = vmatprep.subr.mxu0 0.0
    %898 = vmatpush1.msra.mxu0 0.0
    %899 = vmatprep.subr.mxu0 0.0
    %900 = vmatpush1.msra.mxu0 0.0
    %901 = vmatprep.subr.mxu0 0.0
    %902 = vmatpush1.msra.mxu0 0.0
    %903 = vmatprep.subr.mxu0 0.0
    %904 = vmatpush1.msra.mxu0 0.0
    %905 = vmatprep.subr.mxu0 0.0
    %906 = vmatpush1.msra.mxu0 0.0
    %907 = vmatprep.subr.mxu0 0.0
    %908 = vmatpush1.msra.mxu0 0.0
    %909 = vmatprep.subr.mxu0 0.0
    %910 = vmatpush1.msra.mxu0 0.0
    %911 = vmatprep.subr.mxu0 0.0
    %912 = vmatpush1.msra.mxu0 0.0
    %913 = vmatprep.subr.mxu0 0.0
    %914 = vmatpush1.msra.mxu0 0.0
    %915 = vmatprep.subr.mxu0 0.0
    %916 = vmatpush1.msra.mxu0 0.0
    %917 = vmatprep.subr.mxu0 0.0
    %918 = vmatpush1.msra.mxu0 0.0
    %919 = vmatprep.subr.mxu0 %v875
    %920 = vmatpush1.msra.mxu0 %v873
    %921 = vmatprep.subr.mxu0 0.0
    %922 = vmatpush2.msra.mxu0 0.0
    %923 = vmatprep.subr.mxu0 0.0
    %924 = vmatpush2.msra.mxu0 0.0
    %925 = vmatprep.subr.mxu0 0.0
    %926 = vmatpush2.msra.mxu0 0.0
    %927 = vmatprep.subr.mxu0 0.0
    %928 = vmatpush2.msra.mxu0 0.0
    %929 = vmatprep.subr.mxu0 0.0
    %930 = vmatpush2.msra.mxu0 0.0
    %931 = vmatprep.subr.mxu0 0.0
    %932 = vmatpush2.msra.mxu0 0.0
    %933 = vmatprep.subr.mxu0 0.0
    %934 = vmatpush2.msra.mxu0 0.0
    %935 = vmatprep.subr.mxu0 0.0
    %936 = vmatpush2.msra.mxu0 0.0
    %937 = vmatprep.subr.mxu0 0.0
    %938 = vmatpush2.msra.mxu0 0.0
    %939 = vmatprep.subr.mxu0 0.0
    %940 = vmatpush2.msra.mxu0 0.0
    %941 = vmatprep.subr.mxu0 0.0
    %942 = vmatpush2.msra.mxu0 0.0
    %943 = vmatprep.subr.mxu0 0.0
    %944 = vmatpush2.msra.mxu0 0.0
    %945 = vmatprep.subr.mxu0 0.0
    %946 = vmatpush2.msra.mxu0 0.0
    %947 = vmatprep.subr.mxu0 0.0
    %948 = vmatpush2.msra.mxu0 0.0
    %949 = vmatprep.subr.mxu0 0.0
    %950 = vmatpush2.msra.mxu0 0.0
    %951 = vmatprep.subr.mxu0 0.0
    %952 = vmatpush2.msra.mxu0 0.0
    %953 = vmatprep.mubr.f32.mxu0 0.0
    %954 = vmatmul.mubr.f32.gmra.mxu0 %v870
    %v955 = vpop.f32.mrf.mxu0
    %v956 = vadd.f32 0.0, %v955
    %v957 = vpop.f32.mrf.mxu0
    %v958 = vadd.f32 0.0, %v957
    %959 = vdwg.mxu0
    %960 = vmatprep.subr.mxu0 0.0
    %961 = vmatpush1.msra.mxu0 0.0
    %962 = vmatprep.subr.mxu0 0.0
    %963 = vmatpush1.msra.mxu0 0.0
    %964 = vmatprep.subr.mxu0 0.0
    %965 = vmatpush1.msra.mxu0 0.0
    %966 = vmatprep.subr.mxu0 0.0
    %967 = vmatpush1.msra.mxu0 0.0
    %968 = vmatprep.subr.mxu0 0.0
    %969 = vmatpush1.msra.mxu0 0.0
    %970 = vmatprep.subr.mxu0 0.0
    %971 = vmatpush1.msra.mxu0 0.0
    %972 = vmatprep.subr.mxu0 0.0
    %973 = vmatpush1.msra.mxu0 0.0
    %974 = vmatprep.subr.mxu0 0.0
    %975 = vmatpush1.msra.mxu0 0.0
    %976 = vmatprep.subr.mxu0 0.0
    %977 = vmatpush1.msra.mxu0 0.0
    %978 = vmatprep.subr.mxu0 0.0
    %979 = vmatpush1.msra.mxu0 0.0
    %980 = vmatprep.subr.mxu0 0.0
    %981 = vmatpush1.msra.mxu0 0.0
    %982 = vmatprep.subr.mxu0 0.0
    %983 = vmatpush1.msra.mxu0 0.0
    %984 = vmatprep.subr.mxu0 0.0
    %985 = vmatpush1.msra.mxu0 0.0
    %986 = vmatprep.subr.mxu0 0.0
    %987 = vmatpush1.msra.mxu0 0.0
    %988 = vmatprep.subr.mxu0 0.0
    %989 = vmatpush1.msra.mxu0 0.0
    %990 = vmatprep.subr.mxu0 %v879
    %991 = vmatpush1.msra.mxu0 %v877
    %992 = vmatprep.subr.mxu0 0.0
    %993 = vmatpush2.msra.mxu0 0.0
    %994 = vmatprep.subr.mxu0 0.0
    %995 = vmatpush2.msra.mxu0 0.0
    %996 = vmatprep.subr.mxu0 0.0
    %997 = vmatpush2.msra.mxu0 0.0
    %998 = vmatprep.subr.mxu0 0.0
    %999 = vmatpush2.msra.mxu0 0.0
    %1000 = vmatprep.subr.mxu0 0.0
    %1001 = vmatpush2.msra.mxu0 0.0
    %1002 = vmatprep.subr.mxu0 0.0
    %1003 = vmatpush2.msra.mxu0 0.0
    %1004 = vmatprep.subr.mxu0 0.0
    %1005 = vmatpush2.msra.mxu0 0.0
    %1006 = vmatprep.subr.mxu0 0.0
    %1007 = vmatpush2.msra.mxu0 0.0
    %1008 = vmatprep.subr.mxu0 0.0
    %1009 = vmatpush2.msra.mxu0 0.0
    %1010 = vmatprep.subr.mxu0 0.0
    %1011 = vmatpush2.msra.mxu0 0.0
    %1012 = vmatprep.subr.mxu0 0.0
    %1013 = vmatpush2.msra.mxu0 0.0
    %1014 = vmatprep.subr.mxu0 0.0
    %1015 = vmatpush2.msra.mxu0 0.0
    %1016 = vmatprep.subr.mxu0 0.0
    %1017 = vmatpush2.msra.mxu0 0.0
    %1018 = vmatprep.subr.mxu0 0.0
    %1019 = vmatpush2.msra.mxu0 0.0
    %1020 = vmatprep.subr.mxu0 0.0
    %1021 = vmatpush2.msra.mxu0 0.0
    %1022 = vmatprep.subr.mxu0 0.0
    %1023 = vmatpush2.msra.mxu0 0.0
    %1024 = vmatprep.mubr.f32.mxu0 0.0
    %1025 = vmatmul.mubr.f32.gmra.mxu0 %v870
    %v1026 = vpop.f32.mrf.mxu0
    %v1027 = vadd.f32 0.0, %v1026
    %v1028 = vpop.f32.mrf.mxu0
    %v1029 = vadd.f32 0.0, %v1028
    %1030 = vdwg.mxu0
    %1031 = vmatprep.subr.mxu0 0.0
    %1032 = vmatpush1.msra.mxu0 0.0
    %1033 = vmatprep.subr.mxu0 0.0
    %1034 = vmatpush1.msra.mxu0 0.0
    %1035 = vmatprep.subr.mxu0 0.0
    %1036 = vmatpush1.msra.mxu0 0.0
    %1037 = vmatprep.subr.mxu0 0.0
    %1038 = vmatpush1.msra.mxu0 0.0
    %1039 = vmatprep.subr.mxu0 0.0
    %1040 = vmatpush1.msra.mxu0 0.0
    %1041 = vmatprep.subr.mxu0 0.0
    %1042 = vmatpush1.msra.mxu0 0.0
    %1043 = vmatprep.subr.mxu0 0.0
    %1044 = vmatpush1.msra.mxu0 0.0
    %1045 = vmatprep.subr.mxu0 0.0
    %1046 = vmatpush1.msra.mxu0 0.0
    %1047 = vmatprep.subr.mxu0 0.0
    %1048 = vmatpush1.msra.mxu0 0.0
    %1049 = vmatprep.subr.mxu0 0.0
    %1050 = vmatpush1.msra.mxu0 0.0
    %1051 = vmatprep.subr.mxu0 0.0
    %1052 = vmatpush1.msra.mxu0 0.0
    %1053 = vmatprep.subr.mxu0 0.0
    %1054 = vmatpush1.msra.mxu0 0.0
    %1055 = vmatprep.subr.mxu0 0.0
    %1056 = vmatpush1.msra.mxu0 0.0
    %1057 = vmatprep.subr.mxu0 0.0
    %1058 = vmatpush1.msra.mxu0 0.0
    %1059 = vmatprep.subr.mxu0 0.0
    %1060 = vmatpush1.msra.mxu0 0.0
    %1061 = vmatprep.subr.mxu0 %v883
    %1062 = vmatpush1.msra.mxu0 %v881
    %1063 = vmatprep.subr.mxu0 0.0
    %1064 = vmatpush2.msra.mxu0 0.0
    %1065 = vmatprep.subr.mxu0 0.0
    %1066 = vmatpush2.msra.mxu0 0.0
    %1067 = vmatprep.subr.mxu0 0.0
    %1068 = vmatpush2.msra.mxu0 0.0
    %1069 = vmatprep.subr.mxu0 0.0
    %1070 = vmatpush2.msra.mxu0 0.0
    %1071 = vmatprep.subr.mxu0 0.0
    %1072 = vmatpush2.msra.mxu0 0.0
    %1073 = vmatprep.subr.mxu0 0.0
    %1074 = vmatpush2.msra.mxu0 0.0
    %1075 = vmatprep.subr.mxu0 0.0
    %1076 = vmatpush2.msra.mxu0 0.0
    %1077 = vmatprep.subr.mxu0 0.0
    %1078 = vmatpush2.msra.mxu0 0.0
    %1079 = vmatprep.subr.mxu0 0.0
    %1080 = vmatpush2.msra.mxu0 0.0
    %1081 = vmatprep.subr.mxu0 0.0
    %1082 = vmatpush2.msra.mxu0 0.0
    %1083 = vmatprep.subr.mxu0 0.0
    %1084 = vmatpush2.msra.mxu0 0.0
    %1085 = vmatprep.subr.mxu0 0.0
    %1086 = vmatpush2.msra.mxu0 0.0
    %1087 = vmatprep.subr.mxu0 0.0
    %1088 = vmatpush2.msra.mxu0 0.0
    %1089 = vmatprep.subr.mxu0 0.0
    %1090 = vmatpush2.msra.mxu0 0.0
    %1091 = vmatprep.subr.mxu0 0.0
    %1092 = vmatpush2.msra.mxu0 0.0
    %1093 = vmatprep.subr.mxu0 0.0
    %1094 = vmatpush2.msra.mxu0 0.0
    %1095 = vmatprep.mubr.f32.mxu0 0.0
    %1096 = vmatmul.mubr.f32.gmra.mxu0 %v870
    %v1097 = vpop.f32.mrf.mxu0
    %v1098 = vadd.f32 0.0, %v1097
    %v1099 = vpop.f32.mrf.mxu0
    %v1100 = vadd.f32 0.0, %v1099
    %1101 = vdwg.mxu0
    %1102 = vmatprep.subr.mxu0 0.0
    %1103 = vmatpush1.msra.mxu0 0.0
    %1104 = vmatprep.subr.mxu0 0.0
    %1105 = vmatpush1.msra.mxu0 0.0
    %1106 = vmatprep.subr.mxu0 0.0
    %1107 = vmatpush1.msra.mxu0 0.0
    %1108 = vmatprep.subr.mxu0 0.0
    %1109 = vmatpush1.msra.mxu0 0.0
    %1110 = vmatprep.subr.mxu0 0.0
    %1111 = vmatpush1.msra.mxu0 0.0
    %1112 = vmatprep.subr.mxu0 0.0
    %1113 = vmatpush1.msra.mxu0 0.0
    %1114 = vmatprep.subr.mxu0 0.0
    %1115 = vmatpush1.msra.mxu0 0.0
    %1116 = vmatprep.subr.mxu0 0.0
    %1117 = vmatpush1.msra.mxu0 0.0
    %1118 = vmatprep.subr.mxu0 0.0
    %1119 = vmatpush1.msra.mxu0 0.0
    %1120 = vmatprep.subr.mxu0 0.0
    %1121 = vmatpush1.msra.mxu0 0.0
    %1122 = vmatprep.subr.mxu0 0.0
    %1123 = vmatpush1.msra.mxu0 0.0
    %1124 = vmatprep.subr.mxu0 0.0
    %1125 = vmatpush1.msra.mxu0 0.0
    %1126 = vmatprep.subr.mxu0 0.0
    %1127 = vmatpush1.msra.mxu0 0.0
    %1128 = vmatprep.subr.mxu0 0.0
    %1129 = vmatpush1.msra.mxu0 0.0
    %1130 = vmatprep.subr.mxu0 0.0
    %1131 = vmatpush1.msra.mxu0 0.0
    %1132 = vmatprep.subr.mxu0 %v887
    %1133 = vmatpush1.msra.mxu0 %v885
    %1134 = vmatprep.subr.mxu0 0.0
    %1135 = vmatpush2.msra.mxu0 0.0
    %1136 = vmatprep.subr.mxu0 0.0
    %1137 = vmatpush2.msra.mxu0 0.0
    %1138 = vmatprep.subr.mxu0 0.0
    %1139 = vmatpush2.msra.mxu0 0.0
    %1140 = vmatprep.subr.mxu0 0.0
    %1141 = vmatpush2.msra.mxu0 0.0
    %1142 = vmatprep.subr.mxu0 0.0
    %1143 = vmatpush2.msra.mxu0 0.0
    %1144 = vmatprep.subr.mxu0 0.0
    %1145 = vmatpush2.msra.mxu0 0.0
    %1146 = vmatprep.subr.mxu0 0.0
    %1147 = vmatpush2.msra.mxu0 0.0
    %1148 = vmatprep.subr.mxu0 0.0
    %1149 = vmatpush2.msra.mxu0 0.0
    %1150 = vmatprep.subr.mxu0 0.0
    %1151 = vmatpush2.msra.mxu0 0.0
    %1152 = vmatprep.subr.mxu0 0.0
    %1153 = vmatpush2.msra.mxu0 0.0
    %1154 = vmatprep.subr.mxu0 0.0
    %1155 = vmatpush2.msra.mxu0 0.0
    %1156 = vmatprep.subr.mxu0 0.0
    %1157 = vmatpush2.msra.mxu0 0.0
    %1158 = vmatprep.subr.mxu0 0.0
    %1159 = vmatpush2.msra.mxu0 0.0
    %1160 = vmatprep.subr.mxu0 0.0
    %1161 = vmatpush2.msra.mxu0 0.0
    %1162 = vmatprep.subr.mxu0 0.0
    %1163 = vmatpush2.msra.mxu0 0.0
    %1164 = vmatprep.subr.mxu0 0.0
    %1165 = vmatpush2.msra.mxu0 0.0
    %1166 = vmatprep.mubr.f32.mxu0 0.0
    %1167 = vmatmul.mubr.f32.gmra.mxu0 %v870
    %v1168 = vpop.f32.mrf.mxu0
    %v1169 = vadd.f32 0.0, %v1168
    %v1170 = vpop.f32.mrf.mxu0
    %v1171 = vadd.f32 0.0, %v1170
    %1172 = vdwg.mxu0
    %v1301 = vunpack.c.l.b16 %v728
    %v1302 = vunpack.c.h.b16 %v728
    %v1303 = vunpack.c.l.b16 %v729
    %v1304 = vunpack.c.h.b16 %v729
    %v1305 = vunpack.c.l.b16 %v730
    %v1306 = vunpack.c.h.b16 %v730
    %v1307 = vunpack.c.l.b16 %v731
    %v1308 = vunpack.c.h.b16 %v731
    %v1309 = vunpack.c.l.b16 %v732
    %v1310 = vunpack.c.h.b16 %v732
    %v1311 = vunpack.c.l.b16 %v733
    %v1312 = vunpack.c.h.b16 %v733
    %v1313 = vunpack.c.l.b16 %v734
    %v1314 = vunpack.c.h.b16 %v734
    %v1315 = vunpack.c.l.b16 %v735
    %v1316 = vunpack.c.h.b16 %v735
    %v1317 = vunpack.c.l.b16 %v736
    %v1318 = vunpack.c.h.b16 %v736
    %v1319 = vunpack.c.l.b16 %v737
    %v1320 = vunpack.c.h.b16 %v737
    %v1321 = vunpack.c.l.b16 %v738
    %v1322 = vunpack.c.h.b16 %v738
    %v1323 = vunpack.c.l.b16 %v739
    %v1324 = vunpack.c.h.b16 %v739
    %v1325 = vunpack.c.l.b16 %v740
    %v1326 = vunpack.c.h.b16 %v740
    %v1327 = vunpack.c.l.b16 %v741
    %v1328 = vunpack.c.h.b16 %v741
    %v1329 = vunpack.c.l.b16 %v742
    %v1330 = vunpack.c.h.b16 %v742
    %v1331 = vunpack.c.l.b16 %v743
    %v1332 = vunpack.c.h.b16 %v743
    %v1333 = vunpack.c.l.b16 %v744
    %v1334 = vunpack.c.h.b16 %v744
    %v1335 = vunpack.c.l.b16 %v745
    %v1336 = vunpack.c.h.b16 %v745
    %v1337 = vunpack.c.l.b16 %v746
    %v1338 = vunpack.c.h.b16 %v746
    %v1339 = vunpack.c.l.b16 %v747
    %v1340 = vunpack.c.h.b16 %v747
    %v1341 = vunpack.c.l.b16 %v748
    %v1342 = vunpack.c.h.b16 %v748
    %v1343 = vunpack.c.l.b16 %v749
    %v1344 = vunpack.c.h.b16 %v749
    %v1345 = vunpack.c.l.b16 %v750
    %v1346 = vunpack.c.h.b16 %v750
    %v1347 = vunpack.c.l.b16 %v751
    %v1348 = vunpack.c.h.b16 %v751
    %v1349 = vunpack.c.l.b16 %v752
    %v1350 = vunpack.c.h.b16 %v752
    %v1351 = vunpack.c.l.b16 %v753
    %v1352 = vunpack.c.h.b16 %v753
    %v1353 = vunpack.c.l.b16 %v754
    %v1354 = vunpack.c.h.b16 %v754
    %v1355 = vunpack.c.l.b16 %v755
    %v1356 = vunpack.c.h.b16 %v755
    %v1357 = vunpack.c.l.b16 %v756
    %v1358 = vunpack.c.h.b16 %v756
    %v1359 = vunpack.c.l.b16 %v757
    %v1360 = vunpack.c.h.b16 %v757
    %v1361 = vunpack.c.l.b16 %v758
    %v1362 = vunpack.c.h.b16 %v758
    %v1363 = vunpack.c.l.b16 %v759
    %v1364 = vunpack.c.h.b16 %v759
    %v1365 = vunpack.c.l.b16 %v760
    %v1366 = vunpack.c.h.b16 %v760
    %v1367 = vunpack.c.l.b16 %v761
    %v1368 = vunpack.c.h.b16 %v761
    %v1369 = vunpack.c.l.b16 %v762
    %v1370 = vunpack.c.h.b16 %v762
    %v1371 = vunpack.c.l.b16 %v763
    %v1372 = vunpack.c.h.b16 %v763
    %v1373 = vunpack.c.l.b16 %v764
    %v1374 = vunpack.c.h.b16 %v764
    %v1375 = vunpack.c.l.b16 %v765
    %v1376 = vunpack.c.h.b16 %v765
    %v1377 = vunpack.c.l.b16 %v766
    %v1378 = vunpack.c.h.b16 %v766
    %v1379 = vunpack.c.l.b16 %v767
    %v1380 = vunpack.c.h.b16 %v767
    %v1381 = vunpack.c.l.b16 %v768
    %v1382 = vunpack.c.h.b16 %v768
    %v1383 = vunpack.c.l.b16 %v769
    %v1384 = vunpack.c.h.b16 %v769
    %v1385 = vunpack.c.l.b16 %v770
    %v1386 = vunpack.c.h.b16 %v770
    %v1387 = vunpack.c.l.b16 %v771
    %v1388 = vunpack.c.h.b16 %v771
    %v1389 = vunpack.c.l.b16 %v772
    %v1390 = vunpack.c.h.b16 %v772
    %v1391 = vunpack.c.l.b16 %v773
    %v1392 = vunpack.c.h.b16 %v773
    %v1393 = vunpack.c.l.b16 %v774
    %v1394 = vunpack.c.h.b16 %v774
    %v1395 = vunpack.c.l.b16 %v775
    %v1396 = vunpack.c.h.b16 %v775
    %v1397 = vunpack.c.l.b16 %v776
    %v1398 = vunpack.c.h.b16 %v776
    %v1399 = vunpack.c.l.b16 %v777
    %v1400 = vunpack.c.h.b16 %v777
    %v1401 = vunpack.c.l.b16 %v778
    %v1402 = vunpack.c.h.b16 %v778
    %v1403 = vunpack.c.l.b16 %v779
    %v1404 = vunpack.c.h.b16 %v779
    %v1405 = vunpack.c.l.b16 %v780
    %v1406 = vunpack.c.h.b16 %v780
    %v1407 = vunpack.c.l.b16 %v781
    %v1408 = vunpack.c.h.b16 %v781
    %v1409 = vunpack.c.l.b16 %v782
    %v1410 = vunpack.c.h.b16 %v782
    %v1411 = vunpack.c.l.b16 %v783
    %v1412 = vunpack.c.h.b16 %v783
    %v1413 = vunpack.c.l.b16 %v784
    %v1414 = vunpack.c.h.b16 %v784
    %v1415 = vunpack.c.l.b16 %v785
    %v1416 = vunpack.c.h.b16 %v785
    %v1417 = vunpack.c.l.b16 %v786
    %v1418 = vunpack.c.h.b16 %v786
    %v1419 = vunpack.c.l.b16 %v787
    %v1420 = vunpack.c.h.b16 %v787
    %v1421 = vunpack.c.l.b16 %v788
    %v1422 = vunpack.c.h.b16 %v788
    %v1423 = vunpack.c.l.b16 %v789
    %v1424 = vunpack.c.h.b16 %v789
    %v1425 = vunpack.c.l.b16 %v790
    %v1426 = vunpack.c.h.b16 %v790
    %v1427 = vunpack.c.l.b16 %v791
    %v1428 = vunpack.c.h.b16 %v791
    %v1429 = vunpack.c.l.b16 %v792
    %v1430 = vunpack.c.h.b16 %v792
    %v1431 = vunpack.c.l.b16 %v793
    %v1432 = vunpack.c.h.b16 %v793
    %v1433 = vunpack.c.l.b16 %v794
    %v1434 = vunpack.c.h.b16 %v794
    %v1435 = vunpack.c.l.b16 %v795
    %v1436 = vunpack.c.h.b16 %v795
    %v1437 = vunpack.c.l.b16 %v796
    %v1438 = vunpack.c.h.b16 %v796
    %v1439 = vunpack.c.l.b16 %v797
    %v1440 = vunpack.c.h.b16 %v797
    %v1441 = vunpack.c.l.b16 %v798
    %v1442 = vunpack.c.h.b16 %v798
    %v1443 = vunpack.c.l.b16 %v799
    %v1444 = vunpack.c.h.b16 %v799
    %v1445 = vunpack.c.l.b16 %v800
    %v1446 = vunpack.c.h.b16 %v800
    %v1447 = vunpack.c.l.b16 %v801
    %v1448 = vunpack.c.h.b16 %v801
    %v1449 = vunpack.c.l.b16 %v802
    %v1450 = vunpack.c.h.b16 %v802
    %v1451 = vunpack.c.l.b16 %v803
    %v1452 = vunpack.c.h.b16 %v803
    %v1453 = vunpack.c.l.b16 %v804
    %v1454 = vunpack.c.h.b16 %v804
    %v1455 = vunpack.c.l.b16 %v805
    %v1456 = vunpack.c.h.b16 %v805
    %v1457 = vunpack.c.l.b16 %v806
    %v1458 = vunpack.c.h.b16 %v806
    %v1459 = vunpack.c.l.b16 %v807
    %v1460 = vunpack.c.h.b16 %v807
    %v1461 = vunpack.c.l.b16 %v808
    %v1462 = vunpack.c.h.b16 %v808
    %v1463 = vunpack.c.l.b16 %v809
    %v1464 = vunpack.c.h.b16 %v809
    %v1465 = vunpack.c.l.b16 %v810
    %v1466 = vunpack.c.h.b16 %v810
    %v1467 = vunpack.c.l.b16 %v811
    %v1468 = vunpack.c.h.b16 %v811
    %v1469 = vunpack.c.l.b16 %v812
    %v1470 = vunpack.c.h.b16 %v812
    %v1471 = vunpack.c.l.b16 %v813
    %v1472 = vunpack.c.h.b16 %v813
    %v1473 = vunpack.c.l.b16 %v814
    %v1474 = vunpack.c.h.b16 %v814
    %v1475 = vunpack.c.l.b16 %v815
    %v1476 = vunpack.c.h.b16 %v815
    %v1477 = vunpack.c.l.b16 %v816
    %v1478 = vunpack.c.h.b16 %v816
    %v1479 = vunpack.c.l.b16 %v817
    %v1480 = vunpack.c.h.b16 %v817
    %v1481 = vunpack.c.l.b16 %v818
    %v1482 = vunpack.c.h.b16 %v818
    %v1483 = vunpack.c.l.b16 %v819
    %v1484 = vunpack.c.h.b16 %v819
    %v1485 = vunpack.c.l.b16 %v820
    %v1486 = vunpack.c.h.b16 %v820
    %v1487 = vunpack.c.l.b16 %v821
    %v1488 = vunpack.c.h.b16 %v821
    %v1489 = vunpack.c.l.b16 %v822
    %v1490 = vunpack.c.h.b16 %v822
    %v1491 = vunpack.c.l.b16 %v823
    %v1492 = vunpack.c.h.b16 %v823
    %v1493 = vunpack.c.l.b16 %v824
    %v1494 = vunpack.c.h.b16 %v824
    %v1495 = vunpack.c.l.b16 %v825
    %v1496 = vunpack.c.h.b16 %v825
    %v1497 = vunpack.c.l.b16 %v826
    %v1498 = vunpack.c.h.b16 %v826
    %v1499 = vunpack.c.l.b16 %v827
    %v1500 = vunpack.c.h.b16 %v827
    %v1501 = vunpack.c.l.b16 %v828
    %v1502 = vunpack.c.h.b16 %v828
    %v1503 = vunpack.c.l.b16 %v829
    %v1504 = vunpack.c.h.b16 %v829
    %v1505 = vunpack.c.l.b16 %v830
    %v1506 = vunpack.c.h.b16 %v830
    %v1507 = vunpack.c.l.b16 %v831
    %v1508 = vunpack.c.h.b16 %v831
    %v1509 = vunpack.c.l.b16 %v832
    %v1510 = vunpack.c.h.b16 %v832
    %v1511 = vunpack.c.l.b16 %v833
    %v1512 = vunpack.c.h.b16 %v833
    %v1513 = vunpack.c.l.b16 %v834
    %v1514 = vunpack.c.h.b16 %v834
    %v1515 = vunpack.c.l.b16 %v835
    %v1516 = vunpack.c.h.b16 %v835
    %v1517 = vunpack.c.l.b16 %v836
    %v1518 = vunpack.c.h.b16 %v836
    %v1519 = vunpack.c.l.b16 %v837
    %v1520 = vunpack.c.h.b16 %v837
    %v1521 = vunpack.c.l.b16 %v838
    %v1522 = vunpack.c.h.b16 %v838
    %v1523 = vunpack.c.l.b16 %v839
    %v1524 = vunpack.c.h.b16 %v839
    %v1525 = vunpack.c.l.b16 %v840
    %v1526 = vunpack.c.h.b16 %v840
    %v1527 = vunpack.c.l.b16 %v841
    %v1528 = vunpack.c.h.b16 %v841
    %v1529 = vunpack.c.l.b16 %v842
    %v1530 = vunpack.c.h.b16 %v842
    %v1531 = vunpack.c.l.b16 %v843
    %v1532 = vunpack.c.h.b16 %v843
    %v1533 = vunpack.c.l.b16 %v844
    %v1534 = vunpack.c.h.b16 %v844
    %v1535 = vunpack.c.l.b16 %v845
    %v1536 = vunpack.c.h.b16 %v845
    %v1537 = vunpack.c.l.b16 %v846
    %v1538 = vunpack.c.h.b16 %v846
    %v1539 = vunpack.c.l.b16 %v847
    %v1540 = vunpack.c.h.b16 %v847
    %v1541 = vunpack.c.l.b16 %v848
    %v1542 = vunpack.c.h.b16 %v848
    %v1543 = vunpack.c.l.b16 %v849
    %v1544 = vunpack.c.h.b16 %v849
    %v1545 = vunpack.c.l.b16 %v850
    %v1546 = vunpack.c.h.b16 %v850
    %v1547 = vunpack.c.l.b16 %v851
    %v1548 = vunpack.c.h.b16 %v851
    %v1549 = vunpack.c.l.b16 %v852
    %v1550 = vunpack.c.h.b16 %v852
    %v1551 = vunpack.c.l.b16 %v853
    %v1552 = vunpack.c.h.b16 %v853
    %v1553 = vunpack.c.l.b16 %v854
    %v1554 = vunpack.c.h.b16 %v854
    %v1555 = vunpack.c.l.b16 %v855
    %v1556 = vunpack.c.h.b16 %v855
    %v1557 = vpack.c.b16 %v1309, %v1301
    %v1558 = vpack.c.b16 %v1310, %v1302
    %v1559 = vpack.c.b16 %v1311, %v1303
    %v1560 = vpack.c.b16 %v1312, %v1304
    %v1561 = vpack.c.b16 %v1313, %v1305
    %v1562 = vpack.c.b16 %v1314, %v1306
    %v1563 = vpack.c.b16 %v1315, %v1307
    %v1564 = vpack.c.b16 %v1316, %v1308
    %v1565 = vpack.c.b16 %v1325, %v1317
    %v1566 = vpack.c.b16 %v1326, %v1318
    %v1567 = vpack.c.b16 %v1327, %v1319
    %v1568 = vpack.c.b16 %v1328, %v1320
    %v1569 = vpack.c.b16 %v1329, %v1321
    %v1570 = vpack.c.b16 %v1330, %v1322
    %v1571 = vpack.c.b16 %v1331, %v1323
    %v1572 = vpack.c.b16 %v1332, %v1324
    %v1573 = vpack.c.b16 %v1341, %v1333
    %v1574 = vpack.c.b16 %v1342, %v1334
    %v1575 = vpack.c.b16 %v1343, %v1335
    %v1576 = vpack.c.b16 %v1344, %v1336
    %v1577 = vpack.c.b16 %v1345, %v1337
    %v1578 = vpack.c.b16 %v1346, %v1338
    %v1579 = vpack.c.b16 %v1347, %v1339
    %v1580 = vpack.c.b16 %v1348, %v1340
    %v1581 = vpack.c.b16 %v1357, %v1349
    %v1582 = vpack.c.b16 %v1358, %v1350
    %v1583 = vpack.c.b16 %v1359, %v1351
    %v1584 = vpack.c.b16 %v1360, %v1352
    %v1585 = vpack.c.b16 %v1361, %v1353
    %v1586 = vpack.c.b16 %v1362, %v1354
    %v1587 = vpack.c.b16 %v1363, %v1355
    %v1588 = vpack.c.b16 %v1364, %v1356
    %v1589 = vpack.c.b16 %v1373, %v1365
    %v1590 = vpack.c.b16 %v1374, %v1366
    %v1591 = vpack.c.b16 %v1375, %v1367
    %v1592 = vpack.c.b16 %v1376, %v1368
    %v1593 = vpack.c.b16 %v1377, %v1369
    %v1594 = vpack.c.b16 %v1378, %v1370
    %v1595 = vpack.c.b16 %v1379, %v1371
    %v1596 = vpack.c.b16 %v1380, %v1372
    %v1597 = vpack.c.b16 %v1389, %v1381
    %v1598 = vpack.c.b16 %v1390, %v1382
    %v1599 = vpack.c.b16 %v1391, %v1383
    %v1600 = vpack.c.b16 %v1392, %v1384
    %v1601 = vpack.c.b16 %v1393, %v1385
    %v1602 = vpack.c.b16 %v1394, %v1386
    %v1603 = vpack.c.b16 %v1395, %v1387
    %v1604 = vpack.c.b16 %v1396, %v1388
    %v1605 = vpack.c.b16 %v1405, %v1397
    %v1606 = vpack.c.b16 %v1406, %v1398
    %v1607 = vpack.c.b16 %v1407, %v1399
    %v1608 = vpack.c.b16 %v1408, %v1400
    %v1609 = vpack.c.b16 %v1409, %v1401
    %v1610 = vpack.c.b16 %v1410, %v1402
    %v1611 = vpack.c.b16 %v1411, %v1403
    %v1612 = vpack.c.b16 %v1412, %v1404
    %v1613 = vpack.c.b16 %v1421, %v1413
    %v1614 = vpack.c.b16 %v1422, %v1414
    %v1615 = vpack.c.b16 %v1423, %v1415
    %v1616 = vpack.c.b16 %v1424, %v1416
    %v1617 = vpack.c.b16 %v1425, %v1417
    %v1618 = vpack.c.b16 %v1426, %v1418
    %v1619 = vpack.c.b16 %v1427, %v1419
    %v1620 = vpack.c.b16 %v1428, %v1420
    %v1621 = vpack.c.b16 %v1437, %v1429
    %v1622 = vpack.c.b16 %v1438, %v1430
    %v1623 = vpack.c.b16 %v1439, %v1431
    %v1624 = vpack.c.b16 %v1440, %v1432
    %v1625 = vpack.c.b16 %v1441, %v1433
    %v1626 = vpack.c.b16 %v1442, %v1434
    %v1627 = vpack.c.b16 %v1443, %v1435
    %v1628 = vpack.c.b16 %v1444, %v1436
    %v1629 = vpack.c.b16 %v1453, %v1445
    %v1630 = vpack.c.b16 %v1454, %v1446
    %v1631 = vpack.c.b16 %v1455, %v1447
    %v1632 = vpack.c.b16 %v1456, %v1448
    %v1633 = vpack.c.b16 %v1457, %v1449
    %v1634 = vpack.c.b16 %v1458, %v1450
    %v1635 = vpack.c.b16 %v1459, %v1451
    %v1636 = vpack.c.b16 %v1460, %v1452
    %v1637 = vpack.c.b16 %v1469, %v1461
    %v1638 = vpack.c.b16 %v1470, %v1462
    %v1639 = vpack.c.b16 %v1471, %v1463
    %v1640 = vpack.c.b16 %v1472, %v1464
    %v1641 = vpack.c.b16 %v1473, %v1465
    %v1642 = vpack.c.b16 %v1474, %v1466
    %v1643 = vpack.c.b16 %v1475, %v1467
    %v1644 = vpack.c.b16 %v1476, %v1468
    %v1645 = vpack.c.b16 %v1485, %v1477
    %v1646 = vpack.c.b16 %v1486, %v1478
    %v1647 = vpack.c.b16 %v1487, %v1479
    %v1648 = vpack.c.b16 %v1488, %v1480
    %v1649 = vpack.c.b16 %v1489, %v1481
    %v1650 = vpack.c.b16 %v1490, %v1482
    %v1651 = vpack.c.b16 %v1491, %v1483
    %v1652 = vpack.c.b16 %v1492, %v1484
    %v1653 = vpack.c.b16 %v1501, %v1493
    %v1654 = vpack.c.b16 %v1502, %v1494
    %v1655 = vpack.c.b16 %v1503, %v1495
    %v1656 = vpack.c.b16 %v1504, %v1496
    %v1657 = vpack.c.b16 %v1505, %v1497
    %v1658 = vpack.c.b16 %v1506, %v1498
    %v1659 = vpack.c.b16 %v1507, %v1499
    %v1660 = vpack.c.b16 %v1508, %v1500
    %v1661 = vpack.c.b16 %v1517, %v1509
    %v1662 = vpack.c.b16 %v1518, %v1510
    %v1663 = vpack.c.b16 %v1519, %v1511
    %v1664 = vpack.c.b16 %v1520, %v1512
    %v1665 = vpack.c.b16 %v1521, %v1513
    %v1666 = vpack.c.b16 %v1522, %v1514
    %v1667 = vpack.c.b16 %v1523, %v1515
    %v1668 = vpack.c.b16 %v1524, %v1516
    %v1669 = vpack.c.b16 %v1533, %v1525
    %v1670 = vpack.c.b16 %v1534, %v1526
    %v1671 = vpack.c.b16 %v1535, %v1527
    %v1672 = vpack.c.b16 %v1536, %v1528
    %v1673 = vpack.c.b16 %v1537, %v1529
    %v1674 = vpack.c.b16 %v1538, %v1530
    %v1675 = vpack.c.b16 %v1539, %v1531
    %v1676 = vpack.c.b16 %v1540, %v1532
    %v1677 = vpack.c.b16 %v1549, %v1541
    %v1678 = vpack.c.b16 %v1550, %v1542
    %v1679 = vpack.c.b16 %v1551, %v1543
    %v1680 = vpack.c.b16 %v1552, %v1544
    %v1681 = vpack.c.b16 %v1553, %v1545
    %v1682 = vpack.c.b16 %v1554, %v1546
    %v1683 = vpack.c.b16 %v1555, %v1547
    %v1684 = vpack.c.b16 %v1556, %v1548
    %1813 = vmatprep.subr.bf16.mxu0 %v1614
    %1814 = vmatpush1.bf16.msra.mxu0 %v1613
    %1815 = vmatprep.subr.bf16.mxu0 %v1606
    %1816 = vmatpush1.bf16.msra.mxu0 %v1605
    %1817 = vmatprep.subr.bf16.mxu0 %v1598
    %1818 = vmatpush1.bf16.msra.mxu0 %v1597
    %1819 = vmatprep.subr.bf16.mxu0 %v1590
    %1820 = vmatpush1.bf16.msra.mxu0 %v1589
    %1821 = vmatprep.subr.bf16.mxu0 %v1582
    %1822 = vmatpush1.bf16.msra.mxu0 %v1581
    %1823 = vmatprep.subr.bf16.mxu0 %v1574
    %1824 = vmatpush1.bf16.msra.mxu0 %v1573
    %1825 = vmatprep.subr.bf16.mxu0 %v1566
    %1826 = vmatpush1.bf16.msra.mxu0 %v1565
    %1827 = vmatprep.subr.bf16.mxu0 %v1558
    %1828 = vmatpush1.bf16.msra.mxu0 %v1557
    %1829 = vmatprep.subr.bf16.mxu0 %v1678
    %1830 = vmatpush2.bf16.msra.mxu0 %v1677
    %1831 = vmatprep.subr.bf16.mxu0 %v1670
    %1832 = vmatpush2.bf16.msra.mxu0 %v1669
    %1833 = vmatprep.subr.bf16.mxu0 %v1662
    %1834 = vmatpush2.bf16.msra.mxu0 %v1661
    %1835 = vmatprep.subr.bf16.mxu0 %v1654
    %1836 = vmatpush2.bf16.msra.mxu0 %v1653
    %1837 = vmatprep.subr.bf16.mxu0 %v1646
    %1838 = vmatpush2.bf16.msra.mxu0 %v1645
    %1839 = vmatprep.subr.bf16.mxu0 %v1638
    %1840 = vmatpush2.bf16.msra.mxu0 %v1637
    %1841 = vmatprep.subr.bf16.mxu0 %v1630
    %1842 = vmatpush2.bf16.msra.mxu0 %v1629
    %1843 = vmatprep.subr.bf16.mxu0 %v1622
    %1844 = vmatpush2.bf16.msra.mxu0 %v1621
    %1845 = vmatprep.mubr.bf16.mxu0 %v727
    %1846 = vmatmul.mubr.bf16.gmra.mxu0 %v726
    %v1847 = vpop.f32.mrf.mxu0
    %v1848 = vadd.f32 %v956, %v1847
    %v1849 = vpop.f32.mrf.mxu0
    %v1850 = vadd.f32 %v958, %v1849
    %v1851 = vpop.f32.mrf.mxu0
    %v1852 = vpop.f32.mrf.mxu0
    %1853 = vdwg.mxu0
    %1854 = vmatprep.subr.bf16.mxu0 %v1616
    %1855 = vmatpush1.bf16.msra.mxu0 %v1615
    %1856 = vmatprep.subr.bf16.mxu0 %v1608
    %1857 = vmatpush1.bf16.msra.mxu0 %v1607
    %1858 = vmatprep.subr.bf16.mxu0 %v1600
    %1859 = vmatpush1.bf16.msra.mxu0 %v1599
    %1860 = vmatprep.subr.bf16.mxu0 %v1592
    %1861 = vmatpush1.bf16.msra.mxu0 %v1591
    %1862 = vmatprep.subr.bf16.mxu0 %v1584
    %1863 = vmatpush1.bf16.msra.mxu0 %v1583
    %1864 = vmatprep.subr.bf16.mxu0 %v1576
    %1865 = vmatpush1.bf16.msra.mxu0 %v1575
    %1866 = vmatprep.subr.bf16.mxu0 %v1568
    %1867 = vmatpush1.bf16.msra.mxu0 %v1567
    %1868 = vmatprep.subr.bf16.mxu0 %v1560
    %1869 = vmatpush1.bf16.msra.mxu0 %v1559
    %1870 = vmatprep.subr.bf16.mxu0 %v1680
    %1871 = vmatpush2.bf16.msra.mxu0 %v1679
    %1872 = vmatprep.subr.bf16.mxu0 %v1672
    %1873 = vmatpush2.bf16.msra.mxu0 %v1671
    %1874 = vmatprep.subr.bf16.mxu0 %v1664
    %1875 = vmatpush2.bf16.msra.mxu0 %v1663
    %1876 = vmatprep.subr.bf16.mxu0 %v1656
    %1877 = vmatpush2.bf16.msra.mxu0 %v1655
    %1878 = vmatprep.subr.bf16.mxu0 %v1648
    %1879 = vmatpush2.bf16.msra.mxu0 %v1647
    %1880 = vmatprep.subr.bf16.mxu0 %v1640
    %1881 = vmatpush2.bf16.msra.mxu0 %v1639
    %1882 = vmatprep.subr.bf16.mxu0 %v1632
    %1883 = vmatpush2.bf16.msra.mxu0 %v1631
    %1884 = vmatprep.subr.bf16.mxu0 %v1624
    %1885 = vmatpush2.bf16.msra.mxu0 %v1623
    %1886 = vmatprep.mubr.bf16.mxu0 %v727
    %1887 = vmatmul.mubr.bf16.gmra.mxu0 %v726
    %v1888 = vpop.f32.mrf.mxu0
    %v1889 = vadd.f32 %v1027, %v1888
    %v1890 = vpop.f32.mrf.mxu0
    %v1891 = vadd.f32 %v1029, %v1890
    %v1892 = vpop.f32.mrf.mxu0
    %v1893 = vpop.f32.mrf.mxu0
    %1894 = vdwg.mxu0
    %1895 = vmatprep.subr.bf16.mxu0 %v1618
    %1896 = vmatpush1.bf16.msra.mxu0 %v1617
    %1897 = vmatprep.subr.bf16.mxu0 %v1610
    %1898 = vmatpush1.bf16.msra.mxu0 %v1609
    %1899 = vmatprep.subr.bf16.mxu0 %v1602
    %1900 = vmatpush1.bf16.msra.mxu0 %v1601
    %1901 = vmatprep.subr.bf16.mxu0 %v1594
    %1902 = vmatpush1.bf16.msra.mxu0 %v1593
    %1903 = vmatprep.subr.bf16.mxu0 %v1586
    %1904 = vmatpush1.bf16.msra.mxu0 %v1585
    %1905 = vmatprep.subr.bf16.mxu0 %v1578
    %1906 = vmatpush1.bf16.msra.mxu0 %v1577
    %1907 = vmatprep.subr.bf16.mxu0 %v1570
    %1908 = vmatpush1.bf16.msra.mxu0 %v1569
    %1909 = vmatprep.subr.bf16.mxu0 %v1562
    %1910 = vmatpush1.bf16.msra.mxu0 %v1561
    %1911 = vmatprep.subr.bf16.mxu0 %v1682
    %1912 = vmatpush2.bf16.msra.mxu0 %v1681
    %1913 = vmatprep.subr.bf16.mxu0 %v1674
    %1914 = vmatpush2.bf16.msra.mxu0 %v1673
    %1915 = vmatprep.subr.bf16.mxu0 %v1666
    %1916 = vmatpush2.bf16.msra.mxu0 %v1665
    %1917 = vmatprep.subr.bf16.mxu0 %v1658
    %1918 = vmatpush2.bf16.msra.mxu0 %v1657
    %1919 = vmatprep.subr.bf16.mxu0 %v1650
    %1920 = vmatpush2.bf16.msra.mxu0 %v1649
    %1921 = vmatprep.subr.bf16.mxu0 %v1642
    %1922 = vmatpush2.bf16.msra.mxu0 %v1641
    %1923 = vmatprep.subr.bf16.mxu0 %v1634
    %1924 = vmatpush2.bf16.msra.mxu0 %v1633
    %1925 = vmatprep.subr.bf16.mxu0 %v1626
    %1926 = vmatpush2.bf16.msra.mxu0 %v1625
    %1927 = vmatprep.mubr.bf16.mxu0 %v727
    %1928 = vmatmul.mubr.bf16.gmra.mxu0 %v726
    %v1929 = vpop.f32.mrf.mxu0
    %v1930 = vadd.f32 %v1098, %v1929
    %v1931 = vpop.f32.mrf.mxu0
    %v1932 = vadd.f32 %v1100, %v1931
    %v1933 = vpop.f32.mrf.mxu0
    %v1934 = vpop.f32.mrf.mxu0
    %1935 = vdwg.mxu0
    %1936 = vmatprep.subr.bf16.mxu0 %v1620
    %1937 = vmatpush1.bf16.msra.mxu0 %v1619
    %1938 = vmatprep.subr.bf16.mxu0 %v1612
    %1939 = vmatpush1.bf16.msra.mxu0 %v1611
    %1940 = vmatprep.subr.bf16.mxu0 %v1604
    %1941 = vmatpush1.bf16.msra.mxu0 %v1603
    %1942 = vmatprep.subr.bf16.mxu0 %v1596
    %1943 = vmatpush1.bf16.msra.mxu0 %v1595
    %1944 = vmatprep.subr.bf16.mxu0 %v1588
    %1945 = vmatpush1.bf16.msra.mxu0 %v1587
    %1946 = vmatprep.subr.bf16.mxu0 %v1580
    %1947 = vmatpush1.bf16.msra.mxu0 %v1579
    %1948 = vmatprep.subr.bf16.mxu0 %v1572
    %1949 = vmatpush1.bf16.msra.mxu0 %v1571
    %1950 = vmatprep.subr.bf16.mxu0 %v1564
    %1951 = vmatpush1.bf16.msra.mxu0 %v1563
    %1952 = vmatprep.subr.bf16.mxu0 %v1684
    %1953 = vmatpush2.bf16.msra.mxu0 %v1683
    %1954 = vmatprep.subr.bf16.mxu0 %v1676
    %1955 = vmatpush2.bf16.msra.mxu0 %v1675
    %1956 = vmatprep.subr.bf16.mxu0 %v1668
    %1957 = vmatpush2.bf16.msra.mxu0 %v1667
    %1958 = vmatprep.subr.bf16.mxu0 %v1660
    %1959 = vmatpush2.bf16.msra.mxu0 %v1659
    %1960 = vmatprep.subr.bf16.mxu0 %v1652
    %1961 = vmatpush2.bf16.msra.mxu0 %v1651
    %1962 = vmatprep.subr.bf16.mxu0 %v1644
    %1963 = vmatpush2.bf16.msra.mxu0 %v1643
    %1964 = vmatprep.subr.bf16.mxu0 %v1636
    %1965 = vmatpush2.bf16.msra.mxu0 %v1635
    %1966 = vmatprep.subr.bf16.mxu0 %v1628
    %1967 = vmatpush2.bf16.msra.mxu0 %v1627
    %1968 = vmatprep.mubr.bf16.mxu0 %v727
    %1969 = vmatmul.mubr.bf16.gmra.mxu0 %v726
    %v1970 = vpop.f32.mrf.mxu0
    %v1971 = vadd.f32 %v1169, %v1970
    %v1972 = vpop.f32.mrf.mxu0
    %v1973 = vadd.f32 %v1171, %v1972
    %v1974 = vpop.f32.mrf.mxu0
    %v1975 = vpop.f32.mrf.mxu0
    %1976 = vdwg.mxu0
    %v1977 = vld [vmem:[%s15] sm:$0xff]
    %v1978 = vld [vmem:[%s15 + $0x8] sm:$0xff]
    %s1979 = scalar_lea.vmem %s15, 16
    %v1980 = vld [vmem:[%s1979] sm:$0xff]
    %v1981 = vld [vmem:[%s1979 + $0x8] sm:$0xff]
    %v1983 = vsel %vm389, %v1980, 0
    %v1986 = vsel %vm389, %v1981, 0
    %1988 = vmatprep.subr.mxu0 0.0
    %1989 = vmatpush1.msra.mxu0 0.0
    %1990 = vmatprep.subr.mxu0 0.0
    %1991 = vmatpush1.msra.mxu0 0.0
    %1992 = vmatprep.subr.mxu0 0.0
    %1993 = vmatpush1.msra.mxu0 0.0
    %1994 = vmatprep.subr.mxu0 0.0
    %1995 = vmatpush1.msra.mxu0 0.0
    %1996 = vmatprep.subr.mxu0 0.0
    %1997 = vmatpush1.msra.mxu0 0.0
    %1998 = vmatprep.subr.mxu0 0.0
    %1999 = vmatpush1.msra.mxu0 0.0
    %2000 = vmatprep.subr.mxu0 0.0
    %2001 = vmatpush1.msra.mxu0 0.0
    %2002 = vmatprep.subr.mxu0 0.0
    %2003 = vmatpush1.msra.mxu0 0.0
    %2004 = vmatprep.subr.mxu0 0.0
    %2005 = vmatpush1.msra.mxu0 0.0
    %2006 = vmatprep.subr.mxu0 0.0
    %2007 = vmatpush1.msra.mxu0 0.0
    %2008 = vmatprep.subr.mxu0 0.0
    %2009 = vmatpush1.msra.mxu0 0.0
    %2010 = vmatprep.subr.mxu0 0.0
    %2011 = vmatpush1.msra.mxu0 0.0
    %2012 = vmatprep.subr.mxu0 0.0
    %2013 = vmatpush1.msra.mxu0 0.0
    %2014 = vmatprep.subr.mxu0 0.0
    %2015 = vmatpush1.msra.mxu0 0.0
    %2016 = vmatprep.subr.mxu0 0.0
    %2017 = vmatpush1.msra.mxu0 0.0
    %2018 = vmatprep.subr.mxu0 %v1891
    %2019 = vmatpush1.msra.mxu0 %v1889
    %2020 = vmatprep.subr.mxu0 0.0
    %2021 = vmatpush2.msra.mxu0 0.0
    %2022 = vmatprep.subr.mxu0 0.0
    %2023 = vmatpush2.msra.mxu0 0.0
    %2024 = vmatprep.subr.mxu0 0.0
    %2025 = vmatpush2.msra.mxu0 0.0
    %2026 = vmatprep.subr.mxu0 0.0
    %2027 = vmatpush2.msra.mxu0 0.0
    %2028 = vmatprep.subr.mxu0 0.0
    %2029 = vmatpush2.msra.mxu0 0.0
    %2030 = vmatprep.subr.mxu0 0.0
    %2031 = vmatpush2.msra.mxu0 0.0
    %2032 = vmatprep.subr.mxu0 0.0
    %2033 = vmatpush2.msra.mxu0 0.0
    %2034 = vmatprep.subr.mxu0 0.0
    %2035 = vmatpush2.msra.mxu0 0.0
    %2036 = vmatprep.subr.mxu0 0.0
    %2037 = vmatpush2.msra.mxu0 0.0
    %2038 = vmatprep.subr.mxu0 0.0
    %2039 = vmatpush2.msra.mxu0 0.0
    %2040 = vmatprep.subr.mxu0 0.0
    %2041 = vmatpush2.msra.mxu0 0.0
    %2042 = vmatprep.subr.mxu0 0.0
    %2043 = vmatpush2.msra.mxu0 0.0
    %2044 = vmatprep.subr.mxu0 0.0
    %2045 = vmatpush2.msra.mxu0 0.0
    %2046 = vmatprep.subr.mxu0 0.0
    %2047 = vmatpush2.msra.mxu0 0.0
    %2048 = vmatprep.subr.mxu0 0.0
    %2049 = vmatpush2.msra.mxu0 0.0
    %2050 = vmatprep.subr.mxu0 0.0
    %2051 = vmatpush2.msra.mxu0 0.0
    %2052 = vmatprep.mubr.f32.mxu0 0.0
    %2053 = vmatmul.mubr.f32.gmra.mxu0 %v1983
    %v2054 = vpop.f32.mrf.mxu0
    %v2055 = vadd.f32 0.0, %v2054
    %v2056 = vpop.f32.mrf.mxu0
    %v2057 = vadd.f32 0.0, %v2056
    %2058 = vmatprep.mubr.f32.mxu0 0.0
    %2059 = vmatmul.mubr.f32.gmra.mxu0 %v1986
    %v2060 = vpop.f32.mrf.mxu0
    %v2061 = vadd.f32 0.0, %v2060
    %v2062 = vpop.f32.mrf.mxu0
    %v2063 = vadd.f32 0.0, %v2062
    %2064 = vdwg.mxu0
    %v2066 = vsel %vm389, %v1977, 0
    %v2069 = vsel %vm389, %v1978, 0
    %2071 = vmatprep.subr.mxu0 0.0
    %2072 = vmatpush1.msra.mxu0 0.0
    %2073 = vmatprep.subr.mxu0 0.0
    %2074 = vmatpush1.msra.mxu0 0.0
    %2075 = vmatprep.subr.mxu0 0.0
    %2076 = vmatpush1.msra.mxu0 0.0
    %2077 = vmatprep.subr.mxu0 0.0
    %2078 = vmatpush1.msra.mxu0 0.0
    %2079 = vmatprep.subr.mxu0 0.0
    %2080 = vmatpush1.msra.mxu0 0.0
    %2081 = vmatprep.subr.mxu0 0.0
    %2082 = vmatpush1.msra.mxu0 0.0
    %2083 = vmatprep.subr.mxu0 0.0
    %2084 = vmatpush1.msra.mxu0 0.0
    %2085 = vmatprep.subr.mxu0 0.0
    %2086 = vmatpush1.msra.mxu0 0.0
    %2087 = vmatprep.subr.mxu0 0.0
    %2088 = vmatpush1.msra.mxu0 0.0
    %2089 = vmatprep.subr.mxu0 0.0
    %2090 = vmatpush1.msra.mxu0 0.0
    %2091 = vmatprep.subr.mxu0 0.0
    %2092 = vmatpush1.msra.mxu0 0.0
    %2093 = vmatprep.subr.mxu0 0.0
    %2094 = vmatpush1.msra.mxu0 0.0
    %2095 = vmatprep.subr.mxu0 0.0
    %2096 = vmatpush1.msra.mxu0 0.0
    %2097 = vmatprep.subr.mxu0 0.0
    %2098 = vmatpush1.msra.mxu0 0.0
    %2099 = vmatprep.subr.mxu0 0.0
    %2100 = vmatpush1.msra.mxu0 0.0
    %2101 = vmatprep.subr.mxu0 %v1850
    %2102 = vmatpush1.msra.mxu0 %v1848
    %2103 = vmatprep.subr.mxu0 0.0
    %2104 = vmatpush2.msra.mxu0 0.0
    %2105 = vmatprep.subr.mxu0 0.0
    %2106 = vmatpush2.msra.mxu0 0.0
    %2107 = vmatprep.subr.mxu0 0.0
    %2108 = vmatpush2.msra.mxu0 0.0
    %2109 = vmatprep.subr.mxu0 0.0
    %2110 = vmatpush2.msra.mxu0 0.0
    %2111 = vmatprep.subr.mxu0 0.0
    %2112 = vmatpush2.msra.mxu0 0.0
    %2113 = vmatprep.subr.mxu0 0.0
    %2114 = vmatpush2.msra.mxu0 0.0
    %2115 = vmatprep.subr.mxu0 0.0
    %2116 = vmatpush2.msra.mxu0 0.0
    %2117 = vmatprep.subr.mxu0 0.0
    %2118 = vmatpush2.msra.mxu0 0.0
    %2119 = vmatprep.subr.mxu0 0.0
    %2120 = vmatpush2.msra.mxu0 0.0
    %2121 = vmatprep.subr.mxu0 0.0
    %2122 = vmatpush2.msra.mxu0 0.0
    %2123 = vmatprep.subr.mxu0 0.0
    %2124 = vmatpush2.msra.mxu0 0.0
    %2125 = vmatprep.subr.mxu0 0.0
    %2126 = vmatpush2.msra.mxu0 0.0
    %2127 = vmatprep.subr.mxu0 0.0
    %2128 = vmatpush2.msra.mxu0 0.0
    %2129 = vmatprep.subr.mxu0 0.0
    %2130 = vmatpush2.msra.mxu0 0.0
    %2131 = vmatprep.subr.mxu0 0.0
    %2132 = vmatpush2.msra.mxu0 0.0
    %2133 = vmatprep.subr.mxu0 0.0
    %2134 = vmatpush2.msra.mxu0 0.0
    %2135 = vmatprep.mubr.f32.mxu0 0.0
    %2136 = vmatmul.mubr.f32.gmra.mxu0 %v2066
    %v2137 = vpop.f32.mrf.mxu0
    %v2138 = vadd.f32 %v2055, %v2137
    %v2139 = vpop.f32.mrf.mxu0
    %v2140 = vadd.f32 %v2057, %v2139
    %2141 = vmatprep.mubr.f32.mxu0 0.0
    %2142 = vmatmul.mubr.f32.gmra.mxu0 %v2069
    %v2143 = vpop.f32.mrf.mxu0
    %v2144 = vadd.f32 %v2061, %v2143
    %v2145 = vpop.f32.mrf.mxu0
    %v2146 = vadd.f32 %v2063, %v2145
    %2147 = vdwg.mxu0
    %s2148 = scalar_lea.vmem %s15, 32
    %v2149 = vld [vmem:[%s2148] sm:$0xff]
    %v2150 = vld [vmem:[%s2148 + $0x8] sm:$0xff]
    %v2152 = vsel %vm389, %v2149, 0
    %v2155 = vsel %vm389, %v2150, 0
    %2157 = vmatprep.subr.mxu0 0.0
    %2158 = vmatpush1.msra.mxu0 0.0
    %2159 = vmatprep.subr.mxu0 0.0
    %2160 = vmatpush1.msra.mxu0 0.0
    %2161 = vmatprep.subr.mxu0 0.0
    %2162 = vmatpush1.msra.mxu0 0.0
    %2163 = vmatprep.subr.mxu0 0.0
    %2164 = vmatpush1.msra.mxu0 0.0
    %2165 = vmatprep.subr.mxu0 0.0
    %2166 = vmatpush1.msra.mxu0 0.0
    %2167 = vmatprep.subr.mxu0 0.0
    %2168 = vmatpush1.msra.mxu0 0.0
    %2169 = vmatprep.subr.mxu0 0.0
    %2170 = vmatpush1.msra.mxu0 0.0
    %2171 = vmatprep.subr.mxu0 0.0
    %2172 = vmatpush1.msra.mxu0 0.0
    %2173 = vmatprep.subr.mxu0 0.0
    %2174 = vmatpush1.msra.mxu0 0.0
    %2175 = vmatprep.subr.mxu0 0.0
    %2176 = vmatpush1.msra.mxu0 0.0
    %2177 = vmatprep.subr.mxu0 0.0
    %2178 = vmatpush1.msra.mxu0 0.0
    %2179 = vmatprep.subr.mxu0 0.0
    %2180 = vmatpush1.msra.mxu0 0.0
    %2181 = vmatprep.subr.mxu0 0.0
    %2182 = vmatpush1.msra.mxu0 0.0
    %2183 = vmatprep.subr.mxu0 0.0
    %2184 = vmatpush1.msra.mxu0 0.0
    %2185 = vmatprep.subr.mxu0 0.0
    %2186 = vmatpush1.msra.mxu0 0.0
    %2187 = vmatprep.subr.mxu0 %v1932
    %2188 = vmatpush1.msra.mxu0 %v1930
    %2189 = vmatprep.subr.mxu0 0.0
    %2190 = vmatpush2.msra.mxu0 0.0
    %2191 = vmatprep.subr.mxu0 0.0
    %2192 = vmatpush2.msra.mxu0 0.0
    %2193 = vmatprep.subr.mxu0 0.0
    %2194 = vmatpush2.msra.mxu0 0.0
    %2195 = vmatprep.subr.mxu0 0.0
    %2196 = vmatpush2.msra.mxu0 0.0
    %2197 = vmatprep.subr.mxu0 0.0
    %2198 = vmatpush2.msra.mxu0 0.0
    %2199 = vmatprep.subr.mxu0 0.0
    %2200 = vmatpush2.msra.mxu0 0.0
    %2201 = vmatprep.subr.mxu0 0.0
    %2202 = vmatpush2.msra.mxu0 0.0
    %2203 = vmatprep.subr.mxu0 0.0
    %2204 = vmatpush2.msra.mxu0 0.0
    %2205 = vmatprep.subr.mxu0 0.0
    %2206 = vmatpush2.msra.mxu0 0.0
    %2207 = vmatprep.subr.mxu0 0.0
    %2208 = vmatpush2.msra.mxu0 0.0
    %2209 = vmatprep.subr.mxu0 0.0
    %2210 = vmatpush2.msra.mxu0 0.0
    %2211 = vmatprep.subr.mxu0 0.0
    %2212 = vmatpush2.msra.mxu0 0.0
    %2213 = vmatprep.subr.mxu0 0.0
    %2214 = vmatpush2.msra.mxu0 0.0
    %2215 = vmatprep.subr.mxu0 0.0
    %2216 = vmatpush2.msra.mxu0 0.0
    %2217 = vmatprep.subr.mxu0 0.0
    %2218 = vmatpush2.msra.mxu0 0.0
    %2219 = vmatprep.subr.mxu0 0.0
    %2220 = vmatpush2.msra.mxu0 0.0
    %2221 = vmatprep.mubr.f32.mxu0 0.0
    %2222 = vmatmul.mubr.f32.gmra.mxu0 %v2152
    %v2223 = vpop.f32.mrf.mxu0
    %v2224 = vadd.f32 0.0, %v2223
    %v2225 = vpop.f32.mrf.mxu0
    %v2226 = vadd.f32 0.0, %v2225
    %2227 = vmatprep.mubr.f32.mxu0 0.0
    %2228 = vmatmul.mubr.f32.gmra.mxu0 %v2155
    %v2229 = vpop.f32.mrf.mxu0
    %v2230 = vadd.f32 0.0, %v2229
    %v2231 = vpop.f32.mrf.mxu0
    %v2232 = vadd.f32 0.0, %v2231
    %2233 = vdwg.mxu0
    %v2234 = vadd.f32 %v2138, %v2224
    %v2235 = vadd.f32 %v2140, %v2226
    %v2236 = vadd.f32 %v2144, %v2230
    %v2237 = vadd.f32 %v2146, %v2232
    %s2238 = scalar_lea.vmem %s15, 48
    %v2239 = vld [vmem:[%s2238] sm:$0xff]
    %v2240 = vld [vmem:[%s2238 + $0x8] sm:$0xff]
    %v2242 = vsel %vm389, %v2239, 0
    %v2245 = vsel %vm389, %v2240, 0
    %2247 = vmatprep.subr.mxu0 0.0
    %2248 = vmatpush1.msra.mxu0 0.0
    %2249 = vmatprep.subr.mxu0 0.0
    %2250 = vmatpush1.msra.mxu0 0.0
    %2251 = vmatprep.subr.mxu0 0.0
    %2252 = vmatpush1.msra.mxu0 0.0
    %2253 = vmatprep.subr.mxu0 0.0
    %2254 = vmatpush1.msra.mxu0 0.0
    %2255 = vmatprep.subr.mxu0 0.0
    %2256 = vmatpush1.msra.mxu0 0.0
    %2257 = vmatprep.subr.mxu0 0.0
    %2258 = vmatpush1.msra.mxu0 0.0
    %2259 = vmatprep.subr.mxu0 0.0
    %2260 = vmatpush1.msra.mxu0 0.0
    %2261 = vmatprep.subr.mxu0 0.0
    %2262 = vmatpush1.msra.mxu0 0.0
    %2263 = vmatprep.subr.mxu0 0.0
    %2264 = vmatpush1.msra.mxu0 0.0
    %2265 = vmatprep.subr.mxu0 0.0
    %2266 = vmatpush1.msra.mxu0 0.0
    %2267 = vmatprep.subr.mxu0 0.0
    %2268 = vmatpush1.msra.mxu0 0.0
    %2269 = vmatprep.subr.mxu0 0.0
    %2270 = vmatpush1.msra.mxu0 0.0
    %2271 = vmatprep.subr.mxu0 0.0
    %2272 = vmatpush1.msra.mxu0 0.0
    %2273 = vmatprep.subr.mxu0 0.0
    %2274 = vmatpush1.msra.mxu0 0.0
    %2275 = vmatprep.subr.mxu0 0.0
    %2276 = vmatpush1.msra.mxu0 0.0
    %2277 = vmatprep.subr.mxu0 %v1973
    %2278 = vmatpush1.msra.mxu0 %v1971
    %2279 = vmatprep.subr.mxu0 0.0
    %2280 = vmatpush2.msra.mxu0 0.0
    %2281 = vmatprep.subr.mxu0 0.0
    %2282 = vmatpush2.msra.mxu0 0.0
    %2283 = vmatprep.subr.mxu0 0.0
    %2284 = vmatpush2.msra.mxu0 0.0
    %2285 = vmatprep.subr.mxu0 0.0
    %2286 = vmatpush2.msra.mxu0 0.0
    %2287 = vmatprep.subr.mxu0 0.0
    %2288 = vmatpush2.msra.mxu0 0.0
    %2289 = vmatprep.subr.mxu0 0.0
    %2290 = vmatpush2.msra.mxu0 0.0
    %2291 = vmatprep.subr.mxu0 0.0
    %2292 = vmatpush2.msra.mxu0 0.0
    %2293 = vmatprep.subr.mxu0 0.0
    %2294 = vmatpush2.msra.mxu0 0.0
    %2295 = vmatprep.subr.mxu0 0.0
    %2296 = vmatpush2.msra.mxu0 0.0
    %2297 = vmatprep.subr.mxu0 0.0
    %2298 = vmatpush2.msra.mxu0 0.0
    %2299 = vmatprep.subr.mxu0 0.0
    %2300 = vmatpush2.msra.mxu0 0.0
    %2301 = vmatprep.subr.mxu0 0.0
    %2302 = vmatpush2.msra.mxu0 0.0
    %2303 = vmatprep.subr.mxu0 0.0
    %2304 = vmatpush2.msra.mxu0 0.0
    %2305 = vmatprep.subr.mxu0 0.0
    %2306 = vmatpush2.msra.mxu0 0.0
    %2307 = vmatprep.subr.mxu0 0.0
    %2308 = vmatpush2.msra.mxu0 0.0
    %2309 = vmatprep.subr.mxu0 0.0
    %2310 = vmatpush2.msra.mxu0 0.0
    %2311 = vmatprep.mubr.f32.mxu0 0.0
    %2312 = vmatmul.mubr.f32.gmra.mxu0 %v2242
    %v2313 = vpop.f32.mrf.mxu0
    %v2314 = vadd.f32 0.0, %v2313
    %v2315 = vpop.f32.mrf.mxu0
    %v2316 = vadd.f32 0.0, %v2315
    %2317 = vmatprep.mubr.f32.mxu0 0.0
    %2318 = vmatmul.mubr.f32.gmra.mxu0 %v2245
    %v2319 = vpop.f32.mrf.mxu0
    %v2320 = vadd.f32 0.0, %v2319
    %v2321 = vpop.f32.mrf.mxu0
    %v2322 = vadd.f32 0.0, %v2321
    %2323 = vdwg.mxu0
    %v2324 = vadd.f32 %v2234, %v2314
    %v2325 = vadd.f32 %v2235, %v2316
    %v2326 = vadd.f32 %v2236, %v2320
    %v2327 = vadd.f32 %v2237, %v2322
    %v2328 = vld [vmem:[%s9] sm:$0x1]
    %v2329 = vld [vmem:[%s10] sm:$0x1]
    %v2330 = vadd.f32 %v2324, %v2326
    %v2331 = vrot.slane %v2330, 4
    %v2332 = vadd.f32 %v2330, %v2331
    %v2333 = vrot.slane %v2332, 2
    %v2334 = vadd.f32 %v2332, %v2333
    %v2335 = vrot.slane %v2334, 1
    %v2336 = vadd.f32 %v2334, %v2335
    %v2337 = vadd.f32 %v2325, %v2327
    %v2338 = vrot.slane %v2337, 4
    %v2339 = vadd.f32 %v2337, %v2338
    %v2340 = vrot.slane %v2339, 2
    %v2341 = vadd.f32 %v2339, %v2340
    %v2342 = vrot.slane %v2341, 1
    %v2343 = vadd.f32 %v2341, %v2342
    %v2344 = vmul.f32 %v2324, %v2324
    %v2345 = vmul.f32 %v2325, %v2325
    %v2346 = vmul.f32 %v2326, %v2326
    %v2347 = vmul.f32 %v2327, %v2327
    %v2348 = vadd.f32 %v2344, %v2346
    %v2349 = vrot.slane %v2348, 4
    %v2350 = vadd.f32 %v2348, %v2349
    %v2351 = vrot.slane %v2350, 2
    %v2352 = vadd.f32 %v2350, %v2351
    %v2353 = vrot.slane %v2352, 1
    %v2354 = vadd.f32 %v2352, %v2353
    %v2355 = vadd.f32 %v2345, %v2347
    %v2356 = vrot.slane %v2355, 4
    %v2357 = vadd.f32 %v2355, %v2356
    %v2358 = vrot.slane %v2357, 2
    %v2359 = vadd.f32 %v2357, %v2358
    %v2360 = vrot.slane %v2359, 1
    %v2361 = vadd.f32 %v2359, %v2360
    %v2362 = vadd.f32 %v2336, 0.0
    %v2363 = vadd.f32 %v2354, 0.0
    %2365 = vrot.lane.b32.xlu0 %v2336, 96
    %v2366 = vpop.permute.xlu0 %2365
    %v2368 = vadd.f32 %v2362, %v2366
    %2370 = vrot.lane.b32.xlu0 %v2354, 96
    %v2371 = vpop.permute.xlu0 %2370
    %v2373 = vadd.f32 %v2363, %v2371
    %2374 = vrot.lane.b32.xlu0 %v2336, 64
    %v2375 = vpop.permute.xlu0 %2374
    %v2377 = vadd.f32 %v2368, %v2375
    %2378 = vrot.lane.b32.xlu0 %v2354, 64
    %v2379 = vpop.permute.xlu0 %2378
    %v2381 = vadd.f32 %v2373, %v2379
    %2382 = vrot.lane.b32.xlu0 %v2336, 32
    %v2383 = vpop.permute.xlu0 %2382
    %v2385 = vadd.f32 %v2377, %v2383
    %2386 = vrot.lane.b32.xlu0 %v2354, 32
    %v2387 = vpop.permute.xlu0 %2386
    %v2389 = vadd.f32 %v2381, %v2387
    %v2390 = vadd.f32 %v2385, %v2343
    %v2391 = vadd.f32 %v2389, %v2361
    %2393 = vrot.lane.b32.xlu0 %v2343, 96
    %v2394 = vpop.permute.xlu0 %2393
    %v2396 = vadd.f32 %v2390, %v2394
    %2398 = vrot.lane.b32.xlu0 %v2361, 96
    %v2399 = vpop.permute.xlu0 %2398
    %v2401 = vadd.f32 %v2391, %v2399
    %2402 = vrot.lane.b32.xlu0 %v2343, 64
    %v2403 = vpop.permute.xlu0 %2402
    %v2405 = vadd.f32 %v2396, %v2403
    %2406 = vrot.lane.b32.xlu0 %v2361, 64
    %v2407 = vpop.permute.xlu0 %2406
    %v2409 = vadd.f32 %v2401, %v2407
    %2410 = vrot.lane.b32.xlu0 %v2343, 32
    %v2411 = vpop.permute.xlu0 %2410
    %v2413 = vadd.f32 %v2405, %v2411
    %2414 = vrot.lane.b32.xlu0 %v2361, 32
    %v2415 = vpop.permute.xlu0 %2414
    %v2417 = vadd.f32 %v2409, %v2415
    %v2418 = vmul.f32 %v2413, 0.0078125
    %v2419 = vmul.f32 %v2417, 0.0078125
    %v2420 = vmul.f32 %v2418, %v2418
    %v2421 = vsub.f32 %v2419, %v2420
    %v2422 = vmax.f32 %v2421, 0.0
    %v2423 = vadd.f32 %v2422, 1e-05
    %v2424 = vrsqrt.pop %v2423
    %v2425 = vmul.f32 %v2328, %v2424
    %v2426 = vmul.f32 %v2418, %v2425
    %v2427 = vsub.f32 %v2329, %v2426
    %v2429 = vlaneseq
    %v2430 = vshrl.u32 %v2429, 7
    %v2431 = vsub.s32 0, %v2430
    %v2432 = vrot.slane %v2425, %v2431
    %2433 = vrot.lane.b32.xlu0 %v2432, 32
    %v2434 = vpop.permute.xlu0 %2433
    %2436 = vrot.lane.b32.xlu0 %v2432, 64
    %v2437 = vpop.permute.xlu0 %2436
    %2439 = vrot.lane.b32.xlu0 %v2432, 96
    %v2440 = vpop.permute.xlu0 %2439
    %v2442 = vsel %vm212, %v2425, %v2434
    %v2443 = vsel %vm701, %v2442, %v2437
    %vm2444 = vcmask 785408
    %v2445 = vsel %vm2444, %v2443, %v2440
    %v2447 = vlaneseq
    %v2448 = vshrl.u32 %v2447, 7
    %v2449 = vsub.s32 0, %v2448
    %v2450 = vrot.slane %v2427, %v2449
    %2451 = vrot.lane.b32.xlu0 %v2450, 32
    %v2452 = vpop.permute.xlu0 %2451
    %2454 = vrot.lane.b32.xlu0 %v2450, 64
    %v2455 = vpop.permute.xlu0 %2454
    %2457 = vrot.lane.b32.xlu0 %v2450, 96
    %v2458 = vpop.permute.xlu0 %2457
    %v2460 = vsel %vm212, %v2427, %v2452
    %v2461 = vsel %vm701, %v2460, %v2455
    %v2462 = vsel %vm2444, %v2461, %v2458
    %v2463 = vlaneseq
    %v2464 = vshrl.u32 %v2463, 7
    %v2465 = vsub.s32 0, %v2464
    %v2466 = vrot.slane %v2445, %v2465
    %v2467 = vmul.f32 %v2324, %v2466
    %v2468 = vmul.f32 %v2325, %v2466
    %v2469 = vmul.f32 %v2326, %v2466
    %v2470 = vmul.f32 %v2327, %v2466
    %v2471 = vlaneseq
    %v2472 = vshrl.u32 %v2471, 7
    %v2473 = vsub.s32 0, %v2472
    %v2474 = vrot.slane %v2462, %v2473
    %v2475 = vadd.f32 %v2467, %v2474
    %v2476 = vadd.f32 %v2468, %v2474
    %v2477 = vadd.f32 %v2469, %v2474
    %v2478 = vadd.f32 %v2470, %v2474
    %v2479 = vmax.f32 %v2475, 0.0
    %v2480 = vmax.f32 %v2476, 0.0
    %v2481 = vmax.f32 %v2477, 0.0
    %v2482 = vmax.f32 %v2478, 0.0
    %v2483 = vpack.c.bf16 %v2481, %v2479
    %v2484 = vpack.c.bf16 %v2482, %v2480
    %v2485 = vld [vmem:[#allocation9] sm:$0xff]
    %v2486 = vld [vmem:[#allocation9 + $0x8] sm:$0xff]
    %v2487 = vld [vmem:[#allocation9 + $0x10] sm:$0xff]
    %v2488 = vld [vmem:[#allocation9 + $0x18] sm:$0xff]
    %v2489 = vld [vmem:[#allocation9 + $0x20] sm:$0xff]
    %v2490 = vld [vmem:[#allocation9 + $0x28] sm:$0xff]
    %v2491 = vld [vmem:[#allocation9 + $0x30] sm:$0xff]
    %v2492 = vld [vmem:[#allocation9 + $0x38] sm:$0xff]
    %v2493 = vld [vmem:[#allocation9 + $0x40] sm:$0xff]
    %v2494 = vld [vmem:[#allocation9 + $0x48] sm:$0xff]
    %v2495 = vld [vmem:[#allocation9 + $0x50] sm:$0xff]
    %v2496 = vld [vmem:[#allocation9 + $0x58] sm:$0xff]
    %v2497 = vld [vmem:[#allocation9 + $0x60] sm:$0xff]
    %v2498 = vld [vmem:[#allocation9 + $0x68] sm:$0xff]
    %v2499 = vld [vmem:[#allocation9 + $0x70] sm:$0xff]
    %v2500 = vld [vmem:[#allocation9 + $0x78] sm:$0xff]
    %v2501 = vld [vmem:[#allocation9 + $0x80] sm:$0xff]
    %v2502 = vld [vmem:[#allocation9 + $0x88] sm:$0xff]
    %v2503 = vld [vmem:[#allocation9 + $0x90] sm:$0xff]
    %v2504 = vld [vmem:[#allocation9 + $0x98] sm:$0xff]
    %v2505 = vld [vmem:[#allocation9 + $0xa0] sm:$0xff]
    %v2506 = vld [vmem:[#allocation9 + $0xa8] sm:$0xff]
    %v2507 = vld [vmem:[#allocation9 + $0xb0] sm:$0xff]
    %v2508 = vld [vmem:[#allocation9 + $0xb8] sm:$0xff]
    %v2509 = vld [vmem:[#allocation9 + $0xc0] sm:$0xff]
    %v2510 = vld [vmem:[#allocation9 + $0xc8] sm:$0xff]
    %v2511 = vld [vmem:[#allocation9 + $0xd0] sm:$0xff]
    %v2512 = vld [vmem:[#allocation9 + $0xd8] sm:$0xff]
    %v2513 = vld [vmem:[#allocation9 + $0xe0] sm:$0xff]
    %v2514 = vld [vmem:[#allocation9 + $0xe8] sm:$0xff]
    %v2515 = vld [vmem:[#allocation9 + $0xf0] sm:$0xff]
    %v2516 = vld [vmem:[#allocation9 + $0xf8] sm:$0xff]
    %v2517 = vld [vmem:[#allocation9 + $0x100] sm:$0xff]
    %v2518 = vld [vmem:[#allocation9 + $0x108] sm:$0xff]
    %v2519 = vld [vmem:[#allocation9 + $0x110] sm:$0xff]
    %v2520 = vld [vmem:[#allocation9 + $0x118] sm:$0xff]
    %v2521 = vld [vmem:[#allocation9 + $0x120] sm:$0xff]
    %v2522 = vld [vmem:[#allocation9 + $0x128] sm:$0xff]
    %v2523 = vld [vmem:[#allocation9 + $0x130] sm:$0xff]
    %v2524 = vld [vmem:[#allocation9 + $0x138] sm:$0xff]
    %v2525 = vld [vmem:[#allocation9 + $0x140] sm:$0xff]
    %v2526 = vld [vmem:[#allocation9 + $0x148] sm:$0xff]
    %v2527 = vld [vmem:[#allocation9 + $0x150] sm:$0xff]
    %v2528 = vld [vmem:[#allocation9 + $0x158] sm:$0xff]
    %v2529 = vld [vmem:[#allocation9 + $0x160] sm:$0xff]
    %v2530 = vld [vmem:[#allocation9 + $0x168] sm:$0xff]
    %v2531 = vld [vmem:[#allocation9 + $0x170] sm:$0xff]
    %v2532 = vld [vmem:[#allocation9 + $0x178] sm:$0xff]
    %v2533 = vld [vmem:[#allocation9 + $0x180] sm:$0xff]
    %v2534 = vld [vmem:[#allocation9 + $0x188] sm:$0xff]
    %v2535 = vld [vmem:[#allocation9 + $0x190] sm:$0xff]
    %v2536 = vld [vmem:[#allocation9 + $0x198] sm:$0xff]
    %v2537 = vld [vmem:[#allocation9 + $0x1a0] sm:$0xff]
    %v2538 = vld [vmem:[#allocation9 + $0x1a8] sm:$0xff]
    %v2539 = vld [vmem:[#allocation9 + $0x1b0] sm:$0xff]
    %v2540 = vld [vmem:[#allocation9 + $0x1b8] sm:$0xff]
    %v2541 = vld [vmem:[#allocation9 + $0x1c0] sm:$0xff]
    %v2542 = vld [vmem:[#allocation9 + $0x1c8] sm:$0xff]
    %v2543 = vld [vmem:[#allocation9 + $0x1d0] sm:$0xff]
    %v2544 = vld [vmem:[#allocation9 + $0x1d8] sm:$0xff]
    %v2545 = vld [vmem:[#allocation9 + $0x1e0] sm:$0xff]
    %v2546 = vld [vmem:[#allocation9 + $0x1e8] sm:$0xff]
    %v2547 = vld [vmem:[#allocation9 + $0x1f0] sm:$0xff]
    %v2548 = vld [vmem:[#allocation9 + $0x1f8] sm:$0xff]
    %v2549 = vld [vmem:[#allocation9 + $0x200] sm:$0xff]
    %v2550 = vld [vmem:[#allocation9 + $0x208] sm:$0xff]
    %v2551 = vld [vmem:[#allocation9 + $0x210] sm:$0xff]
    %v2552 = vld [vmem:[#allocation9 + $0x218] sm:$0xff]
    %v2553 = vld [vmem:[#allocation9 + $0x220] sm:$0xff]
    %v2554 = vld [vmem:[#allocation9 + $0x228] sm:$0xff]
    %v2555 = vld [vmem:[#allocation9 + $0x230] sm:$0xff]
    %v2556 = vld [vmem:[#allocation9 + $0x238] sm:$0xff]
    %v2557 = vld [vmem:[#allocation9 + $0x240] sm:$0xff]
    %v2558 = vld [vmem:[#allocation9 + $0x248] sm:$0xff]
    %v2559 = vld [vmem:[#allocation9 + $0x250] sm:$0xff]
    %v2560 = vld [vmem:[#allocation9 + $0x258] sm:$0xff]
    %v2561 = vld [vmem:[#allocation9 + $0x260] sm:$0xff]
    %v2562 = vld [vmem:[#allocation9 + $0x268] sm:$0xff]
    %v2563 = vld [vmem:[#allocation9 + $0x270] sm:$0xff]
    %v2564 = vld [vmem:[#allocation9 + $0x278] sm:$0xff]
    %v2565 = vld [vmem:[#allocation9 + $0x280] sm:$0xff]
    %v2566 = vld [vmem:[#allocation9 + $0x288] sm:$0xff]
    %v2567 = vld [vmem:[#allocation9 + $0x290] sm:$0xff]
    %v2568 = vld [vmem:[#allocation9 + $0x298] sm:$0xff]
    %v2569 = vld [vmem:[#allocation9 + $0x2a0] sm:$0xff]
    %v2570 = vld [vmem:[#allocation9 + $0x2a8] sm:$0xff]
    %v2571 = vld [vmem:[#allocation9 + $0x2b0] sm:$0xff]
    %v2572 = vld [vmem:[#allocation9 + $0x2b8] sm:$0xff]
    %v2573 = vld [vmem:[#allocation9 + $0x2c0] sm:$0xff]
    %v2574 = vld [vmem:[#allocation9 + $0x2c8] sm:$0xff]
    %v2575 = vld [vmem:[#allocation9 + $0x2d0] sm:$0xff]
    %v2576 = vld [vmem:[#allocation9 + $0x2d8] sm:$0xff]
    %v2577 = vld [vmem:[#allocation9 + $0x2e0] sm:$0xff]
    %v2578 = vld [vmem:[#allocation9 + $0x2e8] sm:$0xff]
    %v2579 = vld [vmem:[#allocation9 + $0x2f0] sm:$0xff]
    %v2580 = vld [vmem:[#allocation9 + $0x2f8] sm:$0xff]
    %v2581 = vld [vmem:[#allocation9 + $0x300] sm:$0xff]
    %v2582 = vld [vmem:[#allocation9 + $0x308] sm:$0xff]
    %v2583 = vld [vmem:[#allocation9 + $0x310] sm:$0xff]
    %v2584 = vld [vmem:[#allocation9 + $0x318] sm:$0xff]
    %v2585 = vld [vmem:[#allocation9 + $0x320] sm:$0xff]
    %v2586 = vld [vmem:[#allocation9 + $0x328] sm:$0xff]
    %v2587 = vld [vmem:[#allocation9 + $0x330] sm:$0xff]
    %v2588 = vld [vmem:[#allocation9 + $0x338] sm:$0xff]
    %v2589 = vld [vmem:[#allocation9 + $0x340] sm:$0xff]
    %v2590 = vld [vmem:[#allocation9 + $0x348] sm:$0xff]
    %v2591 = vld [vmem:[#allocation9 + $0x350] sm:$0xff]
    %v2592 = vld [vmem:[#allocation9 + $0x358] sm:$0xff]
    %v2593 = vld [vmem:[#allocation9 + $0x360] sm:$0xff]
    %v2594 = vld [vmem:[#allocation9 + $0x368] sm:$0xff]
    %v2595 = vld [vmem:[#allocation9 + $0x370] sm:$0xff]
    %v2596 = vld [vmem:[#allocation9 + $0x378] sm:$0xff]
    %v2597 = vld [vmem:[#allocation9 + $0x380] sm:$0xff]
    %v2598 = vld [vmem:[#allocation9 + $0x388] sm:$0xff]
    %v2599 = vld [vmem:[#allocation9 + $0x390] sm:$0xff]
    %v2600 = vld [vmem:[#allocation9 + $0x398] sm:$0xff]
    %v2601 = vld [vmem:[#allocation9 + $0x3a0] sm:$0xff]
    %v2602 = vld [vmem:[#allocation9 + $0x3a8] sm:$0xff]
    %v2603 = vld [vmem:[#allocation9 + $0x3b0] sm:$0xff]
    %v2604 = vld [vmem:[#allocation9 + $0x3b8] sm:$0xff]
    %v2605 = vld [vmem:[#allocation9 + $0x3c0] sm:$0xff]
    %v2606 = vld [vmem:[#allocation9 + $0x3c8] sm:$0xff]
    %v2607 = vld [vmem:[#allocation9 + $0x3d0] sm:$0xff]
    %v2608 = vld [vmem:[#allocation9 + $0x3d8] sm:$0xff]
    %v2609 = vld [vmem:[#allocation9 + $0x3e0] sm:$0xff]
    %v2610 = vld [vmem:[#allocation9 + $0x3e8] sm:$0xff]
    %v2611 = vld [vmem:[#allocation9 + $0x3f0] sm:$0xff]
    %v2612 = vld [vmem:[#allocation9 + $0x3f8] sm:$0xff]
    %v2741 = vunpack.c.l.b16 %v2485
    %v2742 = vunpack.c.h.b16 %v2485
    %v2743 = vunpack.c.l.b16 %v2486
    %v2744 = vunpack.c.h.b16 %v2486
    %v2745 = vunpack.c.l.b16 %v2487
    %v2746 = vunpack.c.h.b16 %v2487
    %v2747 = vunpack.c.l.b16 %v2488
    %v2748 = vunpack.c.h.b16 %v2488
    %v2749 = vunpack.c.l.b16 %v2489
    %v2750 = vunpack.c.h.b16 %v2489
    %v2751 = vunpack.c.l.b16 %v2490
    %v2752 = vunpack.c.h.b16 %v2490
    %v2753 = vunpack.c.l.b16 %v2491
    %v2754 = vunpack.c.h.b16 %v2491
    %v2755 = vunpack.c.l.b16 %v2492
    %v2756 = vunpack.c.h.b16 %v2492
    %v2757 = vunpack.c.l.b16 %v2493
    %v2758 = vunpack.c.h.b16 %v2493
    %v2759 = vunpack.c.l.b16 %v2494
    %v2760 = vunpack.c.h.b16 %v2494
    %v2761 = vunpack.c.l.b16 %v2495
    %v2762 = vunpack.c.h.b16 %v2495
    %v2763 = vunpack.c.l.b16 %v2496
    %v2764 = vunpack.c.h.b16 %v2496
    %v2765 = vunpack.c.l.b16 %v2497
    %v2766 = vunpack.c.h.b16 %v2497
    %v2767 = vunpack.c.l.b16 %v2498
    %v2768 = vunpack.c.h.b16 %v2498
    %v2769 = vunpack.c.l.b16 %v2499
    %v2770 = vunpack.c.h.b16 %v2499
    %v2771 = vunpack.c.l.b16 %v2500
    %v2772 = vunpack.c.h.b16 %v2500
    %v2773 = vunpack.c.l.b16 %v2501
    %v2774 = vunpack.c.h.b16 %v2501
    %v2775 = vunpack.c.l.b16 %v2502
    %v2776 = vunpack.c.h.b16 %v2502
    %v2777 = vunpack.c.l.b16 %v2503
    %v2778 = vunpack.c.h.b16 %v2503
    %v2779 = vunpack.c.l.b16 %v2504
    %v2780 = vunpack.c.h.b16 %v2504
    %v2781 = vunpack.c.l.b16 %v2505
    %v2782 = vunpack.c.h.b16 %v2505
    %v2783 = vunpack.c.l.b16 %v2506
    %v2784 = vunpack.c.h.b16 %v2506
    %v2785 = vunpack.c.l.b16 %v2507
    %v2786 = vunpack.c.h.b16 %v2507
    %v2787 = vunpack.c.l.b16 %v2508
    %v2788 = vunpack.c.h.b16 %v2508
    %v2789 = vunpack.c.l.b16 %v2509
    %v2790 = vunpack.c.h.b16 %v2509
    %v2791 = vunpack.c.l.b16 %v2510
    %v2792 = vunpack.c.h.b16 %v2510
    %v2793 = vunpack.c.l.b16 %v2511
    %v2794 = vunpack.c.h.b16 %v2511
    %v2795 = vunpack.c.l.b16 %v2512
    %v2796 = vunpack.c.h.b16 %v2512
    %v2797 = vunpack.c.l.b16 %v2513
    %v2798 = vunpack.c.h.b16 %v2513
    %v2799 = vunpack.c.l.b16 %v2514
    %v2800 = vunpack.c.h.b16 %v2514
    %v2801 = vunpack.c.l.b16 %v2515
    %v2802 = vunpack.c.h.b16 %v2515
    %v2803 = vunpack.c.l.b16 %v2516
    %v2804 = vunpack.c.h.b16 %v2516
    %v2805 = vunpack.c.l.b16 %v2517
    %v2806 = vunpack.c.h.b16 %v2517
    %v2807 = vunpack.c.l.b16 %v2518
    %v2808 = vunpack.c.h.b16 %v2518
    %v2809 = vunpack.c.l.b16 %v2519
    %v2810 = vunpack.c.h.b16 %v2519
    %v2811 = vunpack.c.l.b16 %v2520
    %v2812 = vunpack.c.h.b16 %v2520
    %v2813 = vunpack.c.l.b16 %v2521
    %v2814 = vunpack.c.h.b16 %v2521
    %v2815 = vunpack.c.l.b16 %v2522
    %v2816 = vunpack.c.h.b16 %v2522
    %v2817 = vunpack.c.l.b16 %v2523
    %v2818 = vunpack.c.h.b16 %v2523
    %v2819 = vunpack.c.l.b16 %v2524
    %v2820 = vunpack.c.h.b16 %v2524
    %v2821 = vunpack.c.l.b16 %v2525
    %v2822 = vunpack.c.h.b16 %v2525
    %v2823 = vunpack.c.l.b16 %v2526
    %v2824 = vunpack.c.h.b16 %v2526
    %v2825 = vunpack.c.l.b16 %v2527
    %v2826 = vunpack.c.h.b16 %v2527
    %v2827 = vunpack.c.l.b16 %v2528
    %v2828 = vunpack.c.h.b16 %v2528
    %v2829 = vunpack.c.l.b16 %v2529
    %v2830 = vunpack.c.h.b16 %v2529
    %v2831 = vunpack.c.l.b16 %v2530
    %v2832 = vunpack.c.h.b16 %v2530
    %v2833 = vunpack.c.l.b16 %v2531
    %v2834 = vunpack.c.h.b16 %v2531
    %v2835 = vunpack.c.l.b16 %v2532
    %v2836 = vunpack.c.h.b16 %v2532
    %v2837 = vunpack.c.l.b16 %v2533
    %v2838 = vunpack.c.h.b16 %v2533
    %v2839 = vunpack.c.l.b16 %v2534
    %v2840 = vunpack.c.h.b16 %v2534
    %v2841 = vunpack.c.l.b16 %v2535
    %v2842 = vunpack.c.h.b16 %v2535
    %v2843 = vunpack.c.l.b16 %v2536
    %v2844 = vunpack.c.h.b16 %v2536
    %v2845 = vunpack.c.l.b16 %v2537
    %v2846 = vunpack.c.h.b16 %v2537
    %v2847 = vunpack.c.l.b16 %v2538
    %v2848 = vunpack.c.h.b16 %v2538
    %v2849 = vunpack.c.l.b16 %v2539
    %v2850 = vunpack.c.h.b16 %v2539
    %v2851 = vunpack.c.l.b16 %v2540
    %v2852 = vunpack.c.h.b16 %v2540
    %v2853 = vunpack.c.l.b16 %v2541
    %v2854 = vunpack.c.h.b16 %v2541
    %v2855 = vunpack.c.l.b16 %v2542
    %v2856 = vunpack.c.h.b16 %v2542
    %v2857 = vunpack.c.l.b16 %v2543
    %v2858 = vunpack.c.h.b16 %v2543
    %v2859 = vunpack.c.l.b16 %v2544
    %v2860 = vunpack.c.h.b16 %v2544
    %v2861 = vunpack.c.l.b16 %v2545
    %v2862 = vunpack.c.h.b16 %v2545
    %v2863 = vunpack.c.l.b16 %v2546
    %v2864 = vunpack.c.h.b16 %v2546
    %v2865 = vunpack.c.l.b16 %v2547
    %v2866 = vunpack.c.h.b16 %v2547
    %v2867 = vunpack.c.l.b16 %v2548
    %v2868 = vunpack.c.h.b16 %v2548
    %v2869 = vunpack.c.l.b16 %v2549
    %v2870 = vunpack.c.h.b16 %v2549
    %v2871 = vunpack.c.l.b16 %v2550
    %v2872 = vunpack.c.h.b16 %v2550
    %v2873 = vunpack.c.l.b16 %v2551
    %v2874 = vunpack.c.h.b16 %v2551
    %v2875 = vunpack.c.l.b16 %v2552
    %v2876 = vunpack.c.h.b16 %v2552
    %v2877 = vunpack.c.l.b16 %v2553
    %v2878 = vunpack.c.h.b16 %v2553
    %v2879 = vunpack.c.l.b16 %v2554
    %v2880 = vunpack.c.h.b16 %v2554
    %v2881 = vunpack.c.l.b16 %v2555
    %v2882 = vunpack.c.h.b16 %v2555
    %v2883 = vunpack.c.l.b16 %v2556
    %v2884 = vunpack.c.h.b16 %v2556
    %v2885 = vunpack.c.l.b16 %v2557
    %v2886 = vunpack.c.h.b16 %v2557
    %v2887 = vunpack.c.l.b16 %v2558
    %v2888 = vunpack.c.h.b16 %v2558
    %v2889 = vunpack.c.l.b16 %v2559
    %v2890 = vunpack.c.h.b16 %v2559
    %v2891 = vunpack.c.l.b16 %v2560
    %v2892 = vunpack.c.h.b16 %v2560
    %v2893 = vunpack.c.l.b16 %v2561
    %v2894 = vunpack.c.h.b16 %v2561
    %v2895 = vunpack.c.l.b16 %v2562
    %v2896 = vunpack.c.h.b16 %v2562
    %v2897 = vunpack.c.l.b16 %v2563
    %v2898 = vunpack.c.h.b16 %v2563
    %v2899 = vunpack.c.l.b16 %v2564
    %v2900 = vunpack.c.h.b16 %v2564
    %v2901 = vunpack.c.l.b16 %v2565
    %v2902 = vunpack.c.h.b16 %v2565
    %v2903 = vunpack.c.l.b16 %v2566
    %v2904 = vunpack.c.h.b16 %v2566
    %v2905 = vunpack.c.l.b16 %v2567
    %v2906 = vunpack.c.h.b16 %v2567
    %v2907 = vunpack.c.l.b16 %v2568
    %v2908 = vunpack.c.h.b16 %v2568
    %v2909 = vunpack.c.l.b16 %v2569
    %v2910 = vunpack.c.h.b16 %v2569
    %v2911 = vunpack.c.l.b16 %v2570
    %v2912 = vunpack.c.h.b16 %v2570
    %v2913 = vunpack.c.l.b16 %v2571
    %v2914 = vunpack.c.h.b16 %v2571
    %v2915 = vunpack.c.l.b16 %v2572
    %v2916 = vunpack.c.h.b16 %v2572
    %v2917 = vunpack.c.l.b16 %v2573
    %v2918 = vunpack.c.h.b16 %v2573
    %v2919 = vunpack.c.l.b16 %v2574
    %v2920 = vunpack.c.h.b16 %v2574
    %v2921 = vunpack.c.l.b16 %v2575
    %v2922 = vunpack.c.h.b16 %v2575
    %v2923 = vunpack.c.l.b16 %v2576
    %v2924 = vunpack.c.h.b16 %v2576
    %v2925 = vunpack.c.l.b16 %v2577
    %v2926 = vunpack.c.h.b16 %v2577
    %v2927 = vunpack.c.l.b16 %v2578
    %v2928 = vunpack.c.h.b16 %v2578
    %v2929 = vunpack.c.l.b16 %v2579
    %v2930 = vunpack.c.h.b16 %v2579
    %v2931 = vunpack.c.l.b16 %v2580
    %v2932 = vunpack.c.h.b16 %v2580
    %v2933 = vunpack.c.l.b16 %v2581
    %v2934 = vunpack.c.h.b16 %v2581
    %v2935 = vunpack.c.l.b16 %v2582
    %v2936 = vunpack.c.h.b16 %v2582
    %v2937 = vunpack.c.l.b16 %v2583
    %v2938 = vunpack.c.h.b16 %v2583
    %v2939 = vunpack.c.l.b16 %v2584
    %v2940 = vunpack.c.h.b16 %v2584
    %v2941 = vunpack.c.l.b16 %v2585
    %v2942 = vunpack.c.h.b16 %v2585
    %v2943 = vunpack.c.l.b16 %v2586
    %v2944 = vunpack.c.h.b16 %v2586
    %v2945 = vunpack.c.l.b16 %v2587
    %v2946 = vunpack.c.h.b16 %v2587
    %v2947 = vunpack.c.l.b16 %v2588
    %v2948 = vunpack.c.h.b16 %v2588
    %v2949 = vunpack.c.l.b16 %v2589
    %v2950 = vunpack.c.h.b16 %v2589
    %v2951 = vunpack.c.l.b16 %v2590
    %v2952 = vunpack.c.h.b16 %v2590
    %v2953 = vunpack.c.l.b16 %v2591
    %v2954 = vunpack.c.h.b16 %v2591
    %v2955 = vunpack.c.l.b16 %v2592
    %v2956 = vunpack.c.h.b16 %v2592
    %v2957 = vunpack.c.l.b16 %v2593
    %v2958 = vunpack.c.h.b16 %v2593
    %v2959 = vunpack.c.l.b16 %v2594
    %v2960 = vunpack.c.h.b16 %v2594
    %v2961 = vunpack.c.l.b16 %v2595
    %v2962 = vunpack.c.h.b16 %v2595
    %v2963 = vunpack.c.l.b16 %v2596
    %v2964 = vunpack.c.h.b16 %v2596
    %v2965 = vunpack.c.l.b16 %v2597
    %v2966 = vunpack.c.h.b16 %v2597
    %v2967 = vunpack.c.l.b16 %v2598
    %v2968 = vunpack.c.h.b16 %v2598
    %v2969 = vunpack.c.l.b16 %v2599
    %v2970 = vunpack.c.h.b16 %v2599
    %v2971 = vunpack.c.l.b16 %v2600
    %v2972 = vunpack.c.h.b16 %v2600
    %v2973 = vunpack.c.l.b16 %v2601
    %v2974 = vunpack.c.h.b16 %v2601
    %v2975 = vunpack.c.l.b16 %v2602
    %v2976 = vunpack.c.h.b16 %v2602
    %v2977 = vunpack.c.l.b16 %v2603
    %v2978 = vunpack.c.h.b16 %v2603
    %v2979 = vunpack.c.l.b16 %v2604
    %v2980 = vunpack.c.h.b16 %v2604
    %v2981 = vunpack.c.l.b16 %v2605
    %v2982 = vunpack.c.h.b16 %v2605
    %v2983 = vunpack.c.l.b16 %v2606
    %v2984 = vunpack.c.h.b16 %v2606
    %v2985 = vunpack.c.l.b16 %v2607
    %v2986 = vunpack.c.h.b16 %v2607
    %v2987 = vunpack.c.l.b16 %v2608
    %v2988 = vunpack.c.h.b16 %v2608
    %v2989 = vunpack.c.l.b16 %v2609
    %v2990 = vunpack.c.h.b16 %v2609
    %v2991 = vunpack.c.l.b16 %v2610
    %v2992 = vunpack.c.h.b16 %v2610
    %v2993 = vunpack.c.l.b16 %v2611
    %v2994 = vunpack.c.h.b16 %v2611
    %v2995 = vunpack.c.l.b16 %v2612
    %v2996 = vunpack.c.h.b16 %v2612
    %v2997 = vpack.c.b16 %v2749, %v2741
    %v2998 = vpack.c.b16 %v2750, %v2742
    %v2999 = vpack.c.b16 %v2751, %v2743
    %v3000 = vpack.c.b16 %v2752, %v2744
    %v3001 = vpack.c.b16 %v2753, %v2745
    %v3002 = vpack.c.b16 %v2754, %v2746
    %v3003 = vpack.c.b16 %v2755, %v2747
    %v3004 = vpack.c.b16 %v2756, %v2748
    %v3005 = vpack.c.b16 %v2765, %v2757
    %v3006 = vpack.c.b16 %v2766, %v2758
    %v3007 = vpack.c.b16 %v2767, %v2759
    %v3008 = vpack.c.b16 %v2768, %v2760
    %v3009 = vpack.c.b16 %v2769, %v2761
    %v3010 = vpack.c.b16 %v2770, %v2762
    %v3011 = vpack.c.b16 %v2771, %v2763
    %v3012 = vpack.c.b16 %v2772, %v2764
    %v3013 = vpack.c.b16 %v2781, %v2773
    %v3014 = vpack.c.b16 %v2782, %v2774
    %v3015 = vpack.c.b16 %v2783, %v2775
    %v3016 = vpack.c.b16 %v2784, %v2776
    %v3017 = vpack.c.b16 %v2785, %v2777
    %v3018 = vpack.c.b16 %v2786, %v2778
    %v3019 = vpack.c.b16 %v2787, %v2779
    %v3020 = vpack.c.b16 %v2788, %v2780
    %v3021 = vpack.c.b16 %v2797, %v2789
    %v3022 = vpack.c.b16 %v2798, %v2790
    %v3023 = vpack.c.b16 %v2799, %v2791
    %v3024 = vpack.c.b16 %v2800, %v2792
    %v3025 = vpack.c.b16 %v2801, %v2793
    %v3026 = vpack.c.b16 %v2802, %v2794
    %v3027 = vpack.c.b16 %v2803, %v2795
    %v3028 = vpack.c.b16 %v2804, %v2796
    %v3029 = vpack.c.b16 %v2813, %v2805
    %v3030 = vpack.c.b16 %v2814, %v2806
    %v3031 = vpack.c.b16 %v2815, %v2807
    %v3032 = vpack.c.b16 %v2816, %v2808
    %v3033 = vpack.c.b16 %v2817, %v2809
    %v3034 = vpack.c.b16 %v2818, %v2810
    %v3035 = vpack.c.b16 %v2819, %v2811
    %v3036 = vpack.c.b16 %v2820, %v2812
    %v3037 = vpack.c.b16 %v2829, %v2821
    %v3038 = vpack.c.b16 %v2830, %v2822
    %v3039 = vpack.c.b16 %v2831, %v2823
    %v3040 = vpack.c.b16 %v2832, %v2824
    %v3041 = vpack.c.b16 %v2833, %v2825
    %v3042 = vpack.c.b16 %v2834, %v2826
    %v3043 = vpack.c.b16 %v2835, %v2827
    %v3044 = vpack.c.b16 %v2836, %v2828
    %v3045 = vpack.c.b16 %v2845, %v2837
    %v3046 = vpack.c.b16 %v2846, %v2838
    %v3047 = vpack.c.b16 %v2847, %v2839
    %v3048 = vpack.c.b16 %v2848, %v2840
    %v3049 = vpack.c.b16 %v2849, %v2841
    %v3050 = vpack.c.b16 %v2850, %v2842
    %v3051 = vpack.c.b16 %v2851, %v2843
    %v3052 = vpack.c.b16 %v2852, %v2844
    %v3053 = vpack.c.b16 %v2861, %v2853
    %v3054 = vpack.c.b16 %v2862, %v2854
    %v3055 = vpack.c.b16 %v2863, %v2855
    %v3056 = vpack.c.b16 %v2864, %v2856
    %v3057 = vpack.c.b16 %v2865, %v2857
    %v3058 = vpack.c.b16 %v2866, %v2858
    %v3059 = vpack.c.b16 %v2867, %v2859
    %v3060 = vpack.c.b16 %v2868, %v2860
    %v3061 = vpack.c.b16 %v2877, %v2869
    %v3062 = vpack.c.b16 %v2878, %v2870
    %v3063 = vpack.c.b16 %v2879, %v2871
    %v3064 = vpack.c.b16 %v2880, %v2872
    %v3065 = vpack.c.b16 %v2881, %v2873
    %v3066 = vpack.c.b16 %v2882, %v2874
    %v3067 = vpack.c.b16 %v2883, %v2875
    %v3068 = vpack.c.b16 %v2884, %v2876
    %v3069 = vpack.c.b16 %v2893, %v2885
    %v3070 = vpack.c.b16 %v2894, %v2886
    %v3071 = vpack.c.b16 %v2895, %v2887
    %v3072 = vpack.c.b16 %v2896, %v2888
    %v3073 = vpack.c.b16 %v2897, %v2889
    %v3074 = vpack.c.b16 %v2898, %v2890
    %v3075 = vpack.c.b16 %v2899, %v2891
    %v3076 = vpack.c.b16 %v2900, %v2892
    %v3077 = vpack.c.b16 %v2909, %v2901
    %v3078 = vpack.c.b16 %v2910, %v2902
    %v3079 = vpack.c.b16 %v2911, %v2903
    %v3080 = vpack.c.b16 %v2912, %v2904
    %v3081 = vpack.c.b16 %v2913, %v2905
    %v3082 = vpack.c.b16 %v2914, %v2906
    %v3083 = vpack.c.b16 %v2915, %v2907
    %v3084 = vpack.c.b16 %v2916, %v2908
    %v3085 = vpack.c.b16 %v2925, %v2917
    %v3086 = vpack.c.b16 %v2926, %v2918
    %v3087 = vpack.c.b16 %v2927, %v2919
    %v3088 = vpack.c.b16 %v2928, %v2920
    %v3089 = vpack.c.b16 %v2929, %v2921
    %v3090 = vpack.c.b16 %v2930, %v2922
    %v3091 = vpack.c.b16 %v2931, %v2923
    %v3092 = vpack.c.b16 %v2932, %v2924
    %v3093 = vpack.c.b16 %v2941, %v2933
    %v3094 = vpack.c.b16 %v2942, %v2934
    %v3095 = vpack.c.b16 %v2943, %v2935
    %v3096 = vpack.c.b16 %v2944, %v2936
    %v3097 = vpack.c.b16 %v2945, %v2937
    %v3098 = vpack.c.b16 %v2946, %v2938
    %v3099 = vpack.c.b16 %v2947, %v2939
    %v3100 = vpack.c.b16 %v2948, %v2940
    %v3101 = vpack.c.b16 %v2957, %v2949
    %v3102 = vpack.c.b16 %v2958, %v2950
    %v3103 = vpack.c.b16 %v2959, %v2951
    %v3104 = vpack.c.b16 %v2960, %v2952
    %v3105 = vpack.c.b16 %v2961, %v2953
    %v3106 = vpack.c.b16 %v2962, %v2954
    %v3107 = vpack.c.b16 %v2963, %v2955
    %v3108 = vpack.c.b16 %v2964, %v2956
    %v3109 = vpack.c.b16 %v2973, %v2965
    %v3110 = vpack.c.b16 %v2974, %v2966
    %v3111 = vpack.c.b16 %v2975, %v2967
    %v3112 = vpack.c.b16 %v2976, %v2968
    %v3113 = vpack.c.b16 %v2977, %v2969
    %v3114 = vpack.c.b16 %v2978, %v2970
    %v3115 = vpack.c.b16 %v2979, %v2971
    %v3116 = vpack.c.b16 %v2980, %v2972
    %v3117 = vpack.c.b16 %v2989, %v2981
    %v3118 = vpack.c.b16 %v2990, %v2982
    %v3119 = vpack.c.b16 %v2991, %v2983
    %v3120 = vpack.c.b16 %v2992, %v2984
    %v3121 = vpack.c.b16 %v2993, %v2985
    %v3122 = vpack.c.b16 %v2994, %v2986
    %v3123 = vpack.c.b16 %v2995, %v2987
    %v3124 = vpack.c.b16 %v2996, %v2988
    %3253 = vmatprep.subr.bf16.mxu0 %v3054
    %3254 = vmatpush1.bf16.msra.mxu0 %v3053
    %3255 = vmatprep.subr.bf16.mxu0 %v3046
    %3256 = vmatpush1.bf16.msra.mxu0 %v3045
    %3257 = vmatprep.subr.bf16.mxu0 %v3038
    %3258 = vmatpush1.bf16.msra.mxu0 %v3037
    %3259 = vmatprep.subr.bf16.mxu0 %v3030
    %3260 = vmatpush1.bf16.msra.mxu0 %v3029
    %3261 = vmatprep.subr.bf16.mxu0 %v3022
    %3262 = vmatpush1.bf16.msra.mxu0 %v3021
    %3263 = vmatprep.subr.bf16.mxu0 %v3014
    %3264 = vmatpush1.bf16.msra.mxu0 %v3013
    %3265 = vmatprep.subr.bf16.mxu0 %v3006
    %3266 = vmatpush1.bf16.msra.mxu0 %v3005
    %3267 = vmatprep.subr.bf16.mxu0 %v2998
    %3268 = vmatpush1.bf16.msra.mxu0 %v2997
    %3269 = vmatprep.subr.bf16.mxu0 %v3118
    %3270 = vmatpush2.bf16.msra.mxu0 %v3117
    %3271 = vmatprep.subr.bf16.mxu0 %v3110
    %3272 = vmatpush2.bf16.msra.mxu0 %v3109
    %3273 = vmatprep.subr.bf16.mxu0 %v3102
    %3274 = vmatpush2.bf16.msra.mxu0 %v3101
    %3275 = vmatprep.subr.bf16.mxu0 %v3094
    %3276 = vmatpush2.bf16.msra.mxu0 %v3093
    %3277 = vmatprep.subr.bf16.mxu0 %v3086
    %3278 = vmatpush2.bf16.msra.mxu0 %v3085
    %3279 = vmatprep.subr.bf16.mxu0 %v3078
    %3280 = vmatpush2.bf16.msra.mxu0 %v3077
    %3281 = vmatprep.subr.bf16.mxu0 %v3070
    %3282 = vmatpush2.bf16.msra.mxu0 %v3069
    %3283 = vmatprep.subr.bf16.mxu0 %v3062
    %3284 = vmatpush2.bf16.msra.mxu0 %v3061
    %3285 = vmatprep.mubr.bf16.mxu0 %v2484
    %3286 = vmatmul.mubr.bf16.gmra.mxu0 %v2483
    %v3287 = vpop.f32.mrf.mxu0
    %v3288 = vadd.f32 0.0, %v3287
    %v3289 = vpop.f32.mrf.mxu0
    %v3290 = vadd.f32 0.0, %v3289
    %v3291 = vpop.f32.mrf.mxu0
    %v3292 = vadd.f32 0.0, %v3291
    %v3293 = vpop.f32.mrf.mxu0
    %v3294 = vadd.f32 0.0, %v3293
    %3295 = vdwg.mxu0
    %3296 = vmatprep.subr.bf16.mxu0 %v3056
    %3297 = vmatpush1.bf16.msra.mxu0 %v3055
    %3298 = vmatprep.subr.bf16.mxu0 %v3048
    %3299 = vmatpush1.bf16.msra.mxu0 %v3047
    %3300 = vmatprep.subr.bf16.mxu0 %v3040
    %3301 = vmatpush1.bf16.msra.mxu0 %v3039
    %3302 = vmatprep.subr.bf16.mxu0 %v3032
    %3303 = vmatpush1.bf16.msra.mxu0 %v3031
    %3304 = vmatprep.subr.bf16.mxu0 %v3024
    %3305 = vmatpush1.bf16.msra.mxu0 %v3023
    %3306 = vmatprep.subr.bf16.mxu0 %v3016
    %3307 = vmatpush1.bf16.msra.mxu0 %v3015
    %3308 = vmatprep.subr.bf16.mxu0 %v3008
    %3309 = vmatpush1.bf16.msra.mxu0 %v3007
    %3310 = vmatprep.subr.bf16.mxu0 %v3000
    %3311 = vmatpush1.bf16.msra.mxu0 %v2999
    %3312 = vmatprep.subr.bf16.mxu0 %v3120
    %3313 = vmatpush2.bf16.msra.mxu0 %v3119
    %3314 = vmatprep.subr.bf16.mxu0 %v3112
    %3315 = vmatpush2.bf16.msra.mxu0 %v3111
    %3316 = vmatprep.subr.bf16.mxu0 %v3104
    %3317 = vmatpush2.bf16.msra.mxu0 %v3103
    %3318 = vmatprep.subr.bf16.mxu0 %v3096
    %3319 = vmatpush2.bf16.msra.mxu0 %v3095
    %3320 = vmatprep.subr.bf16.mxu0 %v3088
    %3321 = vmatpush2.bf16.msra.mxu0 %v3087
    %3322 = vmatprep.subr.bf16.mxu0 %v3080
    %3323 = vmatpush2.bf16.msra.mxu0 %v3079
    %3324 = vmatprep.subr.bf16.mxu0 %v3072
    %3325 = vmatpush2.bf16.msra.mxu0 %v3071
    %3326 = vmatprep.subr.bf16.mxu0 %v3064
    %3327 = vmatpush2.bf16.msra.mxu0 %v3063
    %3328 = vmatprep.mubr.bf16.mxu0 %v2484
    %3329 = vmatmul.mubr.bf16.gmra.mxu0 %v2483
    %v3330 = vpop.f32.mrf.mxu0
    %v3331 = vadd.f32 0.0, %v3330
    %v3332 = vpop.f32.mrf.mxu0
    %v3333 = vadd.f32 0.0, %v3332
    %v3334 = vpop.f32.mrf.mxu0
    %v3335 = vadd.f32 0.0, %v3334
    %v3336 = vpop.f32.mrf.mxu0
    %v3337 = vadd.f32 0.0, %v3336
    %3338 = vdwg.mxu0
    %3339 = vmatprep.subr.bf16.mxu0 %v3058
    %3340 = vmatpush1.bf16.msra.mxu0 %v3057
    %3341 = vmatprep.subr.bf16.mxu0 %v3050
    %3342 = vmatpush1.bf16.msra.mxu0 %v3049
    %3343 = vmatprep.subr.bf16.mxu0 %v3042
    %3344 = vmatpush1.bf16.msra.mxu0 %v3041
    %3345 = vmatprep.subr.bf16.mxu0 %v3034
    %3346 = vmatpush1.bf16.msra.mxu0 %v3033
    %3347 = vmatprep.subr.bf16.mxu0 %v3026
    %3348 = vmatpush1.bf16.msra.mxu0 %v3025
    %3349 = vmatprep.subr.bf16.mxu0 %v3018
    %3350 = vmatpush1.bf16.msra.mxu0 %v3017
    %3351 = vmatprep.subr.bf16.mxu0 %v3010
    %3352 = vmatpush1.bf16.msra.mxu0 %v3009
    %3353 = vmatprep.subr.bf16.mxu0 %v3002
    %3354 = vmatpush1.bf16.msra.mxu0 %v3001
    %3355 = vmatprep.subr.bf16.mxu0 %v3122
    %3356 = vmatpush2.bf16.msra.mxu0 %v3121
    %3357 = vmatprep.subr.bf16.mxu0 %v3114
    %3358 = vmatpush2.bf16.msra.mxu0 %v3113
    %3359 = vmatprep.subr.bf16.mxu0 %v3106
    %3360 = vmatpush2.bf16.msra.mxu0 %v3105
    %3361 = vmatprep.subr.bf16.mxu0 %v3098
    %3362 = vmatpush2.bf16.msra.mxu0 %v3097
    %3363 = vmatprep.subr.bf16.mxu0 %v3090
    %3364 = vmatpush2.bf16.msra.mxu0 %v3089
    %3365 = vmatprep.subr.bf16.mxu0 %v3082
    %3366 = vmatpush2.bf16.msra.mxu0 %v3081
    %3367 = vmatprep.subr.bf16.mxu0 %v3074
    %3368 = vmatpush2.bf16.msra.mxu0 %v3073
    %3369 = vmatprep.subr.bf16.mxu0 %v3066
    %3370 = vmatpush2.bf16.msra.mxu0 %v3065
    %3371 = vmatprep.mubr.bf16.mxu0 %v2484
    %3372 = vmatmul.mubr.bf16.gmra.mxu0 %v2483
    %v3373 = vpop.f32.mrf.mxu0
    %v3374 = vadd.f32 0.0, %v3373
    %v3375 = vpop.f32.mrf.mxu0
    %v3376 = vadd.f32 0.0, %v3375
    %v3377 = vpop.f32.mrf.mxu0
    %v3378 = vadd.f32 0.0, %v3377
    %v3379 = vpop.f32.mrf.mxu0
    %v3380 = vadd.f32 0.0, %v3379
    %3381 = vdwg.mxu0
    %3382 = vmatprep.subr.bf16.mxu0 %v3060
    %3383 = vmatpush1.bf16.msra.mxu0 %v3059
    %3384 = vmatprep.subr.bf16.mxu0 %v3052
    %3385 = vmatpush1.bf16.msra.mxu0 %v3051
    %3386 = vmatprep.subr.bf16.mxu0 %v3044
    %3387 = vmatpush1.bf16.msra.mxu0 %v3043
    %3388 = vmatprep.subr.bf16.mxu0 %v3036
    %3389 = vmatpush1.bf16.msra.mxu0 %v3035
    %3390 = vmatprep.subr.bf16.mxu0 %v3028
    %3391 = vmatpush1.bf16.msra.mxu0 %v3027
    %3392 = vmatprep.subr.bf16.mxu0 %v3020
    %3393 = vmatpush1.bf16.msra.mxu0 %v3019
    %3394 = vmatprep.subr.bf16.mxu0 %v3012
    %3395 = vmatpush1.bf16.msra.mxu0 %v3011
    %3396 = vmatprep.subr.bf16.mxu0 %v3004
    %3397 = vmatpush1.bf16.msra.mxu0 %v3003
    %3398 = vmatprep.subr.bf16.mxu0 %v3124
    %3399 = vmatpush2.bf16.msra.mxu0 %v3123
    %3400 = vmatprep.subr.bf16.mxu0 %v3116
    %3401 = vmatpush2.bf16.msra.mxu0 %v3115
    %3402 = vmatprep.subr.bf16.mxu0 %v3108
    %3403 = vmatpush2.bf16.msra.mxu0 %v3107
    %3404 = vmatprep.subr.bf16.mxu0 %v3100
    %3405 = vmatpush2.bf16.msra.mxu0 %v3099
    %3406 = vmatprep.subr.bf16.mxu0 %v3092
    %3407 = vmatpush2.bf16.msra.mxu0 %v3091
    %3408 = vmatprep.subr.bf16.mxu0 %v3084
    %3409 = vmatpush2.bf16.msra.mxu0 %v3083
    %3410 = vmatprep.subr.bf16.mxu0 %v3076
    %3411 = vmatpush2.bf16.msra.mxu0 %v3075
    %3412 = vmatprep.subr.bf16.mxu0 %v3068
    %3413 = vmatpush2.bf16.msra.mxu0 %v3067
    %3414 = vmatprep.mubr.bf16.mxu0 %v2484
    %3415 = vmatmul.mubr.bf16.gmra.mxu0 %v2483
    %v3416 = vpop.f32.mrf.mxu0
    %v3417 = vadd.f32 0.0, %v3416
    %v3418 = vpop.f32.mrf.mxu0
    %v3419 = vadd.f32 0.0, %v3418
    %v3420 = vpop.f32.mrf.mxu0
    %v3421 = vadd.f32 0.0, %v3420
    %v3422 = vpop.f32.mrf.mxu0
    %v3423 = vadd.f32 0.0, %v3422
    %3424 = vdwg.mxu0
    %v3425 = vld [vmem:[%s16] sm:$0xff]
    %v3426 = vld [vmem:[%s16 + $0x8] sm:$0xff]
    %v3427 = vld [vmem:[%s16 + $0x10] sm:$0xff]
    %v3428 = vld [vmem:[%s16 + $0x18] sm:$0xff]
    %s3429 = scalar_lea.vmem %s16, 32
    %v3430 = vld [vmem:[%s3429] sm:$0xff]
    %v3431 = vld [vmem:[%s3429 + $0x8] sm:$0xff]
    %v3432 = vld [vmem:[%s3429 + $0x10] sm:$0xff]
    %v3433 = vld [vmem:[%s3429 + $0x18] sm:$0xff]
    %vm3434 = vcmask 130048
    %v3436 = vsel %vm3434, %v3430, 0
    %v3439 = vsel %vm3434, %v3431, 0
    %v3442 = vsel %vm3434, %v3432, 0
    %v3445 = vsel %vm3434, %v3433, 0
    %3447 = vmatprep.subr.mxu0 0.0
    %3448 = vmatpush1.msra.mxu0 0.0
    %3449 = vmatprep.subr.mxu0 0.0
    %3450 = vmatpush1.msra.mxu0 0.0
    %3451 = vmatprep.subr.mxu0 0.0
    %3452 = vmatpush1.msra.mxu0 0.0
    %3453 = vmatprep.subr.mxu0 0.0
    %3454 = vmatpush1.msra.mxu0 0.0
    %3455 = vmatprep.subr.mxu0 0.0
    %3456 = vmatpush1.msra.mxu0 0.0
    %3457 = vmatprep.subr.mxu0 0.0
    %3458 = vmatpush1.msra.mxu0 0.0
    %3459 = vmatprep.subr.mxu0 0.0
    %3460 = vmatpush1.msra.mxu0 0.0
    %3461 = vmatprep.subr.mxu0 0.0
    %3462 = vmatpush1.msra.mxu0 0.0
    %3463 = vmatprep.subr.mxu0 0.0
    %3464 = vmatpush1.msra.mxu0 0.0
    %3465 = vmatprep.subr.mxu0 0.0
    %3466 = vmatpush1.msra.mxu0 0.0
    %3467 = vmatprep.subr.mxu0 0.0
    %3468 = vmatpush1.msra.mxu0 0.0
    %3469 = vmatprep.subr.mxu0 0.0
    %3470 = vmatpush1.msra.mxu0 0.0
    %3471 = vmatprep.subr.mxu0 0.0
    %3472 = vmatpush1.msra.mxu0 0.0
    %3473 = vmatprep.subr.mxu0 0.0
    %3474 = vmatpush1.msra.mxu0 0.0
    %3475 = vmatprep.subr.mxu0 %v3337
    %3476 = vmatpush1.msra.mxu0 %v3335
    %3477 = vmatprep.subr.mxu0 %v3333
    %3478 = vmatpush1.msra.mxu0 %v3331
    %3479 = vmatprep.subr.mxu0 0.0
    %3480 = vmatpush2.msra.mxu0 0.0
    %3481 = vmatprep.subr.mxu0 0.0
    %3482 = vmatpush2.msra.mxu0 0.0
    %3483 = vmatprep.subr.mxu0 0.0
    %3484 = vmatpush2.msra.mxu0 0.0
    %3485 = vmatprep.subr.mxu0 0.0
    %3486 = vmatpush2.msra.mxu0 0.0
    %3487 = vmatprep.subr.mxu0 0.0
    %3488 = vmatpush2.msra.mxu0 0.0
    %3489 = vmatprep.subr.mxu0 0.0
    %3490 = vmatpush2.msra.mxu0 0.0
    %3491 = vmatprep.subr.mxu0 0.0
    %3492 = vmatpush2.msra.mxu0 0.0
    %3493 = vmatprep.subr.mxu0 0.0
    %3494 = vmatpush2.msra.mxu0 0.0
    %3495 = vmatprep.subr.mxu0 0.0
    %3496 = vmatpush2.msra.mxu0 0.0
    %3497 = vmatprep.subr.mxu0 0.0
    %3498 = vmatpush2.msra.mxu0 0.0
    %3499 = vmatprep.subr.mxu0 0.0
    %3500 = vmatpush2.msra.mxu0 0.0
    %3501 = vmatprep.subr.mxu0 0.0
    %3502 = vmatpush2.msra.mxu0 0.0
    %3503 = vmatprep.subr.mxu0 0.0
    %3504 = vmatpush2.msra.mxu0 0.0
    %3505 = vmatprep.subr.mxu0 0.0
    %3506 = vmatpush2.msra.mxu0 0.0
    %3507 = vmatprep.subr.mxu0 0.0
    %3508 = vmatpush2.msra.mxu0 0.0
    %3509 = vmatprep.subr.mxu0 0.0
    %3510 = vmatpush2.msra.mxu0 0.0
    %3511 = vmatprep.mubr.f32.mxu0 0.0
    %3512 = vmatmul.mubr.f32.gmra.mxu0 %v3436
    %v3513 = vpop.f32.mrf.mxu0
    %v3514 = vadd.f32 0.0, %v3513
    %v3515 = vpop.f32.mrf.mxu0
    %v3516 = vadd.f32 0.0, %v3515
    %3517 = vmatprep.mubr.f32.mxu0 0.0
    %3518 = vmatmul.mubr.f32.gmra.mxu0 %v3439
    %v3519 = vpop.f32.mrf.mxu0
    %v3520 = vadd.f32 0.0, %v3519
    %v3521 = vpop.f32.mrf.mxu0
    %v3522 = vadd.f32 0.0, %v3521
    %3523 = vmatprep.mubr.f32.mxu0 0.0
    %3524 = vmatmul.mubr.f32.gmra.mxu0 %v3442
    %v3525 = vpop.f32.mrf.mxu0
    %v3526 = vadd.f32 0.0, %v3525
    %v3527 = vpop.f32.mrf.mxu0
    %v3528 = vadd.f32 0.0, %v3527
    %3529 = vmatprep.mubr.f32.mxu0 0.0
    %3530 = vmatmul.mubr.f32.gmra.mxu0 %v3445
    %v3531 = vpop.f32.mrf.mxu0
    %v3532 = vadd.f32 0.0, %v3531
    %v3533 = vpop.f32.mrf.mxu0
    %v3534 = vadd.f32 0.0, %v3533
    %3535 = vdwg.mxu0
    %v3537 = vsel %vm3434, %v3425, 0
    %v3540 = vsel %vm3434, %v3426, 0
    %v3543 = vsel %vm3434, %v3427, 0
    %v3546 = vsel %vm3434, %v3428, 0
    %3548 = vmatprep.subr.mxu0 0.0
    %3549 = vmatpush1.msra.mxu0 0.0
    %3550 = vmatprep.subr.mxu0 0.0
    %3551 = vmatpush1.msra.mxu0 0.0
    %3552 = vmatprep.subr.mxu0 0.0
    %3553 = vmatpush1.msra.mxu0 0.0
    %3554 = vmatprep.subr.mxu0 0.0
    %3555 = vmatpush1.msra.mxu0 0.0
    %3556 = vmatprep.subr.mxu0 0.0
    %3557 = vmatpush1.msra.mxu0 0.0
    %3558 = vmatprep.subr.mxu0 0.0
    %3559 = vmatpush1.msra.mxu0 0.0
    %3560 = vmatprep.subr.mxu0 0.0
    %3561 = vmatpush1.msra.mxu0 0.0
    %3562 = vmatprep.subr.mxu0 0.0
    %3563 = vmatpush1.msra.mxu0 0.0
    %3564 = vmatprep.subr.mxu0 0.0
    %3565 = vmatpush1.msra.mxu0 0.0
    %3566 = vmatprep.subr.mxu0 0.0
    %3567 = vmatpush1.msra.mxu0 0.0
    %3568 = vmatprep.subr.mxu0 0.0
    %3569 = vmatpush1.msra.mxu0 0.0
    %3570 = vmatprep.subr.mxu0 0.0
    %3571 = vmatpush1.msra.mxu0 0.0
    %3572 = vmatprep.subr.mxu0 0.0
    %3573 = vmatpush1.msra.mxu0 0.0
    %3574 = vmatprep.subr.mxu0 0.0
    %3575 = vmatpush1.msra.mxu0 0.0
    %3576 = vmatprep.subr.mxu0 %v3294
    %3577 = vmatpush1.msra.mxu0 %v3292
    %3578 = vmatprep.subr.mxu0 %v3290
    %3579 = vmatpush1.msra.mxu0 %v3288
    %3580 = vmatprep.subr.mxu0 0.0
    %3581 = vmatpush2.msra.mxu0 0.0
    %3582 = vmatprep.subr.mxu0 0.0
    %3583 = vmatpush2.msra.mxu0 0.0
    %3584 = vmatprep.subr.mxu0 0.0
    %3585 = vmatpush2.msra.mxu0 0.0
    %3586 = vmatprep.subr.mxu0 0.0
    %3587 = vmatpush2.msra.mxu0 0.0
    %3588 = vmatprep.subr.mxu0 0.0
    %3589 = vmatpush2.msra.mxu0 0.0
    %3590 = vmatprep.subr.mxu0 0.0
    %3591 = vmatpush2.msra.mxu0 0.0
    %3592 = vmatprep.subr.mxu0 0.0
    %3593 = vmatpush2.msra.mxu0 0.0
    %3594 = vmatprep.subr.mxu0 0.0
    %3595 = vmatpush2.msra.mxu0 0.0
    %3596 = vmatprep.subr.mxu0 0.0
    %3597 = vmatpush2.msra.mxu0 0.0
    %3598 = vmatprep.subr.mxu0 0.0
    %3599 = vmatpush2.msra.mxu0 0.0
    %3600 = vmatprep.subr.mxu0 0.0
    %3601 = vmatpush2.msra.mxu0 0.0
    %3602 = vmatprep.subr.mxu0 0.0
    %3603 = vmatpush2.msra.mxu0 0.0
    %3604 = vmatprep.subr.mxu0 0.0
    %3605 = vmatpush2.msra.mxu0 0.0
    %3606 = vmatprep.subr.mxu0 0.0
    %3607 = vmatpush2.msra.mxu0 0.0
    %3608 = vmatprep.subr.mxu0 0.0
    %3609 = vmatpush2.msra.mxu0 0.0
    %3610 = vmatprep.subr.mxu0 0.0
    %3611 = vmatpush2.msra.mxu0 0.0
    %3612 = vmatprep.mubr.f32.mxu0 0.0
    %3613 = vmatmul.mubr.f32.gmra.mxu0 %v3537
    %v3614 = vpop.f32.mrf.mxu0
    %v3615 = vadd.f32 %v3514, %v3614
    %v3616 = vpop.f32.mrf.mxu0
    %v3617 = vadd.f32 %v3516, %v3616
    %3618 = vmatprep.mubr.f32.mxu0 0.0
    %3619 = vmatmul.mubr.f32.gmra.mxu0 %v3540
    %v3620 = vpop.f32.mrf.mxu0
    %v3621 = vadd.f32 %v3520, %v3620
    %v3622 = vpop.f32.mrf.mxu0
    %v3623 = vadd.f32 %v3522, %v3622
    %3624 = vmatprep.mubr.f32.mxu0 0.0
    %3625 = vmatmul.mubr.f32.gmra.mxu0 %v3543
    %v3626 = vpop.f32.mrf.mxu0
    %v3627 = vadd.f32 %v3526, %v3626
    %v3628 = vpop.f32.mrf.mxu0
    %v3629 = vadd.f32 %v3528, %v3628
    %3630 = vmatprep.mubr.f32.mxu0 0.0
    %3631 = vmatmul.mubr.f32.gmra.mxu0 %v3546
    %v3632 = vpop.f32.mrf.mxu0
    %v3633 = vadd.f32 %v3532, %v3632
    %v3634 = vpop.f32.mrf.mxu0
    %v3635 = vadd.f32 %v3534, %v3634
    %3636 = vdwg.mxu0
    %s3637 = scalar_lea.vmem %s16, 64
    %v3638 = vld [vmem:[%s3637] sm:$0xff]
    %v3639 = vld [vmem:[%s3637 + $0x8] sm:$0xff]
    %v3640 = vld [vmem:[%s3637 + $0x10] sm:$0xff]
    %v3641 = vld [vmem:[%s3637 + $0x18] sm:$0xff]
    %v3643 = vsel %vm3434, %v3638, 0
    %v3646 = vsel %vm3434, %v3639, 0
    %v3649 = vsel %vm3434, %v3640, 0
    %v3652 = vsel %vm3434, %v3641, 0
    %3654 = vmatprep.subr.mxu0 0.0
    %3655 = vmatpush1.msra.mxu0 0.0
    %3656 = vmatprep.subr.mxu0 0.0
    %3657 = vmatpush1.msra.mxu0 0.0
    %3658 = vmatprep.subr.mxu0 0.0
    %3659 = vmatpush1.msra.mxu0 0.0
    %3660 = vmatprep.subr.mxu0 0.0
    %3661 = vmatpush1.msra.mxu0 0.0
    %3662 = vmatprep.subr.mxu0 0.0
    %3663 = vmatpush1.msra.mxu0 0.0
    %3664 = vmatprep.subr.mxu0 0.0
    %3665 = vmatpush1.msra.mxu0 0.0
    %3666 = vmatprep.subr.mxu0 0.0
    %3667 = vmatpush1.msra.mxu0 0.0
    %3668 = vmatprep.subr.mxu0 0.0
    %3669 = vmatpush1.msra.mxu0 0.0
    %3670 = vmatprep.subr.mxu0 0.0
    %3671 = vmatpush1.msra.mxu0 0.0
    %3672 = vmatprep.subr.mxu0 0.0
    %3673 = vmatpush1.msra.mxu0 0.0
    %3674 = vmatprep.subr.mxu0 0.0
    %3675 = vmatpush1.msra.mxu0 0.0
    %3676 = vmatprep.subr.mxu0 0.0
    %3677 = vmatpush1.msra.mxu0 0.0
    %3678 = vmatprep.subr.mxu0 0.0
    %3679 = vmatpush1.msra.mxu0 0.0
    %3680 = vmatprep.subr.mxu0 0.0
    %3681 = vmatpush1.msra.mxu0 0.0
    %3682 = vmatprep.subr.mxu0 %v3380
    %3683 = vmatpush1.msra.mxu0 %v3378
    %3684 = vmatprep.subr.mxu0 %v3376
    %3685 = vmatpush1.msra.mxu0 %v3374
    %3686 = vmatprep.subr.mxu0 0.0
    %3687 = vmatpush2.msra.mxu0 0.0
    %3688 = vmatprep.subr.mxu0 0.0
    %3689 = vmatpush2.msra.mxu0 0.0
    %3690 = vmatprep.subr.mxu0 0.0
    %3691 = vmatpush2.msra.mxu0 0.0
    %3692 = vmatprep.subr.mxu0 0.0
    %3693 = vmatpush2.msra.mxu0 0.0
    %3694 = vmatprep.subr.mxu0 0.0
    %3695 = vmatpush2.msra.mxu0 0.0
    %3696 = vmatprep.subr.mxu0 0.0
    %3697 = vmatpush2.msra.mxu0 0.0
    %3698 = vmatprep.subr.mxu0 0.0
    %3699 = vmatpush2.msra.mxu0 0.0
    %3700 = vmatprep.subr.mxu0 0.0
    %3701 = vmatpush2.msra.mxu0 0.0
    %3702 = vmatprep.subr.mxu0 0.0
    %3703 = vmatpush2.msra.mxu0 0.0
    %3704 = vmatprep.subr.mxu0 0.0
    %3705 = vmatpush2.msra.mxu0 0.0
    %3706 = vmatprep.subr.mxu0 0.0
    %3707 = vmatpush2.msra.mxu0 0.0
    %3708 = vmatprep.subr.mxu0 0.0
    %3709 = vmatpush2.msra.mxu0 0.0
    %3710 = vmatprep.subr.mxu0 0.0
    %3711 = vmatpush2.msra.mxu0 0.0
    %3712 = vmatprep.subr.mxu0 0.0
    %3713 = vmatpush2.msra.mxu0 0.0
    %3714 = vmatprep.subr.mxu0 0.0
    %3715 = vmatpush2.msra.mxu0 0.0
    %3716 = vmatprep.subr.mxu0 0.0
    %3717 = vmatpush2.msra.mxu0 0.0
    %3718 = vmatprep.mubr.f32.mxu0 0.0
    %3719 = vmatmul.mubr.f32.gmra.mxu0 %v3643
    %v3720 = vpop.f32.mrf.mxu0
    %v3721 = vadd.f32 0.0, %v3720
    %v3722 = vpop.f32.mrf.mxu0
    %v3723 = vadd.f32 0.0, %v3722
    %3724 = vmatprep.mubr.f32.mxu0 0.0
    %3725 = vmatmul.mubr.f32.gmra.mxu0 %v3646
    %v3726 = vpop.f32.mrf.mxu0
    %v3727 = vadd.f32 0.0, %v3726
    %v3728 = vpop.f32.mrf.mxu0
    %v3729 = vadd.f32 0.0, %v3728
    %3730 = vmatprep.mubr.f32.mxu0 0.0
    %3731 = vmatmul.mubr.f32.gmra.mxu0 %v3649
    %v3732 = vpop.f32.mrf.mxu0
    %v3733 = vadd.f32 0.0, %v3732
    %v3734 = vpop.f32.mrf.mxu0
    %v3735 = vadd.f32 0.0, %v3734
    %3736 = vmatprep.mubr.f32.mxu0 0.0
    %3737 = vmatmul.mubr.f32.gmra.mxu0 %v3652
    %v3738 = vpop.f32.mrf.mxu0
    %v3739 = vadd.f32 0.0, %v3738
    %v3740 = vpop.f32.mrf.mxu0
    %v3741 = vadd.f32 0.0, %v3740
    %3742 = vdwg.mxu0
    %v3743 = vadd.f32 %v3615, %v3721
    %v3744 = vadd.f32 %v3617, %v3723
    %v3745 = vadd.f32 %v3621, %v3727
    %v3746 = vadd.f32 %v3623, %v3729
    %v3747 = vadd.f32 %v3627, %v3733
    %v3748 = vadd.f32 %v3629, %v3735
    %v3749 = vadd.f32 %v3633, %v3739
    %v3750 = vadd.f32 %v3635, %v3741
    %s3751 = scalar_lea.vmem %s16, 96
    %v3752 = vld [vmem:[%s3751] sm:$0xff]
    %v3753 = vld [vmem:[%s3751 + $0x8] sm:$0xff]
    %v3754 = vld [vmem:[%s3751 + $0x10] sm:$0xff]
    %v3755 = vld [vmem:[%s3751 + $0x18] sm:$0xff]
    %v3757 = vsel %vm3434, %v3752, 0
    %v3760 = vsel %vm3434, %v3753, 0
    %v3763 = vsel %vm3434, %v3754, 0
    %v3766 = vsel %vm3434, %v3755, 0
    %3768 = vmatprep.subr.mxu0 0.0
    %3769 = vmatpush1.msra.mxu0 0.0
    %3770 = vmatprep.subr.mxu0 0.0
    %3771 = vmatpush1.msra.mxu0 0.0
    %3772 = vmatprep.subr.mxu0 0.0
    %3773 = vmatpush1.msra.mxu0 0.0
    %3774 = vmatprep.subr.mxu0 0.0
    %3775 = vmatpush1.msra.mxu0 0.0
    %3776 = vmatprep.subr.mxu0 0.0
    %3777 = vmatpush1.msra.mxu0 0.0
    %3778 = vmatprep.subr.mxu0 0.0
    %3779 = vmatpush1.msra.mxu0 0.0
    %3780 = vmatprep.subr.mxu0 0.0
    %3781 = vmatpush1.msra.mxu0 0.0
    %3782 = vmatprep.subr.mxu0 0.0
    %3783 = vmatpush1.msra.mxu0 0.0
    %3784 = vmatprep.subr.mxu0 0.0
    %3785 = vmatpush1.msra.mxu0 0.0
    %3786 = vmatprep.subr.mxu0 0.0
    %3787 = vmatpush1.msra.mxu0 0.0
    %3788 = vmatprep.subr.mxu0 0.0
    %3789 = vmatpush1.msra.mxu0 0.0
    %3790 = vmatprep.subr.mxu0 0.0
    %3791 = vmatpush1.msra.mxu0 0.0
    %3792 = vmatprep.subr.mxu0 0.0
    %3793 = vmatpush1.msra.mxu0 0.0
    %3794 = vmatprep.subr.mxu0 0.0
    %3795 = vmatpush1.msra.mxu0 0.0
    %3796 = vmatprep.subr.mxu0 %v3423
    %3797 = vmatpush1.msra.mxu0 %v3421
    %3798 = vmatprep.subr.mxu0 %v3419
    %3799 = vmatpush1.msra.mxu0 %v3417
    %3800 = vmatprep.subr.mxu0 0.0
    %3801 = vmatpush2.msra.mxu0 0.0
    %3802 = vmatprep.subr.mxu0 0.0
    %3803 = vmatpush2.msra.mxu0 0.0
    %3804 = vmatprep.subr.mxu0 0.0
    %3805 = vmatpush2.msra.mxu0 0.0
    %3806 = vmatprep.subr.mxu0 0.0
    %3807 = vmatpush2.msra.mxu0 0.0
    %3808 = vmatprep.subr.mxu0 0.0
    %3809 = vmatpush2.msra.mxu0 0.0
    %3810 = vmatprep.subr.mxu0 0.0
    %3811 = vmatpush2.msra.mxu0 0.0
    %3812 = vmatprep.subr.mxu0 0.0
    %3813 = vmatpush2.msra.mxu0 0.0
    %3814 = vmatprep.subr.mxu0 0.0
    %3815 = vmatpush2.msra.mxu0 0.0
    %3816 = vmatprep.subr.mxu0 0.0
    %3817 = vmatpush2.msra.mxu0 0.0
    %3818 = vmatprep.subr.mxu0 0.0
    %3819 = vmatpush2.msra.mxu0 0.0
    %3820 = vmatprep.subr.mxu0 0.0
    %3821 = vmatpush2.msra.mxu0 0.0
    %3822 = vmatprep.subr.mxu0 0.0
    %3823 = vmatpush2.msra.mxu0 0.0
    %3824 = vmatprep.subr.mxu0 0.0
    %3825 = vmatpush2.msra.mxu0 0.0
    %3826 = vmatprep.subr.mxu0 0.0
    %3827 = vmatpush2.msra.mxu0 0.0
    %3828 = vmatprep.subr.mxu0 0.0
    %3829 = vmatpush2.msra.mxu0 0.0
    %3830 = vmatprep.subr.mxu0 0.0
    %3831 = vmatpush2.msra.mxu0 0.0
    %3832 = vmatprep.mubr.f32.mxu0 0.0
    %3833 = vmatmul.mubr.f32.gmra.mxu0 %v3757
    %v3834 = vpop.f32.mrf.mxu0
    %v3835 = vadd.f32 0.0, %v3834
    %v3836 = vpop.f32.mrf.mxu0
    %v3837 = vadd.f32 0.0, %v3836
    %3838 = vmatprep.mubr.f32.mxu0 0.0
    %3839 = vmatmul.mubr.f32.gmra.mxu0 %v3760
    %v3840 = vpop.f32.mrf.mxu0
    %v3841 = vadd.f32 0.0, %v3840
    %v3842 = vpop.f32.mrf.mxu0
    %v3843 = vadd.f32 0.0, %v3842
    %3844 = vmatprep.mubr.f32.mxu0 0.0
    %3845 = vmatmul.mubr.f32.gmra.mxu0 %v3763
    %v3846 = vpop.f32.mrf.mxu0
    %v3847 = vadd.f32 0.0, %v3846
    %v3848 = vpop.f32.mrf.mxu0
    %v3849 = vadd.f32 0.0, %v3848
    %3850 = vmatprep.mubr.f32.mxu0 0.0
    %3851 = vmatmul.mubr.f32.gmra.mxu0 %v3766
    %v3852 = vpop.f32.mrf.mxu0
    %v3853 = vadd.f32 0.0, %v3852
    %v3854 = vpop.f32.mrf.mxu0
    %v3855 = vadd.f32 0.0, %v3854
    %3856 = vdwg.mxu0
    %v3857 = vadd.f32 %v3743, %v3835
    %v3858 = vadd.f32 %v3744, %v3837
    %v3859 = vadd.f32 %v3745, %v3841
    %v3860 = vadd.f32 %v3746, %v3843
    %v3861 = vadd.f32 %v3747, %v3847
    %v3862 = vadd.f32 %v3748, %v3849
    %v3863 = vadd.f32 %v3749, %v3853
    %v3864 = vadd.f32 %v3750, %v3855
    %v3865 = vld [vmem:[%s12] sm:$0x1]
    %v3866 = vld [vmem:[%s13] sm:$0x1]
    %v3867 = vadd.f32 %v3857, %v3859
    %v3868 = vadd.f32 %v3867, %v3861
    %v3869 = vadd.f32 %v3868, %v3863
    %v3870 = vrot.slane %v3869, 4
    %v3871 = vadd.f32 %v3869, %v3870
    %v3872 = vrot.slane %v3871, 2
    %v3873 = vadd.f32 %v3871, %v3872
    %v3874 = vrot.slane %v3873, 1
    %v3875 = vadd.f32 %v3873, %v3874
    %v3876 = vadd.f32 %v3858, %v3860
    %v3877 = vadd.f32 %v3876, %v3862
    %v3878 = vadd.f32 %v3877, %v3864
    %v3879 = vrot.slane %v3878, 4
    %v3880 = vadd.f32 %v3878, %v3879
    %v3881 = vrot.slane %v3880, 2
    %v3882 = vadd.f32 %v3880, %v3881
    %v3883 = vrot.slane %v3882, 1
    %v3884 = vadd.f32 %v3882, %v3883
    %v3885 = vmul.f32 %v3857, %v3857
    %v3886 = vmul.f32 %v3858, %v3858
    %v3887 = vmul.f32 %v3859, %v3859
    %v3888 = vmul.f32 %v3860, %v3860
    %v3889 = vmul.f32 %v3861, %v3861
    %v3890 = vmul.f32 %v3862, %v3862
    %v3891 = vmul.f32 %v3863, %v3863
    %v3892 = vmul.f32 %v3864, %v3864
    %v3893 = vadd.f32 %v3885, %v3887
    %v3894 = vadd.f32 %v3893, %v3889
    %v3895 = vadd.f32 %v3894, %v3891
    %v3896 = vrot.slane %v3895, 4
    %v3897 = vadd.f32 %v3895, %v3896
    %v3898 = vrot.slane %v3897, 2
    %v3899 = vadd.f32 %v3897, %v3898
    %v3900 = vrot.slane %v3899, 1
    %v3901 = vadd.f32 %v3899, %v3900
    %v3902 = vadd.f32 %v3886, %v3888
    %v3903 = vadd.f32 %v3902, %v3890
    %v3904 = vadd.f32 %v3903, %v3892
    %v3905 = vrot.slane %v3904, 4
    %v3906 = vadd.f32 %v3904, %v3905
    %v3907 = vrot.slane %v3906, 2
    %v3908 = vadd.f32 %v3906, %v3907
    %v3909 = vrot.slane %v3908, 1
    %v3910 = vadd.f32 %v3908, %v3909
    %v3911 = vadd.f32 %v3875, 0.0
    %v3912 = vadd.f32 %v3901, 0.0
    %3914 = vrot.lane.b32.xlu0 %v3875, 112
    %v3915 = vpop.permute.xlu0 %3914
    %v3917 = vadd.f32 %v3911, %v3915
    %3919 = vrot.lane.b32.xlu0 %v3901, 112
    %v3920 = vpop.permute.xlu0 %3919
    %v3922 = vadd.f32 %v3912, %v3920
    %3923 = vrot.lane.b32.xlu0 %v3875, 96
    %v3924 = vpop.permute.xlu0 %3923
    %v3926 = vadd.f32 %v3917, %v3924
    %3927 = vrot.lane.b32.xlu0 %v3901, 96
    %v3928 = vpop.permute.xlu0 %3927
    %v3930 = vadd.f32 %v3922, %v3928
    %3931 = vrot.lane.b32.xlu0 %v3875, 80
    %v3932 = vpop.permute.xlu0 %3931
    %v3934 = vadd.f32 %v3926, %v3932
    %3935 = vrot.lane.b32.xlu0 %v3901, 80
    %v3936 = vpop.permute.xlu0 %3935
    %v3938 = vadd.f32 %v3930, %v3936
    %3939 = vrot.lane.b32.xlu0 %v3875, 64
    %v3940 = vpop.permute.xlu0 %3939
    %v3942 = vadd.f32 %v3934, %v3940
    %3943 = vrot.lane.b32.xlu0 %v3901, 64
    %v3944 = vpop.permute.xlu0 %3943
    %v3946 = vadd.f32 %v3938, %v3944
    %3947 = vrot.lane.b32.xlu0 %v3875, 48
    %v3948 = vpop.permute.xlu0 %3947
    %v3950 = vadd.f32 %v3942, %v3948
    %3951 = vrot.lane.b32.xlu0 %v3901, 48
    %v3952 = vpop.permute.xlu0 %3951
    %v3954 = vadd.f32 %v3946, %v3952
    %3955 = vrot.lane.b32.xlu0 %v3875, 32
    %v3956 = vpop.permute.xlu0 %3955
    %v3958 = vadd.f32 %v3950, %v3956
    %3959 = vrot.lane.b32.xlu0 %v3901, 32
    %v3960 = vpop.permute.xlu0 %3959
    %v3962 = vadd.f32 %v3954, %v3960
    %3963 = vrot.lane.b32.xlu0 %v3875, 16
    %v3964 = vpop.permute.xlu0 %3963
    %v3966 = vadd.f32 %v3958, %v3964
    %3967 = vrot.lane.b32.xlu0 %v3901, 16
    %v3968 = vpop.permute.xlu0 %3967
    %v3970 = vadd.f32 %v3962, %v3968
    %v3971 = vadd.f32 %v3966, %v3884
    %v3972 = vadd.f32 %v3970, %v3910
    %3974 = vrot.lane.b32.xlu0 %v3884, 112
    %v3975 = vpop.permute.xlu0 %3974
    %v3977 = vadd.f32 %v3971, %v3975
    %3979 = vrot.lane.b32.xlu0 %v3910, 112
    %v3980 = vpop.permute.xlu0 %3979
    %v3982 = vadd.f32 %v3972, %v3980
    %3983 = vrot.lane.b32.xlu0 %v3884, 96
    %v3984 = vpop.permute.xlu0 %3983
    %v3986 = vadd.f32 %v3977, %v3984
    %3987 = vrot.lane.b32.xlu0 %v3910, 96
    %v3988 = vpop.permute.xlu0 %3987
    %v3990 = vadd.f32 %v3982, %v3988
    %3991 = vrot.lane.b32.xlu0 %v3884, 80
    %v3992 = vpop.permute.xlu0 %3991
    %v3994 = vadd.f32 %v3986, %v3992
    %3995 = vrot.lane.b32.xlu0 %v3910, 80
    %v3996 = vpop.permute.xlu0 %3995
    %v3998 = vadd.f32 %v3990, %v3996
    %3999 = vrot.lane.b32.xlu0 %v3884, 64
    %v4000 = vpop.permute.xlu0 %3999
    %v4002 = vadd.f32 %v3994, %v4000
    %4003 = vrot.lane.b32.xlu0 %v3910, 64
    %v4004 = vpop.permute.xlu0 %4003
    %v4006 = vadd.f32 %v3998, %v4004
    %4007 = vrot.lane.b32.xlu0 %v3884, 48
    %v4008 = vpop.permute.xlu0 %4007
    %v4010 = vadd.f32 %v4002, %v4008
    %4011 = vrot.lane.b32.xlu0 %v3910, 48
    %v4012 = vpop.permute.xlu0 %4011
    %v4014 = vadd.f32 %v4006, %v4012
    %4015 = vrot.lane.b32.xlu0 %v3884, 32
    %v4016 = vpop.permute.xlu0 %4015
    %v4018 = vadd.f32 %v4010, %v4016
    %4019 = vrot.lane.b32.xlu0 %v3910, 32
    %v4020 = vpop.permute.xlu0 %4019
    %v4022 = vadd.f32 %v4014, %v4020
    %4023 = vrot.lane.b32.xlu0 %v3884, 16
    %v4024 = vpop.permute.xlu0 %4023
    %v4026 = vadd.f32 %v4018, %v4024
    %4027 = vrot.lane.b32.xlu0 %v3910, 16
    %v4028 = vpop.permute.xlu0 %4027
    %v4030 = vadd.f32 %v4022, %v4028
    %v4031 = vmul.f32 %v4026, 0.001953125
    %v4032 = vmul.f32 %v4030, 0.001953125
    %v4033 = vmul.f32 %v4031, %v4031
    %v4034 = vsub.f32 %v4032, %v4033
    %v4035 = vmax.f32 %v4034, 0.0
    %v4036 = vadd.f32 %v4035, 1e-05
    %v4037 = vrsqrt.pop %v4036
    %v4038 = vmul.f32 %v3865, %v4037
    %v4039 = vmul.f32 %v4031, %v4038
    %v4040 = vsub.f32 %v3866, %v4039
    %v4042 = vlaneseq
    %v4043 = vshrl.u32 %v4042, 7
    %v4044 = vsub.s32 0, %v4043
    %v4045 = vrot.slane %v4038, %v4044
    %4046 = vrot.lane.b32.xlu0 %v4045, 16
    %v4047 = vpop.permute.xlu0 %4046
    %4049 = vrot.lane.b32.xlu0 %v4045, 32
    %v4050 = vpop.permute.xlu0 %4049
    %4052 = vrot.lane.b32.xlu0 %v4045, 48
    %v4053 = vpop.permute.xlu0 %4052
    %4055 = vrot.lane.b32.xlu0 %v4045, 64
    %v4056 = vpop.permute.xlu0 %4055
    %4058 = vrot.lane.b32.xlu0 %v4045, 80
    %v4059 = vpop.permute.xlu0 %4058
    %4061 = vrot.lane.b32.xlu0 %v4045, 96
    %v4062 = vpop.permute.xlu0 %4061
    %4064 = vrot.lane.b32.xlu0 %v4045, 112
    %v4065 = vpop.permute.xlu0 %4064
    %v4067 = vsel %vm3434, %v4038, %v4047
    %v4068 = vsel %vm212, %v4067, %v4050
    %vm4069 = vcmask 392192
    %v4070 = vsel %vm4069, %v4068, %v4053
    %v4071 = vsel %vm701, %v4070, %v4056
    %vm4072 = vcmask 654336
    %v4073 = vsel %vm4072, %v4071, %v4059
    %v4074 = vsel %vm2444, %v4073, %v4062
    %vm4075 = vcmask 916480
    %v4076 = vsel %vm4075, %v4074, %v4065
    %v4078 = vlaneseq
    %v4079 = vshrl.u32 %v4078, 7
    %v4080 = vsub.s32 0, %v4079
    %v4081 = vrot.slane %v4040, %v4080
    %4082 = vrot.lane.b32.xlu0 %v4081, 16
    %v4083 = vpop.permute.xlu0 %4082
    %4085 = vrot.lane.b32.xlu0 %v4081, 32
    %v4086 = vpop.permute.xlu0 %4085
    %4088 = vrot.lane.b32.xlu0 %v4081, 48
    %v4089 = vpop.permute.xlu0 %4088
    %4091 = vrot.lane.b32.xlu0 %v4081, 64
    %v4092 = vpop.permute.xlu0 %4091
    %4094 = vrot.lane.b32.xlu0 %v4081, 80
    %v4095 = vpop.permute.xlu0 %4094
    %4097 = vrot.lane.b32.xlu0 %v4081, 96
    %v4098 = vpop.permute.xlu0 %4097
    %4100 = vrot.lane.b32.xlu0 %v4081, 112
    %v4101 = vpop.permute.xlu0 %4100
    %v4103 = vsel %vm3434, %v4040, %v4083
    %v4104 = vsel %vm212, %v4103, %v4086
    %v4105 = vsel %vm4069, %v4104, %v4089
    %v4106 = vsel %vm701, %v4105, %v4092
    %v4107 = vsel %vm4072, %v4106, %v4095
    %v4108 = vsel %vm2444, %v4107, %v4098
    %v4109 = vsel %vm4075, %v4108, %v4101
    %v4110 = vlaneseq
    %v4111 = vshrl.u32 %v4110, 7
    %v4112 = vsub.s32 0, %v4111
    %v4113 = vrot.slane %v4076, %v4112
    %v4114 = vmul.f32 %v3857, %v4113
    %v4115 = vmul.f32 %v3858, %v4113
    %v4116 = vmul.f32 %v3859, %v4113
    %v4117 = vmul.f32 %v3860, %v4113
    %v4118 = vmul.f32 %v3861, %v4113
    %v4119 = vmul.f32 %v3862, %v4113
    %v4120 = vmul.f32 %v3863, %v4113
    %v4121 = vmul.f32 %v3864, %v4113
    %v4122 = vlaneseq
    %v4123 = vshrl.u32 %v4122, 7
    %v4124 = vsub.s32 0, %v4123
    %v4125 = vrot.slane %v4109, %v4124
    %v4126 = vadd.f32 %v4114, %v4125
    %v4127 = vadd.f32 %v4115, %v4125
    %v4128 = vadd.f32 %v4116, %v4125
    %v4129 = vadd.f32 %v4117, %v4125
    %v4130 = vadd.f32 %v4118, %v4125
    %v4131 = vadd.f32 %v4119, %v4125
    %v4132 = vadd.f32 %v4120, %v4125
    %v4133 = vadd.f32 %v4121, %v4125
    %v4134 = vmax.f32 %v4126, 0.0
    %v4135 = vmax.f32 %v4127, 0.0
    %v4136 = vmax.f32 %v4128, 0.0
    %v4137 = vmax.f32 %v4129, 0.0
    %v4138 = vmax.f32 %v4130, 0.0
    %v4139 = vmax.f32 %v4131, 0.0
    %v4140 = vmax.f32 %v4132, 0.0
    %v4141 = vmax.f32 %v4133, 0.0
    %v4142 = vpack.c.bf16 %v4136, %v4134
    %v4143 = vpack.c.bf16 %v4137, %v4135
    %v4144 = vpack.c.bf16 %v4140, %v4138
    %v4145 = vpack.c.bf16 %v4141, %v4139
    %v4146 = vld [vmem:[%s14] sm:$0xff]
    %v4147 = vld [vmem:[%s14 + $0x8] sm:$0xff]
    %v4148 = vld [vmem:[%s14 + $0x10] sm:$0xff]
    %v4149 = vld [vmem:[%s14 + $0x18] sm:$0xff]
    %v4150 = vld [vmem:[%s14 + $0x20] sm:$0xff]
    %v4151 = vld [vmem:[%s14 + $0x28] sm:$0xff]
    %v4152 = vld [vmem:[%s14 + $0x30] sm:$0xff]
    %v4153 = vld [vmem:[%s14 + $0x38] sm:$0xff]
    %v4154 = vld [vmem:[%s14 + $0x40] sm:$0xff]
    %v4155 = vld [vmem:[%s14 + $0x48] sm:$0xff]
    %v4156 = vld [vmem:[%s14 + $0x50] sm:$0xff]
    %v4157 = vld [vmem:[%s14 + $0x58] sm:$0xff]
    %v4158 = vld [vmem:[%s14 + $0x60] sm:$0xff]
    %v4159 = vld [vmem:[%s14 + $0x68] sm:$0xff]
    %v4160 = vld [vmem:[%s14 + $0x70] sm:$0xff]
    %v4161 = vld [vmem:[%s14 + $0x78] sm:$0xff]
    %v4162 = vld [vmem:[%s14 + $0x80] sm:$0xff]
    %v4163 = vld [vmem:[%s14 + $0x88] sm:$0xff]
    %v4164 = vld [vmem:[%s14 + $0x90] sm:$0xff]
    %v4165 = vld [vmem:[%s14 + $0x98] sm:$0xff]
    %v4166 = vld [vmem:[%s14 + $0xa0] sm:$0xff]
    %v4167 = vld [vmem:[%s14 + $0xa8] sm:$0xff]
    %v4168 = vld [vmem:[%s14 + $0xb0] sm:$0xff]
    %v4169 = vld [vmem:[%s14 + $0xb8] sm:$0xff]
    %v4170 = vld [vmem:[%s14 + $0xc0] sm:$0xff]
    %v4171 = vld [vmem:[%s14 + $0xc8] sm:$0xff]
    %v4172 = vld [vmem:[%s14 + $0xd0] sm:$0xff]
    %v4173 = vld [vmem:[%s14 + $0xd8] sm:$0xff]
    %v4174 = vld [vmem:[%s14 + $0xe0] sm:$0xff]
    %v4175 = vld [vmem:[%s14 + $0xe8] sm:$0xff]
    %v4176 = vld [vmem:[%s14 + $0xf0] sm:$0xff]
    %v4177 = vld [vmem:[%s14 + $0xf8] sm:$0xff]
    %v4178 = vld [vmem:[%s14 + $0x100] sm:$0xff]
    %v4179 = vld [vmem:[%s14 + $0x108] sm:$0xff]
    %v4180 = vld [vmem:[%s14 + $0x110] sm:$0xff]
    %v4181 = vld [vmem:[%s14 + $0x118] sm:$0xff]
    %v4182 = vld [vmem:[%s14 + $0x120] sm:$0xff]
    %v4183 = vld [vmem:[%s14 + $0x128] sm:$0xff]
    %v4184 = vld [vmem:[%s14 + $0x130] sm:$0xff]
    %v4185 = vld [vmem:[%s14 + $0x138] sm:$0xff]
    %v4186 = vld [vmem:[%s14 + $0x140] sm:$0xff]
    %v4187 = vld [vmem:[%s14 + $0x148] sm:$0xff]
    %v4188 = vld [vmem:[%s14 + $0x150] sm:$0xff]
    %v4189 = vld [vmem:[%s14 + $0x158] sm:$0xff]
    %v4190 = vld [vmem:[%s14 + $0x160] sm:$0xff]
    %v4191 = vld [vmem:[%s14 + $0x168] sm:$0xff]
    %v4192 = vld [vmem:[%s14 + $0x170] sm:$0xff]
    %v4193 = vld [vmem:[%s14 + $0x178] sm:$0xff]
    %v4194 = vld [vmem:[%s14 + $0x180] sm:$0xff]
    %v4195 = vld [vmem:[%s14 + $0x188] sm:$0xff]
    %v4196 = vld [vmem:[%s14 + $0x190] sm:$0xff]
    %v4197 = vld [vmem:[%s14 + $0x198] sm:$0xff]
    %v4198 = vld [vmem:[%s14 + $0x1a0] sm:$0xff]
    %v4199 = vld [vmem:[%s14 + $0x1a8] sm:$0xff]
    %v4200 = vld [vmem:[%s14 + $0x1b0] sm:$0xff]
    %v4201 = vld [vmem:[%s14 + $0x1b8] sm:$0xff]
    %v4202 = vld [vmem:[%s14 + $0x1c0] sm:$0xff]
    %v4203 = vld [vmem:[%s14 + $0x1c8] sm:$0xff]
    %v4204 = vld [vmem:[%s14 + $0x1d0] sm:$0xff]
    %v4205 = vld [vmem:[%s14 + $0x1d8] sm:$0xff]
    %v4206 = vld [vmem:[%s14 + $0x1e0] sm:$0xff]
    %v4207 = vld [vmem:[%s14 + $0x1e8] sm:$0xff]
    %v4208 = vld [vmem:[%s14 + $0x1f0] sm:$0xff]
    %v4209 = vld [vmem:[%s14 + $0x1f8] sm:$0xff]
    %v4274 = vunpack.c.l.b16 %v4146
    %v4275 = vunpack.c.h.b16 %v4146
    %v4276 = vunpack.c.l.b16 %v4147
    %v4277 = vunpack.c.h.b16 %v4147
    %v4278 = vunpack.c.l.b16 %v4148
    %v4279 = vunpack.c.h.b16 %v4148
    %v4280 = vunpack.c.l.b16 %v4149
    %v4281 = vunpack.c.h.b16 %v4149
    %v4282 = vunpack.c.l.b16 %v4150
    %v4283 = vunpack.c.h.b16 %v4150
    %v4284 = vunpack.c.l.b16 %v4151
    %v4285 = vunpack.c.h.b16 %v4151
    %v4286 = vunpack.c.l.b16 %v4152
    %v4287 = vunpack.c.h.b16 %v4152
    %v4288 = vunpack.c.l.b16 %v4153
    %v4289 = vunpack.c.h.b16 %v4153
    %v4290 = vunpack.c.l.b16 %v4154
    %v4291 = vunpack.c.h.b16 %v4154
    %v4292 = vunpack.c.l.b16 %v4155
    %v4293 = vunpack.c.h.b16 %v4155
    %v4294 = vunpack.c.l.b16 %v4156
    %v4295 = vunpack.c.h.b16 %v4156
    %v4296 = vunpack.c.l.b16 %v4157
    %v4297 = vunpack.c.h.b16 %v4157
    %v4298 = vunpack.c.l.b16 %v4158
    %v4299 = vunpack.c.h.b16 %v4158
    %v4300 = vunpack.c.l.b16 %v4159
    %v4301 = vunpack.c.h.b16 %v4159
    %v4302 = vunpack.c.l.b16 %v4160
    %v4303 = vunpack.c.h.b16 %v4160
    %v4304 = vunpack.c.l.b16 %v4161
    %v4305 = vunpack.c.h.b16 %v4161
    %v4306 = vunpack.c.l.b16 %v4162
    %v4307 = vunpack.c.h.b16 %v4162
    %v4308 = vunpack.c.l.b16 %v4163
    %v4309 = vunpack.c.h.b16 %v4163
    %v4310 = vunpack.c.l.b16 %v4164
    %v4311 = vunpack.c.h.b16 %v4164
    %v4312 = vunpack.c.l.b16 %v4165
    %v4313 = vunpack.c.h.b16 %v4165
    %v4314 = vunpack.c.l.b16 %v4166
    %v4315 = vunpack.c.h.b16 %v4166
    %v4316 = vunpack.c.l.b16 %v4167
    %v4317 = vunpack.c.h.b16 %v4167
    %v4318 = vunpack.c.l.b16 %v4168
    %v4319 = vunpack.c.h.b16 %v4168
    %v4320 = vunpack.c.l.b16 %v4169
    %v4321 = vunpack.c.h.b16 %v4169
    %v4322 = vunpack.c.l.b16 %v4170
    %v4323 = vunpack.c.h.b16 %v4170
    %v4324 = vunpack.c.l.b16 %v4171
    %v4325 = vunpack.c.h.b16 %v4171
    %v4326 = vunpack.c.l.b16 %v4172
    %v4327 = vunpack.c.h.b16 %v4172
    %v4328 = vunpack.c.l.b16 %v4173
    %v4329 = vunpack.c.h.b16 %v4173
    %v4330 = vunpack.c.l.b16 %v4174
    %v4331 = vunpack.c.h.b16 %v4174
    %v4332 = vunpack.c.l.b16 %v4175
    %v4333 = vunpack.c.h.b16 %v4175
    %v4334 = vunpack.c.l.b16 %v4176
    %v4335 = vunpack.c.h.b16 %v4176
    %v4336 = vunpack.c.l.b16 %v4177
    %v4337 = vunpack.c.h.b16 %v4177
    %v4338 = vunpack.c.l.b16 %v4178
    %v4339 = vunpack.c.h.b16 %v4178
    %v4340 = vunpack.c.l.b16 %v4179
    %v4341 = vunpack.c.h.b16 %v4179
    %v4342 = vunpack.c.l.b16 %v4180
    %v4343 = vunpack.c.h.b16 %v4180
    %v4344 = vunpack.c.l.b16 %v4181
    %v4345 = vunpack.c.h.b16 %v4181
    %v4346 = vunpack.c.l.b16 %v4182
    %v4347 = vunpack.c.h.b16 %v4182
    %v4348 = vunpack.c.l.b16 %v4183
    %v4349 = vunpack.c.h.b16 %v4183
    %v4350 = vunpack.c.l.b16 %v4184
    %v4351 = vunpack.c.h.b16 %v4184
    %v4352 = vunpack.c.l.b16 %v4185
    %v4353 = vunpack.c.h.b16 %v4185
    %v4354 = vunpack.c.l.b16 %v4186
    %v4355 = vunpack.c.h.b16 %v4186
    %v4356 = vunpack.c.l.b16 %v4187
    %v4357 = vunpack.c.h.b16 %v4187
    %v4358 = vunpack.c.l.b16 %v4188
    %v4359 = vunpack.c.h.b16 %v4188
    %v4360 = vunpack.c.l.b16 %v4189
    %v4361 = vunpack.c.h.b16 %v4189
    %v4362 = vunpack.c.l.b16 %v4190
    %v4363 = vunpack.c.h.b16 %v4190
    %v4364 = vunpack.c.l.b16 %v4191
    %v4365 = vunpack.c.h.b16 %v4191
    %v4366 = vunpack.c.l.b16 %v4192
    %v4367 = vunpack.c.h.b16 %v4192
    %v4368 = vunpack.c.l.b16 %v4193
    %v4369 = vunpack.c.h.b16 %v4193
    %v4370 = vunpack.c.l.b16 %v4194
    %v4371 = vunpack.c.h.b16 %v4194
    %v4372 = vunpack.c.l.b16 %v4195
    %v4373 = vunpack.c.h.b16 %v4195
    %v4374 = vunpack.c.l.b16 %v4196
    %v4375 = vunpack.c.h.b16 %v4196
    %v4376 = vunpack.c.l.b16 %v4197
    %v4377 = vunpack.c.h.b16 %v4197
    %v4378 = vunpack.c.l.b16 %v4198
    %v4379 = vunpack.c.h.b16 %v4198
    %v4380 = vunpack.c.l.b16 %v4199
    %v4381 = vunpack.c.h.b16 %v4199
    %v4382 = vunpack.c.l.b16 %v4200
    %v4383 = vunpack.c.h.b16 %v4200
    %v4384 = vunpack.c.l.b16 %v4201
    %v4385 = vunpack.c.h.b16 %v4201
    %v4386 = vunpack.c.l.b16 %v4202
    %v4387 = vunpack.c.h.b16 %v4202
    %v4388 = vunpack.c.l.b16 %v4203
    %v4389 = vunpack.c.h.b16 %v4203
    %v4390 = vunpack.c.l.b16 %v4204
    %v4391 = vunpack.c.h.b16 %v4204
    %v4392 = vunpack.c.l.b16 %v4205
    %v4393 = vunpack.c.h.b16 %v4205
    %v4394 = vunpack.c.l.b16 %v4206
    %v4395 = vunpack.c.h.b16 %v4206
    %v4396 = vunpack.c.l.b16 %v4207
    %v4397 = vunpack.c.h.b16 %v4207
    %v4398 = vunpack.c.l.b16 %v4208
    %v4399 = vunpack.c.h.b16 %v4208
    %v4400 = vunpack.c.l.b16 %v4209
    %v4401 = vunpack.c.h.b16 %v4209
    %v4402 = vpack.c.b16 %v4278, %v4274
    %v4403 = vpack.c.b16 %v4279, %v4275
    %v4404 = vpack.c.b16 %v4280, %v4276
    %v4405 = vpack.c.b16 %v4281, %v4277
    %v4406 = vpack.c.b16 %v4286, %v4282
    %v4407 = vpack.c.b16 %v4287, %v4283
    %v4408 = vpack.c.b16 %v4288, %v4284
    %v4409 = vpack.c.b16 %v4289, %v4285
    %v4410 = vpack.c.b16 %v4294, %v4290
    %v4411 = vpack.c.b16 %v4295, %v4291
    %v4412 = vpack.c.b16 %v4296, %v4292
    %v4413 = vpack.c.b16 %v4297, %v4293
    %v4414 = vpack.c.b16 %v4302, %v4298
    %v4415 = vpack.c.b16 %v4303, %v4299
    %v4416 = vpack.c.b16 %v4304, %v4300
    %v4417 = vpack.c.b16 %v4305, %v4301
    %v4418 = vpack.c.b16 %v4310, %v4306
    %v4419 = vpack.c.b16 %v4311, %v4307
    %v4420 = vpack.c.b16 %v4312, %v4308
    %v4421 = vpack.c.b16 %v4313, %v4309
    %v4422 = vpack.c.b16 %v4318, %v4314
    %v4423 = vpack.c.b16 %v4319, %v4315
    %v4424 = vpack.c.b16 %v4320, %v4316
    %v4425 = vpack.c.b16 %v4321, %v4317
    %v4426 = vpack.c.b16 %v4326, %v4322
    %v4427 = vpack.c.b16 %v4327, %v4323
    %v4428 = vpack.c.b16 %v4328, %v4324
    %v4429 = vpack.c.b16 %v4329, %v4325
    %v4430 = vpack.c.b16 %v4334, %v4330
    %v4431 = vpack.c.b16 %v4335, %v4331
    %v4432 = vpack.c.b16 %v4336, %v4332
    %v4433 = vpack.c.b16 %v4337, %v4333
    %v4434 = vpack.c.b16 %v4342, %v4338
    %v4435 = vpack.c.b16 %v4343, %v4339
    %v4436 = vpack.c.b16 %v4344, %v4340
    %v4437 = vpack.c.b16 %v4345, %v4341
    %v4438 = vpack.c.b16 %v4350, %v4346
    %v4439 = vpack.c.b16 %v4351, %v4347
    %v4440 = vpack.c.b16 %v4352, %v4348
    %v4441 = vpack.c.b16 %v4353, %v4349
    %v4442 = vpack.c.b16 %v4358, %v4354
    %v4443 = vpack.c.b16 %v4359, %v4355
    %v4444 = vpack.c.b16 %v4360, %v4356
    %v4445 = vpack.c.b16 %v4361, %v4357
    %v4446 = vpack.c.b16 %v4366, %v4362
    %v4447 = vpack.c.b16 %v4367, %v4363
    %v4448 = vpack.c.b16 %v4368, %v4364
    %v4449 = vpack.c.b16 %v4369, %v4365
    %v4450 = vpack.c.b16 %v4374, %v4370
    %v4451 = vpack.c.b16 %v4375, %v4371
    %v4452 = vpack.c.b16 %v4376, %v4372
    %v4453 = vpack.c.b16 %v4377, %v4373
    %v4454 = vpack.c.b16 %v4382, %v4378
    %v4455 = vpack.c.b16 %v4383, %v4379
    %v4456 = vpack.c.b16 %v4384, %v4380
    %v4457 = vpack.c.b16 %v4385, %v4381
    %v4458 = vpack.c.b16 %v4390, %v4386
    %v4459 = vpack.c.b16 %v4391, %v4387
    %v4460 = vpack.c.b16 %v4392, %v4388
    %v4461 = vpack.c.b16 %v4393, %v4389
    %v4462 = vpack.c.b16 %v4398, %v4394
    %v4463 = vpack.c.b16 %v4399, %v4395
    %v4464 = vpack.c.b16 %v4400, %v4396
    %v4465 = vpack.c.b16 %v4401, %v4397
    %4530 = vmatprep.subr.bf16.mxu0 %v4431
    %4531 = vmatpush1.bf16.msra.mxu0 %v4430
    %4532 = vmatprep.subr.bf16.mxu0 %v4427
    %4533 = vmatpush1.bf16.msra.mxu0 %v4426
    %4534 = vmatprep.subr.bf16.mxu0 %v4423
    %4535 = vmatpush1.bf16.msra.mxu0 %v4422
    %4536 = vmatprep.subr.bf16.mxu0 %v4419
    %4537 = vmatpush1.bf16.msra.mxu0 %v4418
    %4538 = vmatprep.subr.bf16.mxu0 %v4415
    %4539 = vmatpush1.bf16.msra.mxu0 %v4414
    %4540 = vmatprep.subr.bf16.mxu0 %v4411
    %4541 = vmatpush1.bf16.msra.mxu0 %v4410
    %4542 = vmatprep.subr.bf16.mxu0 %v4407
    %4543 = vmatpush1.bf16.msra.mxu0 %v4406
    %4544 = vmatprep.subr.bf16.mxu0 %v4403
    %4545 = vmatpush1.bf16.msra.mxu0 %v4402
    %4546 = vmatprep.subr.bf16.mxu0 %v4463
    %4547 = vmatpush2.bf16.msra.mxu0 %v4462
    %4548 = vmatprep.subr.bf16.mxu0 %v4459
    %4549 = vmatpush2.bf16.msra.mxu0 %v4458
    %4550 = vmatprep.subr.bf16.mxu0 %v4455
    %4551 = vmatpush2.bf16.msra.mxu0 %v4454
    %4552 = vmatprep.subr.bf16.mxu0 %v4451
    %4553 = vmatpush2.bf16.msra.mxu0 %v4450
    %4554 = vmatprep.subr.bf16.mxu0 %v4447
    %4555 = vmatpush2.bf16.msra.mxu0 %v4446
    %4556 = vmatprep.subr.bf16.mxu0 %v4443
    %4557 = vmatpush2.bf16.msra.mxu0 %v4442
    %4558 = vmatprep.subr.bf16.mxu0 %v4439
    %4559 = vmatpush2.bf16.msra.mxu0 %v4438
    %4560 = vmatprep.subr.bf16.mxu0 %v4435
    %4561 = vmatpush2.bf16.msra.mxu0 %v4434
    %4562 = vmatprep.mubr.bf16.mxu0 %v4143
    %4563 = vmatmul.mubr.bf16.gmra.mxu0 %v4142
    %v4564 = vpop.f32.mrf.mxu0
    %v4565 = vadd.f32 0.0, %v4564
    %v4566 = vpop.f32.mrf.mxu0
    %v4567 = vadd.f32 0.0, %v4566
    %v4568 = vpop.f32.mrf.mxu0
    %v4569 = vadd.f32 0.0, %v4568
    %v4570 = vpop.f32.mrf.mxu0
    %v4571 = vadd.f32 0.0, %v4570
    %4572 = vmatprep.mubr.bf16.mxu0 %v4145
    %4573 = vmatmul.mubr.bf16.gmra.mxu0 %v4144
    %v4574 = vpop.f32.mrf.mxu0
    %v4575 = vadd.f32 0.0, %v4574
    %v4576 = vpop.f32.mrf.mxu0
    %v4577 = vadd.f32 0.0, %v4576
    %v4578 = vpop.f32.mrf.mxu0
    %v4579 = vadd.f32 0.0, %v4578
    %v4580 = vpop.f32.mrf.mxu0
    %v4581 = vadd.f32 0.0, %v4580
    %4582 = vdwg.mxu0
    %4583 = vmatprep.subr.bf16.mxu0 %v4433
    %4584 = vmatpush1.bf16.msra.mxu0 %v4432
    %4585 = vmatprep.subr.bf16.mxu0 %v4429
    %4586 = vmatpush1.bf16.msra.mxu0 %v4428
    %4587 = vmatprep.subr.bf16.mxu0 %v4425
    %4588 = vmatpush1.bf16.msra.mxu0 %v4424
    %4589 = vmatprep.subr.bf16.mxu0 %v4421
    %4590 = vmatpush1.bf16.msra.mxu0 %v4420
    %4591 = vmatprep.subr.bf16.mxu0 %v4417
    %4592 = vmatpush1.bf16.msra.mxu0 %v4416
    %4593 = vmatprep.subr.bf16.mxu0 %v4413
    %4594 = vmatpush1.bf16.msra.mxu0 %v4412
    %4595 = vmatprep.subr.bf16.mxu0 %v4409
    %4596 = vmatpush1.bf16.msra.mxu0 %v4408
    %4597 = vmatprep.subr.bf16.mxu0 %v4405
    %4598 = vmatpush1.bf16.msra.mxu0 %v4404
    %4599 = vmatprep.subr.bf16.mxu0 %v4465
    %4600 = vmatpush2.bf16.msra.mxu0 %v4464
    %4601 = vmatprep.subr.bf16.mxu0 %v4461
    %4602 = vmatpush2.bf16.msra.mxu0 %v4460
    %4603 = vmatprep.subr.bf16.mxu0 %v4457
    %4604 = vmatpush2.bf16.msra.mxu0 %v4456
    %4605 = vmatprep.subr.bf16.mxu0 %v4453
    %4606 = vmatpush2.bf16.msra.mxu0 %v4452
    %4607 = vmatprep.subr.bf16.mxu0 %v4449
    %4608 = vmatpush2.bf16.msra.mxu0 %v4448
    %4609 = vmatprep.subr.bf16.mxu0 %v4445
    %4610 = vmatpush2.bf16.msra.mxu0 %v4444
    %4611 = vmatprep.subr.bf16.mxu0 %v4441
    %4612 = vmatpush2.bf16.msra.mxu0 %v4440
    %4613 = vmatprep.subr.bf16.mxu0 %v4437
    %4614 = vmatpush2.bf16.msra.mxu0 %v4436
    %4615 = vmatprep.mubr.bf16.mxu0 %v4143
    %4616 = vmatmul.mubr.bf16.gmra.mxu0 %v4142
    %v4617 = vpop.f32.mrf.mxu0
    %v4618 = vadd.f32 0.0, %v4617
    %v4619 = vpop.f32.mrf.mxu0
    %v4620 = vadd.f32 0.0, %v4619
    %v4621 = vpop.f32.mrf.mxu0
    %v4622 = vadd.f32 0.0, %v4621
    %v4623 = vpop.f32.mrf.mxu0
    %v4624 = vadd.f32 0.0, %v4623
    %4625 = vmatprep.mubr.bf16.mxu0 %v4145
    %4626 = vmatmul.mubr.bf16.gmra.mxu0 %v4144
    %v4627 = vpop.f32.mrf.mxu0
    %v4628 = vadd.f32 0.0, %v4627
    %v4629 = vpop.f32.mrf.mxu0
    %v4630 = vadd.f32 0.0, %v4629
    %v4631 = vpop.f32.mrf.mxu0
    %v4632 = vadd.f32 0.0, %v4631
    %v4633 = vpop.f32.mrf.mxu0
    %v4634 = vadd.f32 0.0, %v4633
    %4635 = vdwg.mxu0
    %v4636 = vld [vmem:[%s17] sm:$0xff]
    %v4637 = vld [vmem:[%s17 + $0x8] sm:$0xff]
    %v4638 = vld [vmem:[%s17 + $0x10] sm:$0xff]
    %v4639 = vld [vmem:[%s17 + $0x18] sm:$0xff]
    %v4640 = vld [vmem:[%s17 + $0x20] sm:$0xff]
    %v4641 = vld [vmem:[%s17 + $0x28] sm:$0xff]
    %v4642 = vld [vmem:[%s17 + $0x30] sm:$0xff]
    %s4643 = scalar_lea.vmem %s17, 56
    %v4644 = vld [vmem:[%s4643] sm:$0xff]
    %v4645 = vld [vmem:[%s4643 + $0x8] sm:$0xff]
    %v4646 = vld [vmem:[%s4643 + $0x10] sm:$0xff]
    %v4647 = vld [vmem:[%s4643 + $0x18] sm:$0xff]
    %v4648 = vld [vmem:[%s4643 + $0x20] sm:$0xff]
    %v4649 = vld [vmem:[%s4643 + $0x28] sm:$0xff]
    %v4650 = vld [vmem:[%s4643 + $0x30] sm:$0xff]
    %v4652 = vsel %vm212, %v4644, 0
    %v4655 = vsel %vm212, %v4645, 0
    %v4658 = vsel %vm212, %v4646, 0
    %v4661 = vsel %vm212, %v4647, 0
    %v4664 = vsel %vm212, %v4648, 0
    %v4667 = vsel %vm212, %v4649, 0
    %v4670 = vsel %vm212, %v4650, 0
    %4672 = vmatprep.subr.mxu0 0.0
    %4673 = vmatpush1.msra.mxu0 0.0
    %4674 = vmatprep.subr.mxu0 0.0
    %4675 = vmatpush1.msra.mxu0 0.0
    %4676 = vmatprep.subr.mxu0 0.0
    %4677 = vmatpush1.msra.mxu0 0.0
    %4678 = vmatprep.subr.mxu0 0.0
    %4679 = vmatpush1.msra.mxu0 0.0
    %4680 = vmatprep.subr.mxu0 0.0
    %4681 = vmatpush1.msra.mxu0 0.0
    %4682 = vmatprep.subr.mxu0 0.0
    %4683 = vmatpush1.msra.mxu0 0.0
    %4684 = vmatprep.subr.mxu0 0.0
    %4685 = vmatpush1.msra.mxu0 0.0
    %4686 = vmatprep.subr.mxu0 0.0
    %4687 = vmatpush1.msra.mxu0 0.0
    %4688 = vmatprep.subr.mxu0 0.0
    %4689 = vmatpush1.msra.mxu0 0.0
    %4690 = vmatprep.subr.mxu0 0.0
    %4691 = vmatpush1.msra.mxu0 0.0
    %4692 = vmatprep.subr.mxu0 0.0
    %4693 = vmatpush1.msra.mxu0 0.0
    %4694 = vmatprep.subr.mxu0 0.0
    %4695 = vmatpush1.msra.mxu0 0.0
    %4696 = vmatprep.subr.mxu0 0.0
    %4697 = vmatpush1.msra.mxu0 %v4581
    %4698 = vmatprep.subr.mxu0 0.0
    %4699 = vmatpush1.msra.mxu0 %v4577
    %4700 = vmatprep.subr.mxu0 0.0
    %4701 = vmatpush1.msra.mxu0 %v4571
    %4702 = vmatprep.subr.mxu0 0.0
    %4703 = vmatpush1.msra.mxu0 %v4567
    %4704 = vmatprep.subr.mxu0 0.0
    %4705 = vmatpush2.msra.mxu0 0.0
    %4706 = vmatprep.subr.mxu0 0.0
    %4707 = vmatpush2.msra.mxu0 0.0
    %4708 = vmatprep.subr.mxu0 0.0
    %4709 = vmatpush2.msra.mxu0 0.0
    %4710 = vmatprep.subr.mxu0 0.0
    %4711 = vmatpush2.msra.mxu0 0.0
    %4712 = vmatprep.subr.mxu0 0.0
    %4713 = vmatpush2.msra.mxu0 0.0
    %4714 = vmatprep.subr.mxu0 0.0
    %4715 = vmatpush2.msra.mxu0 0.0
    %4716 = vmatprep.subr.mxu0 0.0
    %4717 = vmatpush2.msra.mxu0 0.0
    %4718 = vmatprep.subr.mxu0 0.0
    %4719 = vmatpush2.msra.mxu0 0.0
    %4720 = vmatprep.subr.mxu0 0.0
    %4721 = vmatpush2.msra.mxu0 0.0
    %4722 = vmatprep.subr.mxu0 0.0
    %4723 = vmatpush2.msra.mxu0 0.0
    %4724 = vmatprep.subr.mxu0 0.0
    %4725 = vmatpush2.msra.mxu0 0.0
    %4726 = vmatprep.subr.mxu0 0.0
    %4727 = vmatpush2.msra.mxu0 0.0
    %4728 = vmatprep.subr.mxu0 0.0
    %4729 = vmatpush2.msra.mxu0 0.0
    %4730 = vmatprep.subr.mxu0 0.0
    %4731 = vmatpush2.msra.mxu0 0.0
    %4732 = vmatprep.subr.mxu0 0.0
    %4733 = vmatpush2.msra.mxu0 0.0
    %4734 = vmatprep.subr.mxu0 0.0
    %4735 = vmatpush2.msra.mxu0 0.0
    %4736 = vmatprep.mubr.f32.mxu0 0.0
    %4737 = vmatmul.mubr.f32.gmra.mxu0 %v4652
    %v4738 = vpop.f32.mrf.mxu0
    %v4739 = vadd.f32 0.0, %v4738
    %v4740 = vpop.f32.mrf.mxu0
    %4741 = vmatprep.mubr.f32.mxu0 0.0
    %4742 = vmatmul.mubr.f32.gmra.mxu0 %v4655
    %v4743 = vpop.f32.mrf.mxu0
    %v4744 = vadd.f32 0.0, %v4743
    %v4745 = vpop.f32.mrf.mxu0
    %4746 = vmatprep.mubr.f32.mxu0 0.0
    %4747 = vmatmul.mubr.f32.gmra.mxu0 %v4658
    %v4748 = vpop.f32.mrf.mxu0
    %v4749 = vadd.f32 0.0, %v4748
    %v4750 = vpop.f32.mrf.mxu0
    %4751 = vmatprep.mubr.f32.mxu0 0.0
    %4752 = vmatmul.mubr.f32.gmra.mxu0 %v4661
    %v4753 = vpop.f32.mrf.mxu0
    %v4754 = vadd.f32 0.0, %v4753
    %v4755 = vpop.f32.mrf.mxu0
    %4756 = vmatprep.mubr.f32.mxu0 0.0
    %4757 = vmatmul.mubr.f32.gmra.mxu0 %v4664
    %v4758 = vpop.f32.mrf.mxu0
    %v4759 = vadd.f32 0.0, %v4758
    %v4760 = vpop.f32.mrf.mxu0
    %4761 = vmatprep.mubr.f32.mxu0 0.0
    %4762 = vmatmul.mubr.f32.gmra.mxu0 %v4667
    %v4763 = vpop.f32.mrf.mxu0
    %v4764 = vadd.f32 0.0, %v4763
    %v4765 = vpop.f32.mrf.mxu0
    %4766 = vmatprep.mubr.f32.mxu0 0.0
    %4767 = vmatmul.mubr.f32.gmra.mxu0 %v4670
    %v4768 = vpop.f32.mrf.mxu0
    %v4769 = vadd.f32 0.0, %v4768
    %v4770 = vpop.f32.mrf.mxu0
    %4771 = vdwg.mxu0
    %v4773 = vsel %vm212, %v4636, 0
    %v4776 = vsel %vm212, %v4637, 0
    %v4779 = vsel %vm212, %v4638, 0
    %v4782 = vsel %vm212, %v4639, 0
    %v4785 = vsel %vm212, %v4640, 0
    %v4788 = vsel %vm212, %v4641, 0
    %v4791 = vsel %vm212, %v4642, 0
    %4793 = vmatprep.subr.mxu0 0.0
    %4794 = vmatpush1.msra.mxu0 0.0
    %4795 = vmatprep.subr.mxu0 0.0
    %4796 = vmatpush1.msra.mxu0 0.0
    %4797 = vmatprep.subr.mxu0 0.0
    %4798 = vmatpush1.msra.mxu0 0.0
    %4799 = vmatprep.subr.mxu0 0.0
    %4800 = vmatpush1.msra.mxu0 0.0
    %4801 = vmatprep.subr.mxu0 0.0
    %4802 = vmatpush1.msra.mxu0 0.0
    %4803 = vmatprep.subr.mxu0 0.0
    %4804 = vmatpush1.msra.mxu0 0.0
    %4805 = vmatprep.subr.mxu0 0.0
    %4806 = vmatpush1.msra.mxu0 0.0
    %4807 = vmatprep.subr.mxu0 0.0
    %4808 = vmatpush1.msra.mxu0 0.0
    %4809 = vmatprep.subr.mxu0 0.0
    %4810 = vmatpush1.msra.mxu0 0.0
    %4811 = vmatprep.subr.mxu0 0.0
    %4812 = vmatpush1.msra.mxu0 0.0
    %4813 = vmatprep.subr.mxu0 0.0
    %4814 = vmatpush1.msra.mxu0 0.0
    %4815 = vmatprep.subr.mxu0 0.0
    %4816 = vmatpush1.msra.mxu0 0.0
    %4817 = vmatprep.subr.mxu0 0.0
    %4818 = vmatpush1.msra.mxu0 %v4579
    %4819 = vmatprep.subr.mxu0 0.0
    %4820 = vmatpush1.msra.mxu0 %v4575
    %4821 = vmatprep.subr.mxu0 0.0
    %4822 = vmatpush1.msra.mxu0 %v4569
    %4823 = vmatprep.subr.mxu0 0.0
    %4824 = vmatpush1.msra.mxu0 %v4565
    %4825 = vmatprep.subr.mxu0 0.0
    %4826 = vmatpush2.msra.mxu0 0.0
    %4827 = vmatprep.subr.mxu0 0.0
    %4828 = vmatpush2.msra.mxu0 0.0
    %4829 = vmatprep.subr.mxu0 0.0
    %4830 = vmatpush2.msra.mxu0 0.0
    %4831 = vmatprep.subr.mxu0 0.0
    %4832 = vmatpush2.msra.mxu0 0.0
    %4833 = vmatprep.subr.mxu0 0.0
    %4834 = vmatpush2.msra.mxu0 0.0
    %4835 = vmatprep.subr.mxu0 0.0
    %4836 = vmatpush2.msra.mxu0 0.0
    %4837 = vmatprep.subr.mxu0 0.0
    %4838 = vmatpush2.msra.mxu0 0.0
    %4839 = vmatprep.subr.mxu0 0.0
    %4840 = vmatpush2.msra.mxu0 0.0
    %4841 = vmatprep.subr.mxu0 0.0
    %4842 = vmatpush2.msra.mxu0 0.0
    %4843 = vmatprep.subr.mxu0 0.0
    %4844 = vmatpush2.msra.mxu0 0.0
    %4845 = vmatprep.subr.mxu0 0.0
    %4846 = vmatpush2.msra.mxu0 0.0
    %4847 = vmatprep.subr.mxu0 0.0
    %4848 = vmatpush2.msra.mxu0 0.0
    %4849 = vmatprep.subr.mxu0 0.0
    %4850 = vmatpush2.msra.mxu0 0.0
    %4851 = vmatprep.subr.mxu0 0.0
    %4852 = vmatpush2.msra.mxu0 0.0
    %4853 = vmatprep.subr.mxu0 0.0
    %4854 = vmatpush2.msra.mxu0 0.0
    %4855 = vmatprep.subr.mxu0 0.0
    %4856 = vmatpush2.msra.mxu0 0.0
    %4857 = vmatprep.mubr.f32.mxu0 0.0
    %4858 = vmatmul.mubr.f32.gmra.mxu0 %v4773
    %v4859 = vpop.f32.mrf.mxu0
    %v4860 = vadd.f32 %v4739, %v4859
    %v4861 = vpop.f32.mrf.mxu0
    %4862 = vmatprep.mubr.f32.mxu0 0.0
    %4863 = vmatmul.mubr.f32.gmra.mxu0 %v4776
    %v4864 = vpop.f32.mrf.mxu0
    %v4865 = vadd.f32 %v4744, %v4864
    %v4866 = vpop.f32.mrf.mxu0
    %4867 = vmatprep.mubr.f32.mxu0 0.0
    %4868 = vmatmul.mubr.f32.gmra.mxu0 %v4779
    %v4869 = vpop.f32.mrf.mxu0
    %v4870 = vadd.f32 %v4749, %v4869
    %v4871 = vpop.f32.mrf.mxu0
    %4872 = vmatprep.mubr.f32.mxu0 0.0
    %4873 = vmatmul.mubr.f32.gmra.mxu0 %v4782
    %v4874 = vpop.f32.mrf.mxu0
    %v4875 = vadd.f32 %v4754, %v4874
    %v4876 = vpop.f32.mrf.mxu0
    %4877 = vmatprep.mubr.f32.mxu0 0.0
    %4878 = vmatmul.mubr.f32.gmra.mxu0 %v4785
    %v4879 = vpop.f32.mrf.mxu0
    %v4880 = vadd.f32 %v4759, %v4879
    %v4881 = vpop.f32.mrf.mxu0
    %4882 = vmatprep.mubr.f32.mxu0 0.0
    %4883 = vmatmul.mubr.f32.gmra.mxu0 %v4788
    %v4884 = vpop.f32.mrf.mxu0
    %v4885 = vadd.f32 %v4764, %v4884
    %v4886 = vpop.f32.mrf.mxu0
    %4887 = vmatprep.mubr.f32.mxu0 0.0
    %4888 = vmatmul.mubr.f32.gmra.mxu0 %v4791
    %v4889 = vpop.f32.mrf.mxu0
    %v4890 = vadd.f32 %v4769, %v4889
    %v4891 = vpop.f32.mrf.mxu0
    %4892 = vdwg.mxu0
    %s4893 = scalar_lea.vmem %s17, 112
    %v4894 = vld [vmem:[%s4893] sm:$0xff]
    %v4895 = vld [vmem:[%s4893 + $0x8] sm:$0xff]
    %v4896 = vld [vmem:[%s4893 + $0x10] sm:$0xff]
    %v4897 = vld [vmem:[%s4893 + $0x18] sm:$0xff]
    %v4898 = vld [vmem:[%s4893 + $0x20] sm:$0xff]
    %v4899 = vld [vmem:[%s4893 + $0x28] sm:$0xff]
    %v4900 = vld [vmem:[%s4893 + $0x30] sm:$0xff]
    %v4902 = vsel %vm212, %v4894, 0
    %v4905 = vsel %vm212, %v4895, 0
    %v4908 = vsel %vm212, %v4896, 0
    %v4911 = vsel %vm212, %v4897, 0
    %v4914 = vsel %vm212, %v4898, 0
    %v4917 = vsel %vm212, %v4899, 0
    %v4920 = vsel %vm212, %v4900, 0
    %4922 = vmatprep.subr.mxu0 0.0
    %4923 = vmatpush1.msra.mxu0 0.0
    %4924 = vmatprep.subr.mxu0 0.0
    %4925 = vmatpush1.msra.mxu0 0.0
    %4926 = vmatprep.subr.mxu0 0.0
    %4927 = vmatpush1.msra.mxu0 0.0
    %4928 = vmatprep.subr.mxu0 0.0
    %4929 = vmatpush1.msra.mxu0 0.0
    %4930 = vmatprep.subr.mxu0 0.0
    %4931 = vmatpush1.msra.mxu0 0.0
    %4932 = vmatprep.subr.mxu0 0.0
    %4933 = vmatpush1.msra.mxu0 0.0
    %4934 = vmatprep.subr.mxu0 0.0
    %4935 = vmatpush1.msra.mxu0 0.0
    %4936 = vmatprep.subr.mxu0 0.0
    %4937 = vmatpush1.msra.mxu0 0.0
    %4938 = vmatprep.subr.mxu0 0.0
    %4939 = vmatpush1.msra.mxu0 0.0
    %4940 = vmatprep.subr.mxu0 0.0
    %4941 = vmatpush1.msra.mxu0 0.0
    %4942 = vmatprep.subr.mxu0 0.0
    %4943 = vmatpush1.msra.mxu0 0.0
    %4944 = vmatprep.subr.mxu0 0.0
    %4945 = vmatpush1.msra.mxu0 0.0
    %4946 = vmatprep.subr.mxu0 0.0
    %4947 = vmatpush1.msra.mxu0 %v4632
    %4948 = vmatprep.subr.mxu0 0.0
    %4949 = vmatpush1.msra.mxu0 %v4628
    %4950 = vmatprep.subr.mxu0 0.0
    %4951 = vmatpush1.msra.mxu0 %v4622
    %4952 = vmatprep.subr.mxu0 0.0
    %4953 = vmatpush1.msra.mxu0 %v4618
    %4954 = vmatprep.subr.mxu0 0.0
    %4955 = vmatpush2.msra.mxu0 0.0
    %4956 = vmatprep.subr.mxu0 0.0
    %4957 = vmatpush2.msra.mxu0 0.0
    %4958 = vmatprep.subr.mxu0 0.0
    %4959 = vmatpush2.msra.mxu0 0.0
    %4960 = vmatprep.subr.mxu0 0.0
    %4961 = vmatpush2.msra.mxu0 0.0
    %4962 = vmatprep.subr.mxu0 0.0
    %4963 = vmatpush2.msra.mxu0 0.0
    %4964 = vmatprep.subr.mxu0 0.0
    %4965 = vmatpush2.msra.mxu0 0.0
    %4966 = vmatprep.subr.mxu0 0.0
    %4967 = vmatpush2.msra.mxu0 0.0
    %4968 = vmatprep.subr.mxu0 0.0
    %4969 = vmatpush2.msra.mxu0 0.0
    %4970 = vmatprep.subr.mxu0 0.0
    %4971 = vmatpush2.msra.mxu0 0.0
    %4972 = vmatprep.subr.mxu0 0.0
    %4973 = vmatpush2.msra.mxu0 0.0
    %4974 = vmatprep.subr.mxu0 0.0
    %4975 = vmatpush2.msra.mxu0 0.0
    %4976 = vmatprep.subr.mxu0 0.0
    %4977 = vmatpush2.msra.mxu0 0.0
    %4978 = vmatprep.subr.mxu0 0.0
    %4979 = vmatpush2.msra.mxu0 0.0
    %4980 = vmatprep.subr.mxu0 0.0
    %4981 = vmatpush2.msra.mxu0 0.0
    %4982 = vmatprep.subr.mxu0 0.0
    %4983 = vmatpush2.msra.mxu0 0.0
    %4984 = vmatprep.subr.mxu0 0.0
    %4985 = vmatpush2.msra.mxu0 0.0
    %4986 = vmatprep.mubr.f32.mxu0 0.0
    %4987 = vmatmul.mubr.f32.gmra.mxu0 %v4902
    %v4988 = vpop.f32.mrf.mxu0
    %v4989 = vadd.f32 0.0, %v4988
    %v4990 = vpop.f32.mrf.mxu0
    %4991 = vmatprep.mubr.f32.mxu0 0.0
    %4992 = vmatmul.mubr.f32.gmra.mxu0 %v4905
    %v4993 = vpop.f32.mrf.mxu0
    %v4994 = vadd.f32 0.0, %v4993
    %v4995 = vpop.f32.mrf.mxu0
    %4996 = vmatprep.mubr.f32.mxu0 0.0
    %4997 = vmatmul.mubr.f32.gmra.mxu0 %v4908
    %v4998 = vpop.f32.mrf.mxu0
    %v4999 = vadd.f32 0.0, %v4998
    %v5000 = vpop.f32.mrf.mxu0
    %5001 = vmatprep.mubr.f32.mxu0 0.0
    %5002 = vmatmul.mubr.f32.gmra.mxu0 %v4911
    %v5003 = vpop.f32.mrf.mxu0
    %v5004 = vadd.f32 0.0, %v5003
    %v5005 = vpop.f32.mrf.mxu0
    %5006 = vmatprep.mubr.f32.mxu0 0.0
    %5007 = vmatmul.mubr.f32.gmra.mxu0 %v4914
    %v5008 = vpop.f32.mrf.mxu0
    %v5009 = vadd.f32 0.0, %v5008
    %v5010 = vpop.f32.mrf.mxu0
    %5011 = vmatprep.mubr.f32.mxu0 0.0
    %5012 = vmatmul.mubr.f32.gmra.mxu0 %v4917
    %v5013 = vpop.f32.mrf.mxu0
    %v5014 = vadd.f32 0.0, %v5013
    %v5015 = vpop.f32.mrf.mxu0
    %5016 = vmatprep.mubr.f32.mxu0 0.0
    %5017 = vmatmul.mubr.f32.gmra.mxu0 %v4920
    %v5018 = vpop.f32.mrf.mxu0
    %v5019 = vadd.f32 0.0, %v5018
    %v5020 = vpop.f32.mrf.mxu0
    %5021 = vdwg.mxu0
    %v5022 = vadd.f32 %v4860, %v4989
    %v5023 = vadd.f32 %v4865, %v4994
    %v5024 = vadd.f32 %v4870, %v4999
    %v5025 = vadd.f32 %v4875, %v5004
    %v5026 = vadd.f32 %v4880, %v5009
    %v5027 = vadd.f32 %v4885, %v5014
    %v5028 = vadd.f32 %v4890, %v5019
    %s5029 = scalar_lea.vmem %s17, 168
    %v5030 = vld [vmem:[%s5029] sm:$0xff]
    %v5031 = vld [vmem:[%s5029 + $0x8] sm:$0xff]
    %v5032 = vld [vmem:[%s5029 + $0x10] sm:$0xff]
    %v5033 = vld [vmem:[%s5029 + $0x18] sm:$0xff]
    %v5034 = vld [vmem:[%s5029 + $0x20] sm:$0xff]
    %v5035 = vld [vmem:[%s5029 + $0x28] sm:$0xff]
    %v5036 = vld [vmem:[%s5029 + $0x30] sm:$0xff]
    %v5038 = vsel %vm212, %v5030, 0
    %v5041 = vsel %vm212, %v5031, 0
    %v5044 = vsel %vm212, %v5032, 0
    %v5047 = vsel %vm212, %v5033, 0
    %v5050 = vsel %vm212, %v5034, 0
    %v5053 = vsel %vm212, %v5035, 0
    %v5056 = vsel %vm212, %v5036, 0
    %5058 = vmatprep.subr.mxu0 0.0
    %5059 = vmatpush1.msra.mxu0 0.0
    %5060 = vmatprep.subr.mxu0 0.0
    %5061 = vmatpush1.msra.mxu0 0.0
    %5062 = vmatprep.subr.mxu0 0.0
    %5063 = vmatpush1.msra.mxu0 0.0
    %5064 = vmatprep.subr.mxu0 0.0
    %5065 = vmatpush1.msra.mxu0 0.0
    %5066 = vmatprep.subr.mxu0 0.0
    %5067 = vmatpush1.msra.mxu0 0.0
    %5068 = vmatprep.subr.mxu0 0.0
    %5069 = vmatpush1.msra.mxu0 0.0
    %5070 = vmatprep.subr.mxu0 0.0
    %5071 = vmatpush1.msra.mxu0 0.0
    %5072 = vmatprep.subr.mxu0 0.0
    %5073 = vmatpush1.msra.mxu0 0.0
    %5074 = vmatprep.subr.mxu0 0.0
    %5075 = vmatpush1.msra.mxu0 0.0
    %5076 = vmatprep.subr.mxu0 0.0
    %5077 = vmatpush1.msra.mxu0 0.0
    %5078 = vmatprep.subr.mxu0 0.0
    %5079 = vmatpush1.msra.mxu0 0.0
    %5080 = vmatprep.subr.mxu0 0.0
    %5081 = vmatpush1.msra.mxu0 0.0
    %5082 = vmatprep.subr.mxu0 0.0
    %5083 = vmatpush1.msra.mxu0 %v4634
    %5084 = vmatprep.subr.mxu0 0.0
    %5085 = vmatpush1.msra.mxu0 %v4630
    %5086 = vmatprep.subr.mxu0 0.0
    %5087 = vmatpush1.msra.mxu0 %v4624
    %5088 = vmatprep.subr.mxu0 0.0
    %5089 = vmatpush1.msra.mxu0 %v4620
    %5090 = vmatprep.subr.mxu0 0.0
    %5091 = vmatpush2.msra.mxu0 0.0
    %5092 = vmatprep.subr.mxu0 0.0
    %5093 = vmatpush2.msra.mxu0 0.0
    %5094 = vmatprep.subr.mxu0 0.0
    %5095 = vmatpush2.msra.mxu0 0.0
    %5096 = vmatprep.subr.mxu0 0.0
    %5097 = vmatpush2.msra.mxu0 0.0
    %5098 = vmatprep.subr.mxu0 0.0
    %5099 = vmatpush2.msra.mxu0 0.0
    %5100 = vmatprep.subr.mxu0 0.0
    %5101 = vmatpush2.msra.mxu0 0.0
    %5102 = vmatprep.subr.mxu0 0.0
    %5103 = vmatpush2.msra.mxu0 0.0
    %5104 = vmatprep.subr.mxu0 0.0
    %5105 = vmatpush2.msra.mxu0 0.0
    %5106 = vmatprep.subr.mxu0 0.0
    %5107 = vmatpush2.msra.mxu0 0.0
    %5108 = vmatprep.subr.mxu0 0.0
    %5109 = vmatpush2.msra.mxu0 0.0
    %5110 = vmatprep.subr.mxu0 0.0
    %5111 = vmatpush2.msra.mxu0 0.0
    %5112 = vmatprep.subr.mxu0 0.0
    %5113 = vmatpush2.msra.mxu0 0.0
    %5114 = vmatprep.subr.mxu0 0.0
    %5115 = vmatpush2.msra.mxu0 0.0
    %5116 = vmatprep.subr.mxu0 0.0
    %5117 = vmatpush2.msra.mxu0 0.0
    %5118 = vmatprep.subr.mxu0 0.0
    %5119 = vmatpush2.msra.mxu0 0.0
    %5120 = vmatprep.subr.mxu0 0.0
    %5121 = vmatpush2.msra.mxu0 0.0
    %5122 = vmatprep.mubr.f32.mxu0 0.0
    %5123 = vmatmul.mubr.f32.gmra.mxu0 %v5038
    %v5124 = vpop.f32.mrf.mxu0
    %v5125 = vadd.f32 0.0, %v5124
    %v5126 = vpop.f32.mrf.mxu0
    %5127 = vmatprep.mubr.f32.mxu0 0.0
    %5128 = vmatmul.mubr.f32.gmra.mxu0 %v5041
    %v5129 = vpop.f32.mrf.mxu0
    %v5130 = vadd.f32 0.0, %v5129
    %v5131 = vpop.f32.mrf.mxu0
    %5132 = vmatprep.mubr.f32.mxu0 0.0
    %5133 = vmatmul.mubr.f32.gmra.mxu0 %v5044
    %v5134 = vpop.f32.mrf.mxu0
    %v5135 = vadd.f32 0.0, %v5134
    %v5136 = vpop.f32.mrf.mxu0
    %5137 = vmatprep.mubr.f32.mxu0 0.0
    %5138 = vmatmul.mubr.f32.gmra.mxu0 %v5047
    %v5139 = vpop.f32.mrf.mxu0
    %v5140 = vadd.f32 0.0, %v5139
    %v5141 = vpop.f32.mrf.mxu0
    %5142 = vmatprep.mubr.f32.mxu0 0.0
    %5143 = vmatmul.mubr.f32.gmra.mxu0 %v5050
    %v5144 = vpop.f32.mrf.mxu0
    %v5145 = vadd.f32 0.0, %v5144
    %v5146 = vpop.f32.mrf.mxu0
    %5147 = vmatprep.mubr.f32.mxu0 0.0
    %5148 = vmatmul.mubr.f32.gmra.mxu0 %v5053
    %v5149 = vpop.f32.mrf.mxu0
    %v5150 = vadd.f32 0.0, %v5149
    %v5151 = vpop.f32.mrf.mxu0
    %5152 = vmatprep.mubr.f32.mxu0 0.0
    %5153 = vmatmul.mubr.f32.gmra.mxu0 %v5056
    %v5154 = vpop.f32.mrf.mxu0
    %v5155 = vadd.f32 0.0, %v5154
    %v5156 = vpop.f32.mrf.mxu0
    %5157 = vdwg.mxu0
    %v5158 = vadd.f32 %v5022, %v5125
    %v5159 = vadd.f32 %v5023, %v5130
    %v5160 = vadd.f32 %v5024, %v5135
    %v5161 = vadd.f32 %v5025, %v5140
    %v5162 = vadd.f32 %v5026, %v5145
    %v5163 = vadd.f32 %v5027, %v5150
    %v5164 = vadd.f32 %v5028, %v5155
    %v5165 = vtanh.pop %v5158
    %v5166 = vtanh.pop %v5159
    %v5167 = vtanh.pop %v5160
    %v5168 = vtanh.pop %v5161
    %v5169 = vtanh.pop %v5162
    %v5170 = vtanh.pop %v5163
    %v5171 = vtanh.pop %v5164
    %vm5172 = vcmask 228352
    %5173 = vst.msk [vmem:[#allocation11] sm:$0xff] %vm5172, %v5165
    %5174 = vst.msk [vmem:[#allocation11 + $0x8] sm:$0xff] %vm5172, %v5166
    %5175 = vst.msk [vmem:[#allocation11 + $0x10] sm:$0xff] %vm5172, %v5167
    %5176 = vst.msk [vmem:[#allocation11 + $0x18] sm:$0xff] %vm5172, %v5168
    %5177 = vst.msk [vmem:[#allocation11 + $0x20] sm:$0xff] %vm5172, %v5169
    %5178 = vst.msk [vmem:[#allocation11 + $0x28] sm:$0xff] %vm5172, %v5170
    %5179 = vst.msk [vmem:[#allocation11 + $0x30] sm:$0xff] %vm5172, %v5171
    // Predicated region
    $region90: #{generator_forward.1} parent=1 // pred_check
      _
    $region91: #{generator_forward.1} parent=1 // pred_check_branch
      %5181 = sbr.rel (0) target = $region93
    $region92: #{generator_forward.1} parent=1 // pred_region
      %s5183 = ssub.s32 896, 896
      %5184 = vsyncadd [#allocation5], %s5183
      %s5185 = sshll.u32 [#allocation11], 4
      %s5186 = int_to_ptr.vmem [resolvable:$true] %s5185
      %5191 = dma.vmem_to_hbm [thread:$0]  %s5186, 896, %s18, [#allocation5], 128, 128, 8
    $region93: #{generator_forward.1} parent=1 // pred_fallthru
      _
    // Predicated region
    $region94: #{generator_forward.1} parent=1 // pred_check
      _
    $region95: #{generator_forward.1} parent=1 // pred_check_branch
      %5193 = sbr.rel (0) target = $region97
    $region96: #{generator_forward.1} parent=1 // pred_region
      %5194 = dma.done [#allocation5], 896
    $region97: #{generator_forward.1} parent=1 // pred_fallthru
      _
    %5195 = vsyncpa [#allocation4], 1
    %5196 = vsyncpa [#allocation7], 1
    %5197 = vsyncpa [#allocation10], 1
    %5198 = vsyncpa [#allocation5], 1

</llo_original>
